<compile_context>
chip_gen: v7x
topology: tpu7x:2x2x1
jax: 0.10.0
libtpu: 0.0.40
codegen_flags: <defaults>
</compile_context>

<pallas_src>
import functools

import jax
import jax.numpy as jnp
from jax.experimental import pallas as pl
from jax.experimental.pallas import tpu as pltpu


def _caption_kernel(num_layers, seq_len, hidden_size, batch, *refs):
    """refs = (emb_flat, [wih_l, whh_l, b_l]*L, fc_w, fc_b, out)."""
    H = hidden_size
    B = batch
    S = seq_len

    emb_ref = refs[0]                              # (S*B, E) time-major, flat
    layer_refs = refs[1:1 + 3 * num_layers]
    fcw_ref = refs[1 + 3 * num_layers]             # (H, Vpad)
    fcb_ref = refs[2 + 3 * num_layers]             # (1, Vpad)
    out_ref = refs[3 + 3 * num_layers]             # (B, Vpad)

    # --- layer-0 input projection hoisted out of the recurrence -------------
    # One (S*B, E) @ (E, 4H) matmul (+ fused bias) covers every timestep.
    wih0 = layer_refs[0][...]                      # (E, 4H)
    b0 = layer_refs[2][...]                        # (1, 4H)
    gates0 = jnp.dot(emb_ref[...], wih0,
                     preferred_element_type=jnp.float32) + b0   # (S*B, 4H)

    # Preload remaining weights once as values.
    whh = [layer_refs[3 * l + 1][...] for l in range(num_layers)]        # (H, 4H)
    wih = [None] + [layer_refs[3 * l][...] for l in range(1, num_layers)]
    bias = [None] + [layer_refs[3 * l + 2][...] for l in range(1, num_layers)]

    # h0 = c0 = zeros (matches the PyTorch forward); kept as values, never
    # written back to scratch inside the recurrence.
    h = [jnp.zeros((B, H), jnp.float32) for _ in range(num_layers)]
    c = [jnp.zeros((B, H), jnp.float32) for _ in range(num_layers)]

    def lstm_cell(g, h_prev, c_prev):
        # fused gate vector g: columns [i | f | g | o], each H wide
        i_g = jax.nn.sigmoid(g[:, 0:H])
        f_g = jax.nn.sigmoid(g[:, H:2 * H])
        g_g = jnp.tanh(g[:, 2 * H:3 * H])
        o_g = jax.nn.sigmoid(g[:, 3 * H:4 * H])
        c_new = f_g * c_prev + i_g * g_g
        h_new = o_g * jnp.tanh(c_new)
        return h_new, c_new

    # --- time recurrence, fully unrolled (S is static and small) ------------
    for t in range(S):
        x = None
        for l in range(num_layers):
            if l == 0:
                g = (gates0[t * B:(t + 1) * B, :]
                     + jnp.dot(h[0], whh[0],
                               preferred_element_type=jnp.float32))
            else:
                g = (jnp.dot(x, wih[l], preferred_element_type=jnp.float32)
                     + jnp.dot(h[l], whh[l],
                               preferred_element_type=jnp.float32)
                     + bias[l])
            h[l], c[l] = lstm_cell(g, h[l], c[l])
            x = h[l]

    # --- fc(out[:, -1, :]) : last timestep's top-layer hidden state ---------
    out_ref[...] = (jnp.dot(h[num_layers - 1], fcw_ref[...],
                            preferred_element_type=jnp.float32)
                    + fcb_ref[...])


def init_params(key, vocab_size, embedding_size, hidden_size, num_layers):
    """Deterministic synthetic parameters in the fused-gate layout."""
    n_keys = 2 + 3 * num_layers
    keys = jax.random.split(key, n_keys)
    scale = 0.1
    emb_table = scale * jax.random.normal(
        keys[0], (vocab_size, embedding_size), jnp.float32)
    layers = []
    kidx = 1
    for l in range(num_layers):
        in_l = embedding_size if l == 0 else hidden_size
        wih = scale * jax.random.normal(
            keys[kidx], (in_l, 4 * hidden_size), jnp.float32)
        whh = scale * jax.random.normal(
            keys[kidx + 1], (hidden_size, 4 * hidden_size), jnp.float32)
        b = scale * jax.random.normal(
            keys[kidx + 2], (1, 4 * hidden_size), jnp.float32)
        kidx += 3
        layers.append((wih, whh, b))
    fc_w = scale * jax.random.normal(
        keys[-1], (hidden_size, vocab_size), jnp.float32)
    fc_b = jnp.zeros((1, vocab_size), jnp.float32)
    return emb_table, layers, fc_w, fc_b


def caption_model_forward(images, lengths, params, *, vocab_size,
                          hidden_size, num_layers):
    emb_table, layers, fc_w, fc_b = params
    B = images.shape[0]
    # mirror `images.view(B, images.size(1), -1)`, then fold the trailing
    # singleton so the LSTM sees a (B, S) index sequence (see TODO at top).
    tokens = images.reshape(B, images.shape[1], -1)[..., 0]
    S = tokens.shape[1]
    E = emb_table.shape[1]
    H = hidden_size

    # Embedding lookup as a row gather in the wrapper (cheap XLA gather),
    # reordered to time-major and flattened for the hoisted layer-0 matmul.
    emb = emb_table[tokens]                              # (B, S, E)
    emb_flat = jnp.transpose(emb, (1, 0, 2)).reshape(S * B, E)

    # Pad the fc output dim to a multiple of 128 -> unmasked lane-dense store.
    Vpad = ((vocab_size + 127) // 128) * 128
    fc_w_p = jnp.pad(fc_w, ((0, 0), (0, Vpad - vocab_size)))
    fc_b_p = jnp.pad(fc_b, ((0, 0), (0, Vpad - vocab_size)))

    inputs = [emb_flat]
    for (wih, whh, b) in layers:
        inputs += [wih, whh, b]
    inputs += [fc_w_p, fc_b_p]

    # Advisory cost estimate for XLA scheduling around the custom call.
    flops = 2 * S * B * E * 4 * H                        # hoisted layer-0 x@Wih
    flops += 2 * S * B * H * 4 * H * num_layers          # recurrent h@Whh
    flops += 2 * S * B * H * 4 * H * max(num_layers - 1, 0)  # x@Wih for l>0
    flops += 2 * B * H * Vpad                            # fc
    transcendentals = S * num_layers * B * 5 * H         # 3 sigmoid + 2 tanh
    bytes_accessed = 4 * (emb_flat.size
                          + sum(w.size + u.size + bb.size
                                for (w, u, bb) in layers)
                          + fc_w_p.size + fc_b_p.size + B * Vpad)

    kernel = functools.partial(_caption_kernel, num_layers, S, H, B)
    out_padded = pl.pallas_call(
        kernel,
        out_shape=jax.ShapeDtypeStruct((B, Vpad), jnp.float32),
        in_specs=[pl.BlockSpec(memory_space=pltpu.MemorySpace.VMEM)]
        * len(inputs),
        out_specs=pl.BlockSpec(memory_space=pltpu.MemorySpace.VMEM),
        compiler_params=pltpu.CompilerParams(vmem_limit_bytes=32 << 20),
        cost_estimate=pl.CostEstimate(flops=flops,
                                      transcendentals=transcendentals,
                                      bytes_accessed=bytes_accessed),
    )(*inputs)
    return out_padded[:, :vocab_size], lengths


def reference_forward(images, lengths, params, *, vocab_size, hidden_size,
                      num_layers):
    """Pure-JAX reference with identical semantics (for a sanity check)."""
    emb_table, layers, fc_w, fc_b = params
    B = images.shape[0]
    tokens = images.reshape(B, images.shape[1], -1)[..., 0]
    S = tokens.shape[1]
    H = hidden_size
    emb = emb_table[tokens]                              # (B, S, E)
    h = [jnp.zeros((B, H), jnp.float32) for _ in range(num_layers)]
    c = [jnp.zeros((B, H), jnp.float32) for _ in range(num_layers)]
    x = None
    for t in range(S):
        x = emb[:, t, :]
        for l in range(num_layers):
            wih, whh, b = layers[l]
            g = x @ wih + h[l] @ whh + b                 # (B, 4H) fused gates
            i_g = jax.nn.sigmoid(g[:, 0:H])
            f_g = jax.nn.sigmoid(g[:, H:2 * H])
            g_g = jnp.tanh(g[:, 2 * H:3 * H])
            o_g = jax.nn.sigmoid(g[:, 3 * H:4 * H])
            c[l] = f_g * c[l] + i_g * g_g
            h[l] = o_g * jnp.tanh(c[l])
            x = h[l]
    return x @ fc_w + fc_b, lengths


if __name__ == "__main__":
    vocab_size = 64
    embedding_size = 32
    hidden_size = 32
    num_layers = 2
    B, S = 2, 8

    key = jax.random.PRNGKey(0)
    k_tok, k_par = jax.random.split(key)
    images = jax.random.randint(k_tok, (B, S), 0, vocab_size, dtype=jnp.int32)
    lengths = jnp.full((B,), S, dtype=jnp.int32)
    params = init_params(k_par, vocab_size, embedding_size, hidden_size,
                         num_layers)

    out, out_lengths = caption_model_forward(
        images, lengths, params, vocab_size=vocab_size,
        hidden_size=hidden_size, num_layers=num_layers)
    out = jax.block_until_ready(out)

    ref, _ = reference_forward(
        images, lengths, params, vocab_size=vocab_size,
        hidden_size=hidden_size, num_layers=num_layers)
    assert out.shape == (B, vocab_size)
    assert jnp.allclose(out, ref, atol=1e-4, rtol=1e-4), "mismatch vs reference"

    print("KERNEL_OK")
</pallas_src>

<mosaic_0001>
module attributes {stable_mosaic.version = 11 : i64} {
  func.func @_caption_kernel(%arg0: memref<16x32xf32, #tpu.memory_space<vmem>>, %arg1: memref<32x128xf32, #tpu.memory_space<vmem>>, %arg2: memref<32x128xf32, #tpu.memory_space<vmem>>, %arg3: memref<1x128xf32, #tpu.memory_space<vmem>>, %arg4: memref<32x128xf32, #tpu.memory_space<vmem>>, %arg5: memref<32x128xf32, #tpu.memory_space<vmem>>, %arg6: memref<1x128xf32, #tpu.memory_space<vmem>>, %arg7: memref<32x128xf32, #tpu.memory_space<vmem>>, %arg8: memref<1x128xf32, #tpu.memory_space<vmem>>, %arg9: memref<2x128xf32, #tpu.memory_space<vmem>>) attributes {dimension_semantics = [], scalar_prefetch = 0 : i64, scratch_operands = 0 : i64, tpu.core_type = #tpu.core_type<tc>} {
    %c0 = arith.constant 0 : index
    %c0_0 = arith.constant 0 : index
    %0 = vector.load %arg1[%c0, %c0_0] : memref<32x128xf32, #tpu.memory_space<vmem>>, vector<32x128xf32>
    %c0_1 = arith.constant 0 : index
    %c0_2 = arith.constant 0 : index
    %1 = vector.load %arg3[%c0_1, %c0_2] : memref<1x128xf32, #tpu.memory_space<vmem>>, vector<1x128xf32>
    %c0_3 = arith.constant 0 : index
    %c0_4 = arith.constant 0 : index
    %2 = vector.load %arg0[%c0_3, %c0_4] : memref<16x32xf32, #tpu.memory_space<vmem>>, vector<16x32xf32>
    %cst = arith.constant dense<0.000000e+00> : vector<16x128xf32>
    %3 = tpu.matmul %2, %0, %cst {dimension_numbers = #tpu.dot_dimension_numbers<[1], [0], [0], [1], [0, 0, 1, 1], [], []>} : vector<16x32xf32>, vector<32x128xf32>, vector<16x128xf32> -> vector<16x128xf32>
    %4 = vector.broadcast %1 : vector<1x128xf32> to vector<16x128xf32>
    %5 = arith.addf %3, %4 : vector<16x128xf32>
    %c0_5 = arith.constant 0 : index
    %c0_6 = arith.constant 0 : index
    %6 = vector.load %arg2[%c0_5, %c0_6] : memref<32x128xf32, #tpu.memory_space<vmem>>, vector<32x128xf32>
    %c0_7 = arith.constant 0 : index
    %c0_8 = arith.constant 0 : index
    %7 = vector.load %arg5[%c0_7, %c0_8] : memref<32x128xf32, #tpu.memory_space<vmem>>, vector<32x128xf32>
    %c0_9 = arith.constant 0 : index
    %c0_10 = arith.constant 0 : index
    %8 = vector.load %arg4[%c0_9, %c0_10] : memref<32x128xf32, #tpu.memory_space<vmem>>, vector<32x128xf32>
    %c0_11 = arith.constant 0 : index
    %c0_12 = arith.constant 0 : index
    %9 = vector.load %arg6[%c0_11, %c0_12] : memref<1x128xf32, #tpu.memory_space<vmem>>, vector<1x128xf32>
    %cst_13 = arith.constant 0.000000e+00 : f32
    %10 = vector.broadcast %cst_13 : f32 to vector<2x32xf32>
    %cst_14 = arith.constant 0.000000e+00 : f32
    %11 = vector.broadcast %cst_14 : f32 to vector<2x32xf32>
    %cst_15 = arith.constant 0.000000e+00 : f32
    %12 = vector.broadcast %cst_15 : f32 to vector<2x32xf32>
    %cst_16 = arith.constant 0.000000e+00 : f32
    %13 = vector.broadcast %cst_16 : f32 to vector<2x32xf32>
    %14 = vector.extract_strided_slice %5 {offsets = [0, 0], sizes = [2, 128], strides = [1, 1]} : vector<16x128xf32> to vector<2x128xf32>
    %cst_17 = arith.constant dense<0.000000e+00> : vector<2x128xf32>
    %15 = tpu.matmul %10, %6, %cst_17 {dimension_numbers = #tpu.dot_dimension_numbers<[1], [0], [0], [1], [0, 0, 1, 1], [], []>} : vector<2x32xf32>, vector<32x128xf32>, vector<2x128xf32> -> vector<2x128xf32>
    %16 = arith.addf %14, %15 : vector<2x128xf32>
    %17 = vector.extract_strided_slice %16 {offsets = [0, 0], sizes = [2, 32], strides = [1, 1]} : vector<2x128xf32> to vector<2x32xf32>
    %18 = arith.negf %17 : vector<2x32xf32>
    %19 = math.exp %18 : vector<2x32xf32>
    %cst_18 = arith.constant 1.000000e+00 : f32
    %20 = vector.broadcast %cst_18 : f32 to vector<2x32xf32>
    %21 = arith.addf %20, %19 : vector<2x32xf32>
    %22 = arith.divf %20, %21 : vector<2x32xf32>
    %23 = vector.extract_strided_slice %16 {offsets = [0, 32], sizes = [2, 32], strides = [1, 1]} : vector<2x128xf32> to vector<2x32xf32>
    %24 = arith.negf %23 : vector<2x32xf32>
    %25 = math.exp %24 : vector<2x32xf32>
    %cst_19 = arith.constant 1.000000e+00 : f32
    %26 = vector.broadcast %cst_19 : f32 to vector<2x32xf32>
    %27 = arith.addf %26, %25 : vector<2x32xf32>
    %28 = arith.divf %26, %27 : vector<2x32xf32>
    %29 = vector.extract_strided_slice %16 {offsets = [0, 64], sizes = [2, 32], strides = [1, 1]} : vector<2x128xf32> to vector<2x32xf32>
    %30 = math.tanh %29 : vector<2x32xf32>
    %31 = vector.extract_strided_slice %16 {offsets = [0, 96], sizes = [2, 32], strides = [1, 1]} : vector<2x128xf32> to vector<2x32xf32>
    %32 = arith.negf %31 : vector<2x32xf32>
    %33 = math.exp %32 : vector<2x32xf32>
    %cst_20 = arith.constant 1.000000e+00 : f32
    %34 = vector.broadcast %cst_20 : f32 to vector<2x32xf32>
    %35 = arith.addf %34, %33 : vector<2x32xf32>
    %36 = arith.divf %34, %35 : vector<2x32xf32>
    %37 = arith.mulf %28, %12 : vector<2x32xf32>
    %38 = arith.mulf %22, %30 : vector<2x32xf32>
    %39 = arith.addf %37, %38 : vector<2x32xf32>
    %40 = math.tanh %39 : vector<2x32xf32>
    %41 = arith.mulf %36, %40 : vector<2x32xf32>
    %cst_21 = arith.constant dense<0.000000e+00> : vector<2x128xf32>
    %42 = tpu.matmul %41, %8, %cst_21 {dimension_numbers = #tpu.dot_dimension_numbers<[1], [0], [0], [1], [0, 0, 1, 1], [], []>} : vector<2x32xf32>, vector<32x128xf32>, vector<2x128xf32> -> vector<2x128xf32>
    %cst_22 = arith.constant dense<0.000000e+00> : vector<2x128xf32>
    %43 = tpu.matmul %11, %7, %cst_22 {dimension_numbers = #tpu.dot_dimension_numbers<[1], [0], [0], [1], [0, 0, 1, 1], [], []>} : vector<2x32xf32>, vector<32x128xf32>, vector<2x128xf32> -> vector<2x128xf32>
    %44 = arith.addf %42, %43 : vector<2x128xf32>
    %45 = vector.broadcast %9 : vector<1x128xf32> to vector<2x128xf32>
    %46 = arith.addf %44, %45 : vector<2x128xf32>
    %47 = vector.extract_strided_slice %46 {offsets = [0, 0], sizes = [2, 32], strides = [1, 1]} : vector<2x128xf32> to vector<2x32xf32>
    %48 = arith.negf %47 : vector<2x32xf32>
    %49 = math.exp %48 : vector<2x32xf32>
    %cst_23 = arith.constant 1.000000e+00 : f32
    %50 = vector.broadcast %cst_23 : f32 to vector<2x32xf32>
    %51 = arith.addf %50, %49 : vector<2x32xf32>
    %52 = arith.divf %50, %51 : vector<2x32xf32>
    %53 = vector.extract_strided_slice %46 {offsets = [0, 32], sizes = [2, 32], strides = [1, 1]} : vector<2x128xf32> to vector<2x32xf32>
    %54 = arith.negf %53 : vector<2x32xf32>
    %55 = math.exp %54 : vector<2x32xf32>
    %cst_24 = arith.constant 1.000000e+00 : f32
    %56 = vector.broadcast %cst_24 : f32 to vector<2x32xf32>
    %57 = arith.addf %56, %55 : vector<2x32xf32>
    %58 = arith.divf %56, %57 : vector<2x32xf32>
    %59 = vector.extract_strided_slice %46 {offsets = [0, 64], sizes = [2, 32], strides = [1, 1]} : vector<2x128xf32> to vector<2x32xf32>
    %60 = math.tanh %59 : vector<2x32xf32>
    %61 = vector.extract_strided_slice %46 {offsets = [0, 96], sizes = [2, 32], strides = [1, 1]} : vector<2x128xf32> to vector<2x32xf32>
    %62 = arith.negf %61 : vector<2x32xf32>
    %63 = math.exp %62 : vector<2x32xf32>
    %cst_25 = arith.constant 1.000000e+00 : f32
    %64 = vector.broadcast %cst_25 : f32 to vector<2x32xf32>
    %65 = arith.addf %64, %63 : vector<2x32xf32>
    %66 = arith.divf %64, %65 : vector<2x32xf32>
    %67 = arith.mulf %58, %13 : vector<2x32xf32>
    %68 = arith.mulf %52, %60 : vector<2x32xf32>
    %69 = arith.addf %67, %68 : vector<2x32xf32>
    %70 = math.tanh %69 : vector<2x32xf32>
    %71 = arith.mulf %66, %70 : vector<2x32xf32>
    %72 = vector.extract_strided_slice %5 {offsets = [2, 0], sizes = [2, 128], strides = [1, 1]} : vector<16x128xf32> to vector<2x128xf32>
    %cst_26 = arith.constant dense<0.000000e+00> : vector<2x128xf32>
    %73 = tpu.matmul %41, %6, %cst_26 {dimension_numbers = #tpu.dot_dimension_numbers<[1], [0], [0], [1], [0, 0, 1, 1], [], []>} : vector<2x32xf32>, vector<32x128xf32>, vector<2x128xf32> -> vector<2x128xf32>
    %74 = arith.addf %72, %73 : vector<2x128xf32>
    %75 = vector.extract_strided_slice %74 {offsets = [0, 0], sizes = [2, 32], strides = [1, 1]} : vector<2x128xf32> to vector<2x32xf32>
    %76 = arith.negf %75 : vector<2x32xf32>
    %77 = math.exp %76 : vector<2x32xf32>
    %cst_27 = arith.constant 1.000000e+00 : f32
    %78 = vector.broadcast %cst_27 : f32 to vector<2x32xf32>
    %79 = arith.addf %78, %77 : vector<2x32xf32>
    %80 = arith.divf %78, %79 : vector<2x32xf32>
    %81 = vector.extract_strided_slice %74 {offsets = [0, 32], sizes = [2, 32], strides = [1, 1]} : vector<2x128xf32> to vector<2x32xf32>
    %82 = arith.negf %81 : vector<2x32xf32>
    %83 = math.exp %82 : vector<2x32xf32>
    %cst_28 = arith.constant 1.000000e+00 : f32
    %84 = vector.broadcast %cst_28 : f32 to vector<2x32xf32>
    %85 = arith.addf %84, %83 : vector<2x32xf32>
    %86 = arith.divf %84, %85 : vector<2x32xf32>
    %87 = vector.extract_strided_slice %74 {offsets = [0, 64], sizes = [2, 32], strides = [1, 1]} : vector<2x128xf32> to vector<2x32xf32>
    %88 = math.tanh %87 : vector<2x32xf32>
    %89 = vector.extract_strided_slice %74 {offsets = [0, 96], sizes = [2, 32], strides = [1, 1]} : vector<2x128xf32> to vector<2x32xf32>
    %90 = arith.negf %89 : vector<2x32xf32>
    %91 = math.exp %90 : vector<2x32xf32>
    %cst_29 = arith.constant 1.000000e+00 : f32
    %92 = vector.broadcast %cst_29 : f32 to vector<2x32xf32>
    %93 = arith.addf %92, %91 : vector<2x32xf32>
    %94 = arith.divf %92, %93 : vector<2x32xf32>
    %95 = arith.mulf %86, %39 : vector<2x32xf32>
    %96 = arith.mulf %80, %88 : vector<2x32xf32>
    %97 = arith.addf %95, %96 : vector<2x32xf32>
    %98 = math.tanh %97 : vector<2x32xf32>
    %99 = arith.mulf %94, %98 : vector<2x32xf32>
    %cst_30 = arith.constant dense<0.000000e+00> : vector<2x128xf32>
    %100 = tpu.matmul %99, %8, %cst_30 {dimension_numbers = #tpu.dot_dimension_numbers<[1], [0], [0], [1], [0, 0, 1, 1], [], []>} : vector<2x32xf32>, vector<32x128xf32>, vector<2x128xf32> -> vector<2x128xf32>
    %cst_31 = arith.constant dense<0.000000e+00> : vector<2x128xf32>
    %101 = tpu.matmul %71, %7, %cst_31 {dimension_numbers = #tpu.dot_dimension_numbers<[1], [0], [0], [1], [0, 0, 1, 1], [], []>} : vector<2x32xf32>, vector<32x128xf32>, vector<2x128xf32> -> vector<2x128xf32>
    %102 = arith.addf %100, %101 : vector<2x128xf32>
    %103 = vector.broadcast %9 : vector<1x128xf32> to vector<2x128xf32>
    %104 = arith.addf %102, %103 : vector<2x128xf32>
    %105 = vector.extract_strided_slice %104 {offsets = [0, 0], sizes = [2, 32], strides = [1, 1]} : vector<2x128xf32> to vector<2x32xf32>
    %106 = arith.negf %105 : vector<2x32xf32>
    %107 = math.exp %106 : vector<2x32xf32>
    %cst_32 = arith.constant 1.000000e+00 : f32
    %108 = vector.broadcast %cst_32 : f32 to vector<2x32xf32>
    %109 = arith.addf %108, %107 : vector<2x32xf32>
    %110 = arith.divf %108, %109 : vector<2x32xf32>
    %111 = vector.extract_strided_slice %104 {offsets = [0, 32], sizes = [2, 32], strides = [1, 1]} : vector<2x128xf32> to vector<2x32xf32>
    %112 = arith.negf %111 : vector<2x32xf32>
    %113 = math.exp %112 : vector<2x32xf32>
    %cst_33 = arith.constant 1.000000e+00 : f32
    %114 = vector.broadcast %cst_33 : f32 to vector<2x32xf32>
    %115 = arith.addf %114, %113 : vector<2x32xf32>
    %116 = arith.divf %114, %115 : vector<2x32xf32>
    %117 = vector.extract_strided_slice %104 {offsets = [0, 64], sizes = [2, 32], strides = [1, 1]} : vector<2x128xf32> to vector<2x32xf32>
    %118 = math.tanh %117 : vector<2x32xf32>
    %119 = vector.extract_strided_slice %104 {offsets = [0, 96], sizes = [2, 32], strides = [1, 1]} : vector<2x128xf32> to vector<2x32xf32>
    %120 = arith.negf %119 : vector<2x32xf32>
    %121 = math.exp %120 : vector<2x32xf32>
    %cst_34 = arith.constant 1.000000e+00 : f32
    %122 = vector.broadcast %cst_34 : f32 to vector<2x32xf32>
    %123 = arith.addf %122, %121 : vector<2x32xf32>
    %124 = arith.divf %122, %123 : vector<2x32xf32>
    %125 = arith.mulf %116, %69 : vector<2x32xf32>
    %126 = arith.mulf %110, %118 : vector<2x32xf32>
    %127 = arith.addf %125, %126 : vector<2x32xf32>
    %128 = math.tanh %127 : vector<2x32xf32>
    %129 = arith.mulf %124, %128 : vector<2x32xf32>
    %130 = vector.extract_strided_slice %5 {offsets = [4, 0], sizes = [2, 128], strides = [1, 1]} : vector<16x128xf32> to vector<2x128xf32>
    %cst_35 = arith.constant dense<0.000000e+00> : vector<2x128xf32>
    %131 = tpu.matmul %99, %6, %cst_35 {dimension_numbers = #tpu.dot_dimension_numbers<[1], [0], [0], [1], [0, 0, 1, 1], [], []>} : vector<2x32xf32>, vector<32x128xf32>, vector<2x128xf32> -> vector<2x128xf32>
    %132 = arith.addf %130, %131 : vector<2x128xf32>
    %133 = vector.extract_strided_slice %132 {offsets = [0, 0], sizes = [2, 32], strides = [1, 1]} : vector<2x128xf32> to vector<2x32xf32>
    %134 = arith.negf %133 : vector<2x32xf32>
    %135 = math.exp %134 : vector<2x32xf32>
    %cst_36 = arith.constant 1.000000e+00 : f32
    %136 = vector.broadcast %cst_36 : f32 to vector<2x32xf32>
    %137 = arith.addf %136, %135 : vector<2x32xf32>
    %138 = arith.divf %136, %137 : vector<2x32xf32>
    %139 = vector.extract_strided_slice %132 {offsets = [0, 32], sizes = [2, 32], strides = [1, 1]} : vector<2x128xf32> to vector<2x32xf32>
    %140 = arith.negf %139 : vector<2x32xf32>
    %141 = math.exp %140 : vector<2x32xf32>
    %cst_37 = arith.constant 1.000000e+00 : f32
    %142 = vector.broadcast %cst_37 : f32 to vector<2x32xf32>
    %143 = arith.addf %142, %141 : vector<2x32xf32>
    %144 = arith.divf %142, %143 : vector<2x32xf32>
    %145 = vector.extract_strided_slice %132 {offsets = [0, 64], sizes = [2, 32], strides = [1, 1]} : vector<2x128xf32> to vector<2x32xf32>
    %146 = math.tanh %145 : vector<2x32xf32>
    %147 = vector.extract_strided_slice %132 {offsets = [0, 96], sizes = [2, 32], strides = [1, 1]} : vector<2x128xf32> to vector<2x32xf32>
    %148 = arith.negf %147 : vector<2x32xf32>
    %149 = math.exp %148 : vector<2x32xf32>
    %cst_38 = arith.constant 1.000000e+00 : f32
    %150 = vector.broadcast %cst_38 : f32 to vector<2x32xf32>
    %151 = arith.addf %150, %149 : vector<2x32xf32>
    %152 = arith.divf %150, %151 : vector<2x32xf32>
    %153 = arith.mulf %144, %97 : vector<2x32xf32>
    %154 = arith.mulf %138, %146 : vector<2x32xf32>
    %155 = arith.addf %153, %154 : vector<2x32xf32>
    %156 = math.tanh %155 : vector<2x32xf32>
    %157 = arith.mulf %152, %156 : vector<2x32xf32>
    %cst_39 = arith.constant dense<0.000000e+00> : vector<2x128xf32>
    %158 = tpu.matmul %157, %8, %cst_39 {dimension_numbers = #tpu.dot_dimension_numbers<[1], [0], [0], [1], [0, 0, 1, 1], [], []>} : vector<2x32xf32>, vector<32x128xf32>, vector<2x128xf32> -> vector<2x128xf32>
    %cst_40 = arith.constant dense<0.000000e+00> : vector<2x128xf32>
    %159 = tpu.matmul %129, %7, %cst_40 {dimension_numbers = #tpu.dot_dimension_numbers<[1], [0], [0], [1], [0, 0, 1, 1], [], []>} : vector<2x32xf32>, vector<32x128xf32>, vector<2x128xf32> -> vector<2x128xf32>
    %160 = arith.addf %158, %159 : vector<2x128xf32>
    %161 = vector.broadcast %9 : vector<1x128xf32> to vector<2x128xf32>
    %162 = arith.addf %160, %161 : vector<2x128xf32>
    %163 = vector.extract_strided_slice %162 {offsets = [0, 0], sizes = [2, 32], strides = [1, 1]} : vector<2x128xf32> to vector<2x32xf32>
    %164 = arith.negf %163 : vector<2x32xf32>
    %165 = math.exp %164 : vector<2x32xf32>
    %cst_41 = arith.constant 1.000000e+00 : f32
    %166 = vector.broadcast %cst_41 : f32 to vector<2x32xf32>
    %167 = arith.addf %166, %165 : vector<2x32xf32>
    %168 = arith.divf %166, %167 : vector<2x32xf32>
    %169 = vector.extract_strided_slice %162 {offsets = [0, 32], sizes = [2, 32], strides = [1, 1]} : vector<2x128xf32> to vector<2x32xf32>
    %170 = arith.negf %169 : vector<2x32xf32>
    %171 = math.exp %170 : vector<2x32xf32>
    %cst_42 = arith.constant 1.000000e+00 : f32
    %172 = vector.broadcast %cst_42 : f32 to vector<2x32xf32>
    %173 = arith.addf %172, %171 : vector<2x32xf32>
    %174 = arith.divf %172, %173 : vector<2x32xf32>
    %175 = vector.extract_strided_slice %162 {offsets = [0, 64], sizes = [2, 32], strides = [1, 1]} : vector<2x128xf32> to vector<2x32xf32>
    %176 = math.tanh %175 : vector<2x32xf32>
    %177 = vector.extract_strided_slice %162 {offsets = [0, 96], sizes = [2, 32], strides = [1, 1]} : vector<2x128xf32> to vector<2x32xf32>
    %178 = arith.negf %177 : vector<2x32xf32>
    %179 = math.exp %178 : vector<2x32xf32>
    %cst_43 = arith.constant 1.000000e+00 : f32
    %180 = vector.broadcast %cst_43 : f32 to vector<2x32xf32>
    %181 = arith.addf %180, %179 : vector<2x32xf32>
    %182 = arith.divf %180, %181 : vector<2x32xf32>
    %183 = arith.mulf %174, %127 : vector<2x32xf32>
    %184 = arith.mulf %168, %176 : vector<2x32xf32>
    %185 = arith.addf %183, %184 : vector<2x32xf32>
    %186 = math.tanh %185 : vector<2x32xf32>
    %187 = arith.mulf %182, %186 : vector<2x32xf32>
    %188 = vector.extract_strided_slice %5 {offsets = [6, 0], sizes = [2, 128], strides = [1, 1]} : vector<16x128xf32> to vector<2x128xf32>
    %cst_44 = arith.constant dense<0.000000e+00> : vector<2x128xf32>
    %189 = tpu.matmul %157, %6, %cst_44 {dimension_numbers = #tpu.dot_dimension_numbers<[1], [0], [0], [1], [0, 0, 1, 1], [], []>} : vector<2x32xf32>, vector<32x128xf32>, vector<2x128xf32> -> vector<2x128xf32>
    %190 = arith.addf %188, %189 : vector<2x128xf32>
    %191 = vector.extract_strided_slice %190 {offsets = [0, 0], sizes = [2, 32], strides = [1, 1]} : vector<2x128xf32> to vector<2x32xf32>
    %192 = arith.negf %191 : vector<2x32xf32>
    %193 = math.exp %192 : vector<2x32xf32>
    %cst_45 = arith.constant 1.000000e+00 : f32
    %194 = vector.broadcast %cst_45 : f32 to vector<2x32xf32>
    %195 = arith.addf %194, %193 : vector<2x32xf32>
    %196 = arith.divf %194, %195 : vector<2x32xf32>
    %197 = vector.extract_strided_slice %190 {offsets = [0, 32], sizes = [2, 32], strides = [1, 1]} : vector<2x128xf32> to vector<2x32xf32>
    %198 = arith.negf %197 : vector<2x32xf32>
    %199 = math.exp %198 : vector<2x32xf32>
    %cst_46 = arith.constant 1.000000e+00 : f32
    %200 = vector.broadcast %cst_46 : f32 to vector<2x32xf32>
    %201 = arith.addf %200, %199 : vector<2x32xf32>
    %202 = arith.divf %200, %201 : vector<2x32xf32>
    %203 = vector.extract_strided_slice %190 {offsets = [0, 64], sizes = [2, 32], strides = [1, 1]} : vector<2x128xf32> to vector<2x32xf32>
    %204 = math.tanh %203 : vector<2x32xf32>
    %205 = vector.extract_strided_slice %190 {offsets = [0, 96], sizes = [2, 32], strides = [1, 1]} : vector<2x128xf32> to vector<2x32xf32>
    %206 = arith.negf %205 : vector<2x32xf32>
    %207 = math.exp %206 : vector<2x32xf32>
    %cst_47 = arith.constant 1.000000e+00 : f32
    %208 = vector.broadcast %cst_47 : f32 to vector<2x32xf32>
    %209 = arith.addf %208, %207 : vector<2x32xf32>
    %210 = arith.divf %208, %209 : vector<2x32xf32>
    %211 = arith.mulf %202, %155 : vector<2x32xf32>
    %212 = arith.mulf %196, %204 : vector<2x32xf32>
    %213 = arith.addf %211, %212 : vector<2x32xf32>
    %214 = math.tanh %213 : vector<2x32xf32>
    %215 = arith.mulf %210, %214 : vector<2x32xf32>
    %cst_48 = arith.constant dense<0.000000e+00> : vector<2x128xf32>
    %216 = tpu.matmul %215, %8, %cst_48 {dimension_numbers = #tpu.dot_dimension_numbers<[1], [0], [0], [1], [0, 0, 1, 1], [], []>} : vector<2x32xf32>, vector<32x128xf32>, vector<2x128xf32> -> vector<2x128xf32>
    %cst_49 = arith.constant dense<0.000000e+00> : vector<2x128xf32>
    %217 = tpu.matmul %187, %7, %cst_49 {dimension_numbers = #tpu.dot_dimension_numbers<[1], [0], [0], [1], [0, 0, 1, 1], [], []>} : vector<2x32xf32>, vector<32x128xf32>, vector<2x128xf32> -> vector<2x128xf32>
    %218 = arith.addf %216, %217 : vector<2x128xf32>
    %219 = vector.broadcast %9 : vector<1x128xf32> to vector<2x128xf32>
    %220 = arith.addf %218, %219 : vector<2x128xf32>
    %221 = vector.extract_strided_slice %220 {offsets = [0, 0], sizes = [2, 32], strides = [1, 1]} : vector<2x128xf32> to vector<2x32xf32>
    %222 = arith.negf %221 : vector<2x32xf32>
    %223 = math.exp %222 : vector<2x32xf32>
    %cst_50 = arith.constant 1.000000e+00 : f32
    %224 = vector.broadcast %cst_50 : f32 to vector<2x32xf32>
    %225 = arith.addf %224, %223 : vector<2x32xf32>
    %226 = arith.divf %224, %225 : vector<2x32xf32>
    %227 = vector.extract_strided_slice %220 {offsets = [0, 32], sizes = [2, 32], strides = [1, 1]} : vector<2x128xf32> to vector<2x32xf32>
    %228 = arith.negf %227 : vector<2x32xf32>
    %229 = math.exp %228 : vector<2x32xf32>
    %cst_51 = arith.constant 1.000000e+00 : f32
    %230 = vector.broadcast %cst_51 : f32 to vector<2x32xf32>
    %231 = arith.addf %230, %229 : vector<2x32xf32>
    %232 = arith.divf %230, %231 : vector<2x32xf32>
    %233 = vector.extract_strided_slice %220 {offsets = [0, 64], sizes = [2, 32], strides = [1, 1]} : vector<2x128xf32> to vector<2x32xf32>
    %234 = math.tanh %233 : vector<2x32xf32>
    %235 = vector.extract_strided_slice %220 {offsets = [0, 96], sizes = [2, 32], strides = [1, 1]} : vector<2x128xf32> to vector<2x32xf32>
    %236 = arith.negf %235 : vector<2x32xf32>
    %237 = math.exp %236 : vector<2x32xf32>
    %cst_52 = arith.constant 1.000000e+00 : f32
    %238 = vector.broadcast %cst_52 : f32 to vector<2x32xf32>
    %239 = arith.addf %238, %237 : vector<2x32xf32>
    %240 = arith.divf %238, %239 : vector<2x32xf32>
    %241 = arith.mulf %232, %185 : vector<2x32xf32>
    %242 = arith.mulf %226, %234 : vector<2x32xf32>
    %243 = arith.addf %241, %242 : vector<2x32xf32>
    %244 = math.tanh %243 : vector<2x32xf32>
    %245 = arith.mulf %240, %244 : vector<2x32xf32>
    %246 = vector.extract_strided_slice %5 {offsets = [8, 0], sizes = [2, 128], strides = [1, 1]} : vector<16x128xf32> to vector<2x128xf32>
    %cst_53 = arith.constant dense<0.000000e+00> : vector<2x128xf32>
    %247 = tpu.matmul %215, %6, %cst_53 {dimension_numbers = #tpu.dot_dimension_numbers<[1], [0], [0], [1], [0, 0, 1, 1], [], []>} : vector<2x32xf32>, vector<32x128xf32>, vector<2x128xf32> -> vector<2x128xf32>
    %248 = arith.addf %246, %247 : vector<2x128xf32>
    %249 = vector.extract_strided_slice %248 {offsets = [0, 0], sizes = [2, 32], strides = [1, 1]} : vector<2x128xf32> to vector<2x32xf32>
    %250 = arith.negf %249 : vector<2x32xf32>
    %251 = math.exp %250 : vector<2x32xf32>
    %cst_54 = arith.constant 1.000000e+00 : f32
    %252 = vector.broadcast %cst_54 : f32 to vector<2x32xf32>
    %253 = arith.addf %252, %251 : vector<2x32xf32>
    %254 = arith.divf %252, %253 : vector<2x32xf32>
    %255 = vector.extract_strided_slice %248 {offsets = [0, 32], sizes = [2, 32], strides = [1, 1]} : vector<2x128xf32> to vector<2x32xf32>
    %256 = arith.negf %255 : vector<2x32xf32>
    %257 = math.exp %256 : vector<2x32xf32>
    %cst_55 = arith.constant 1.000000e+00 : f32
    %258 = vector.broadcast %cst_55 : f32 to vector<2x32xf32>
    %259 = arith.addf %258, %257 : vector<2x32xf32>
    %260 = arith.divf %258, %259 : vector<2x32xf32>
    %261 = vector.extract_strided_slice %248 {offsets = [0, 64], sizes = [2, 32], strides = [1, 1]} : vector<2x128xf32> to vector<2x32xf32>
    %262 = math.tanh %261 : vector<2x32xf32>
    %263 = vector.extract_strided_slice %248 {offsets = [0, 96], sizes = [2, 32], strides = [1, 1]} : vector<2x128xf32> to vector<2x32xf32>
    %264 = arith.negf %263 : vector<2x32xf32>
    %265 = math.exp %264 : vector<2x32xf32>
    %cst_56 = arith.constant 1.000000e+00 : f32
    %266 = vector.broadcast %cst_56 : f32 to vector<2x32xf32>
    %267 = arith.addf %266, %265 : vector<2x32xf32>
    %268 = arith.divf %266, %267 : vector<2x32xf32>
    %269 = arith.mulf %260, %213 : vector<2x32xf32>
    %270 = arith.mulf %254, %262 : vector<2x32xf32>
    %271 = arith.addf %269, %270 : vector<2x32xf32>
    %272 = math.tanh %271 : vector<2x32xf32>
    %273 = arith.mulf %268, %272 : vector<2x32xf32>
    %cst_57 = arith.constant dense<0.000000e+00> : vector<2x128xf32>
    %274 = tpu.matmul %273, %8, %cst_57 {dimension_numbers = #tpu.dot_dimension_numbers<[1], [0], [0], [1], [0, 0, 1, 1], [], []>} : vector<2x32xf32>, vector<32x128xf32>, vector<2x128xf32> -> vector<2x128xf32>
    %cst_58 = arith.constant dense<0.000000e+00> : vector<2x128xf32>
    %275 = tpu.matmul %245, %7, %cst_58 {dimension_numbers = #tpu.dot_dimension_numbers<[1], [0], [0], [1], [0, 0, 1, 1], [], []>} : vector<2x32xf32>, vector<32x128xf32>, vector<2x128xf32> -> vector<2x128xf32>
    %276 = arith.addf %274, %275 : vector<2x128xf32>
    %277 = vector.broadcast %9 : vector<1x128xf32> to vector<2x128xf32>
    %278 = arith.addf %276, %277 : vector<2x128xf32>
    %279 = vector.extract_strided_slice %278 {offsets = [0, 0], sizes = [2, 32], strides = [1, 1]} : vector<2x128xf32> to vector<2x32xf32>
    %280 = arith.negf %279 : vector<2x32xf32>
    %281 = math.exp %280 : vector<2x32xf32>
    %cst_59 = arith.constant 1.000000e+00 : f32
    %282 = vector.broadcast %cst_59 : f32 to vector<2x32xf32>
    %283 = arith.addf %282, %281 : vector<2x32xf32>
    %284 = arith.divf %282, %283 : vector<2x32xf32>
    %285 = vector.extract_strided_slice %278 {offsets = [0, 32], sizes = [2, 32], strides = [1, 1]} : vector<2x128xf32> to vector<2x32xf32>
    %286 = arith.negf %285 : vector<2x32xf32>
    %287 = math.exp %286 : vector<2x32xf32>
    %cst_60 = arith.constant 1.000000e+00 : f32
    %288 = vector.broadcast %cst_60 : f32 to vector<2x32xf32>
    %289 = arith.addf %288, %287 : vector<2x32xf32>
    %290 = arith.divf %288, %289 : vector<2x32xf32>
    %291 = vector.extract_strided_slice %278 {offsets = [0, 64], sizes = [2, 32], strides = [1, 1]} : vector<2x128xf32> to vector<2x32xf32>
    %292 = math.tanh %291 : vector<2x32xf32>
    %293 = vector.extract_strided_slice %278 {offsets = [0, 96], sizes = [2, 32], strides = [1, 1]} : vector<2x128xf32> to vector<2x32xf32>
    %294 = arith.negf %293 : vector<2x32xf32>
    %295 = math.exp %294 : vector<2x32xf32>
    %cst_61 = arith.constant 1.000000e+00 : f32
    %296 = vector.broadcast %cst_61 : f32 to vector<2x32xf32>
    %297 = arith.addf %296, %295 : vector<2x32xf32>
    %298 = arith.divf %296, %297 : vector<2x32xf32>
    %299 = arith.mulf %290, %243 : vector<2x32xf32>
    %300 = arith.mulf %284, %292 : vector<2x32xf32>
    %301 = arith.addf %299, %300 : vector<2x32xf32>
    %302 = math.tanh %301 : vector<2x32xf32>
    %303 = arith.mulf %298, %302 : vector<2x32xf32>
    %304 = vector.extract_strided_slice %5 {offsets = [10, 0], sizes = [2, 128], strides = [1, 1]} : vector<16x128xf32> to vector<2x128xf32>
    %cst_62 = arith.constant dense<0.000000e+00> : vector<2x128xf32>
    %305 = tpu.matmul %273, %6, %cst_62 {dimension_numbers = #tpu.dot_dimension_numbers<[1], [0], [0], [1], [0, 0, 1, 1], [], []>} : vector<2x32xf32>, vector<32x128xf32>, vector<2x128xf32> -> vector<2x128xf32>
    %306 = arith.addf %304, %305 : vector<2x128xf32>
    %307 = vector.extract_strided_slice %306 {offsets = [0, 0], sizes = [2, 32], strides = [1, 1]} : vector<2x128xf32> to vector<2x32xf32>
    %308 = arith.negf %307 : vector<2x32xf32>
    %309 = math.exp %308 : vector<2x32xf32>
    %cst_63 = arith.constant 1.000000e+00 : f32
    %310 = vector.broadcast %cst_63 : f32 to vector<2x32xf32>
    %311 = arith.addf %310, %309 : vector<2x32xf32>
    %312 = arith.divf %310, %311 : vector<2x32xf32>
    %313 = vector.extract_strided_slice %306 {offsets = [0, 32], sizes = [2, 32], strides = [1, 1]} : vector<2x128xf32> to vector<2x32xf32>
    %314 = arith.negf %313 : vector<2x32xf32>
    %315 = math.exp %314 : vector<2x32xf32>
    %cst_64 = arith.constant 1.000000e+00 : f32
    %316 = vector.broadcast %cst_64 : f32 to vector<2x32xf32>
    %317 = arith.addf %316, %315 : vector<2x32xf32>
    %318 = arith.divf %316, %317 : vector<2x32xf32>
    %319 = vector.extract_strided_slice %306 {offsets = [0, 64], sizes = [2, 32], strides = [1, 1]} : vector<2x128xf32> to vector<2x32xf32>
    %320 = math.tanh %319 : vector<2x32xf32>
    %321 = vector.extract_strided_slice %306 {offsets = [0, 96], sizes = [2, 32], strides = [1, 1]} : vector<2x128xf32> to vector<2x32xf32>
    %322 = arith.negf %321 : vector<2x32xf32>
    %323 = math.exp %322 : vector<2x32xf32>
    %cst_65 = arith.constant 1.000000e+00 : f32
    %324 = vector.broadcast %cst_65 : f32 to vector<2x32xf32>
    %325 = arith.addf %324, %323 : vector<2x32xf32>
    %326 = arith.divf %324, %325 : vector<2x32xf32>
    %327 = arith.mulf %318, %271 : vector<2x32xf32>
    %328 = arith.mulf %312, %320 : vector<2x32xf32>
    %329 = arith.addf %327, %328 : vector<2x32xf32>
    %330 = math.tanh %329 : vector<2x32xf32>
    %331 = arith.mulf %326, %330 : vector<2x32xf32>
    %cst_66 = arith.constant dense<0.000000e+00> : vector<2x128xf32>
    %332 = tpu.matmul %331, %8, %cst_66 {dimension_numbers = #tpu.dot_dimension_numbers<[1], [0], [0], [1], [0, 0, 1, 1], [], []>} : vector<2x32xf32>, vector<32x128xf32>, vector<2x128xf32> -> vector<2x128xf32>
    %cst_67 = arith.constant dense<0.000000e+00> : vector<2x128xf32>
    %333 = tpu.matmul %303, %7, %cst_67 {dimension_numbers = #tpu.dot_dimension_numbers<[1], [0], [0], [1], [0, 0, 1, 1], [], []>} : vector<2x32xf32>, vector<32x128xf32>, vector<2x128xf32> -> vector<2x128xf32>
    %334 = arith.addf %332, %333 : vector<2x128xf32>
    %335 = vector.broadcast %9 : vector<1x128xf32> to vector<2x128xf32>
    %336 = arith.addf %334, %335 : vector<2x128xf32>
    %337 = vector.extract_strided_slice %336 {offsets = [0, 0], sizes = [2, 32], strides = [1, 1]} : vector<2x128xf32> to vector<2x32xf32>
    %338 = arith.negf %337 : vector<2x32xf32>
    %339 = math.exp %338 : vector<2x32xf32>
    %cst_68 = arith.constant 1.000000e+00 : f32
    %340 = vector.broadcast %cst_68 : f32 to vector<2x32xf32>
    %341 = arith.addf %340, %339 : vector<2x32xf32>
    %342 = arith.divf %340, %341 : vector<2x32xf32>
    %343 = vector.extract_strided_slice %336 {offsets = [0, 32], sizes = [2, 32], strides = [1, 1]} : vector<2x128xf32> to vector<2x32xf32>
    %344 = arith.negf %343 : vector<2x32xf32>
    %345 = math.exp %344 : vector<2x32xf32>
    %cst_69 = arith.constant 1.000000e+00 : f32
    %346 = vector.broadcast %cst_69 : f32 to vector<2x32xf32>
    %347 = arith.addf %346, %345 : vector<2x32xf32>
    %348 = arith.divf %346, %347 : vector<2x32xf32>
    %349 = vector.extract_strided_slice %336 {offsets = [0, 64], sizes = [2, 32], strides = [1, 1]} : vector<2x128xf32> to vector<2x32xf32>
    %350 = math.tanh %349 : vector<2x32xf32>
    %351 = vector.extract_strided_slice %336 {offsets = [0, 96], sizes = [2, 32], strides = [1, 1]} : vector<2x128xf32> to vector<2x32xf32>
    %352 = arith.negf %351 : vector<2x32xf32>
    %353 = math.exp %352 : vector<2x32xf32>
    %cst_70 = arith.constant 1.000000e+00 : f32
    %354 = vector.broadcast %cst_70 : f32 to vector<2x32xf32>
    %355 = arith.addf %354, %353 : vector<2x32xf32>
    %356 = arith.divf %354, %355 : vector<2x32xf32>
    %357 = arith.mulf %348, %301 : vector<2x32xf32>
    %358 = arith.mulf %342, %350 : vector<2x32xf32>
    %359 = arith.addf %357, %358 : vector<2x32xf32>
    %360 = math.tanh %359 : vector<2x32xf32>
    %361 = arith.mulf %356, %360 : vector<2x32xf32>
    %362 = vector.extract_strided_slice %5 {offsets = [12, 0], sizes = [2, 128], strides = [1, 1]} : vector<16x128xf32> to vector<2x128xf32>
    %cst_71 = arith.constant dense<0.000000e+00> : vector<2x128xf32>
    %363 = tpu.matmul %331, %6, %cst_71 {dimension_numbers = #tpu.dot_dimension_numbers<[1], [0], [0], [1], [0, 0, 1, 1], [], []>} : vector<2x32xf32>, vector<32x128xf32>, vector<2x128xf32> -> vector<2x128xf32>
    %364 = arith.addf %362, %363 : vector<2x128xf32>
    %365 = vector.extract_strided_slice %364 {offsets = [0, 0], sizes = [2, 32], strides = [1, 1]} : vector<2x128xf32> to vector<2x32xf32>
    %366 = arith.negf %365 : vector<2x32xf32>
    %367 = math.exp %366 : vector<2x32xf32>
    %cst_72 = arith.constant 1.000000e+00 : f32
    %368 = vector.broadcast %cst_72 : f32 to vector<2x32xf32>
    %369 = arith.addf %368, %367 : vector<2x32xf32>
    %370 = arith.divf %368, %369 : vector<2x32xf32>
    %371 = vector.extract_strided_slice %364 {offsets = [0, 32], sizes = [2, 32], strides = [1, 1]} : vector<2x128xf32> to vector<2x32xf32>
    %372 = arith.negf %371 : vector<2x32xf32>
    %373 = math.exp %372 : vector<2x32xf32>
    %cst_73 = arith.constant 1.000000e+00 : f32
    %374 = vector.broadcast %cst_73 : f32 to vector<2x32xf32>
    %375 = arith.addf %374, %373 : vector<2x32xf32>
    %376 = arith.divf %374, %375 : vector<2x32xf32>
    %377 = vector.extract_strided_slice %364 {offsets = [0, 64], sizes = [2, 32], strides = [1, 1]} : vector<2x128xf32> to vector<2x32xf32>
    %378 = math.tanh %377 : vector<2x32xf32>
    %379 = vector.extract_strided_slice %364 {offsets = [0, 96], sizes = [2, 32], strides = [1, 1]} : vector<2x128xf32> to vector<2x32xf32>
    %380 = arith.negf %379 : vector<2x32xf32>
    %381 = math.exp %380 : vector<2x32xf32>
    %cst_74 = arith.constant 1.000000e+00 : f32
    %382 = vector.broadcast %cst_74 : f32 to vector<2x32xf32>
    %383 = arith.addf %382, %381 : vector<2x32xf32>
    %384 = arith.divf %382, %383 : vector<2x32xf32>
    %385 = arith.mulf %376, %329 : vector<2x32xf32>
    %386 = arith.mulf %370, %378 : vector<2x32xf32>
    %387 = arith.addf %385, %386 : vector<2x32xf32>
    %388 = math.tanh %387 : vector<2x32xf32>
    %389 = arith.mulf %384, %388 : vector<2x32xf32>
    %cst_75 = arith.constant dense<0.000000e+00> : vector<2x128xf32>
    %390 = tpu.matmul %389, %8, %cst_75 {dimension_numbers = #tpu.dot_dimension_numbers<[1], [0], [0], [1], [0, 0, 1, 1], [], []>} : vector<2x32xf32>, vector<32x128xf32>, vector<2x128xf32> -> vector<2x128xf32>
    %cst_76 = arith.constant dense<0.000000e+00> : vector<2x128xf32>
    %391 = tpu.matmul %361, %7, %cst_76 {dimension_numbers = #tpu.dot_dimension_numbers<[1], [0], [0], [1], [0, 0, 1, 1], [], []>} : vector<2x32xf32>, vector<32x128xf32>, vector<2x128xf32> -> vector<2x128xf32>
    %392 = arith.addf %390, %391 : vector<2x128xf32>
    %393 = vector.broadcast %9 : vector<1x128xf32> to vector<2x128xf32>
    %394 = arith.addf %392, %393 : vector<2x128xf32>
    %395 = vector.extract_strided_slice %394 {offsets = [0, 0], sizes = [2, 32], strides = [1, 1]} : vector<2x128xf32> to vector<2x32xf32>
    %396 = arith.negf %395 : vector<2x32xf32>
    %397 = math.exp %396 : vector<2x32xf32>
    %cst_77 = arith.constant 1.000000e+00 : f32
    %398 = vector.broadcast %cst_77 : f32 to vector<2x32xf32>
    %399 = arith.addf %398, %397 : vector<2x32xf32>
    %400 = arith.divf %398, %399 : vector<2x32xf32>
    %401 = vector.extract_strided_slice %394 {offsets = [0, 32], sizes = [2, 32], strides = [1, 1]} : vector<2x128xf32> to vector<2x32xf32>
    %402 = arith.negf %401 : vector<2x32xf32>
    %403 = math.exp %402 : vector<2x32xf32>
    %cst_78 = arith.constant 1.000000e+00 : f32
    %404 = vector.broadcast %cst_78 : f32 to vector<2x32xf32>
    %405 = arith.addf %404, %403 : vector<2x32xf32>
    %406 = arith.divf %404, %405 : vector<2x32xf32>
    %407 = vector.extract_strided_slice %394 {offsets = [0, 64], sizes = [2, 32], strides = [1, 1]} : vector<2x128xf32> to vector<2x32xf32>
    %408 = math.tanh %407 : vector<2x32xf32>
    %409 = vector.extract_strided_slice %394 {offsets = [0, 96], sizes = [2, 32], strides = [1, 1]} : vector<2x128xf32> to vector<2x32xf32>
    %410 = arith.negf %409 : vector<2x32xf32>
    %411 = math.exp %410 : vector<2x32xf32>
    %cst_79 = arith.constant 1.000000e+00 : f32
    %412 = vector.broadcast %cst_79 : f32 to vector<2x32xf32>
    %413 = arith.addf %412, %411 : vector<2x32xf32>
    %414 = arith.divf %412, %413 : vector<2x32xf32>
    %415 = arith.mulf %406, %359 : vector<2x32xf32>
    %416 = arith.mulf %400, %408 : vector<2x32xf32>
    %417 = arith.addf %415, %416 : vector<2x32xf32>
    %418 = math.tanh %417 : vector<2x32xf32>
    %419 = arith.mulf %414, %418 : vector<2x32xf32>
    %420 = vector.extract_strided_slice %5 {offsets = [14, 0], sizes = [2, 128], strides = [1, 1]} : vector<16x128xf32> to vector<2x128xf32>
    %cst_80 = arith.constant dense<0.000000e+00> : vector<2x128xf32>
    %421 = tpu.matmul %389, %6, %cst_80 {dimension_numbers = #tpu.dot_dimension_numbers<[1], [0], [0], [1], [0, 0, 1, 1], [], []>} : vector<2x32xf32>, vector<32x128xf32>, vector<2x128xf32> -> vector<2x128xf32>
    %422 = arith.addf %420, %421 : vector<2x128xf32>
    %423 = vector.extract_strided_slice %422 {offsets = [0, 0], sizes = [2, 32], strides = [1, 1]} : vector<2x128xf32> to vector<2x32xf32>
    %424 = arith.negf %423 : vector<2x32xf32>
    %425 = math.exp %424 : vector<2x32xf32>
    %cst_81 = arith.constant 1.000000e+00 : f32
    %426 = vector.broadcast %cst_81 : f32 to vector<2x32xf32>
    %427 = arith.addf %426, %425 : vector<2x32xf32>
    %428 = arith.divf %426, %427 : vector<2x32xf32>
    %429 = vector.extract_strided_slice %422 {offsets = [0, 32], sizes = [2, 32], strides = [1, 1]} : vector<2x128xf32> to vector<2x32xf32>
    %430 = arith.negf %429 : vector<2x32xf32>
    %431 = math.exp %430 : vector<2x32xf32>
    %cst_82 = arith.constant 1.000000e+00 : f32
    %432 = vector.broadcast %cst_82 : f32 to vector<2x32xf32>
    %433 = arith.addf %432, %431 : vector<2x32xf32>
    %434 = arith.divf %432, %433 : vector<2x32xf32>
    %435 = vector.extract_strided_slice %422 {offsets = [0, 64], sizes = [2, 32], strides = [1, 1]} : vector<2x128xf32> to vector<2x32xf32>
    %436 = math.tanh %435 : vector<2x32xf32>
    %437 = vector.extract_strided_slice %422 {offsets = [0, 96], sizes = [2, 32], strides = [1, 1]} : vector<2x128xf32> to vector<2x32xf32>
    %438 = arith.negf %437 : vector<2x32xf32>
    %439 = math.exp %438 : vector<2x32xf32>
    %cst_83 = arith.constant 1.000000e+00 : f32
    %440 = vector.broadcast %cst_83 : f32 to vector<2x32xf32>
    %441 = arith.addf %440, %439 : vector<2x32xf32>
    %442 = arith.divf %440, %441 : vector<2x32xf32>
    %443 = arith.mulf %434, %387 : vector<2x32xf32>
    %444 = arith.mulf %428, %436 : vector<2x32xf32>
    %445 = arith.addf %443, %444 : vector<2x32xf32>
    %446 = math.tanh %445 : vector<2x32xf32>
    %447 = arith.mulf %442, %446 : vector<2x32xf32>
    %cst_84 = arith.constant dense<0.000000e+00> : vector<2x128xf32>
    %448 = tpu.matmul %447, %8, %cst_84 {dimension_numbers = #tpu.dot_dimension_numbers<[1], [0], [0], [1], [0, 0, 1, 1], [], []>} : vector<2x32xf32>, vector<32x128xf32>, vector<2x128xf32> -> vector<2x128xf32>
    %cst_85 = arith.constant dense<0.000000e+00> : vector<2x128xf32>
    %449 = tpu.matmul %419, %7, %cst_85 {dimension_numbers = #tpu.dot_dimension_numbers<[1], [0], [0], [1], [0, 0, 1, 1], [], []>} : vector<2x32xf32>, vector<32x128xf32>, vector<2x128xf32> -> vector<2x128xf32>
    %450 = arith.addf %448, %449 : vector<2x128xf32>
    %451 = vector.broadcast %9 : vector<1x128xf32> to vector<2x128xf32>
    %452 = arith.addf %450, %451 : vector<2x128xf32>
    %453 = vector.extract_strided_slice %452 {offsets = [0, 0], sizes = [2, 32], strides = [1, 1]} : vector<2x128xf32> to vector<2x32xf32>
    %454 = arith.negf %453 : vector<2x32xf32>
    %455 = math.exp %454 : vector<2x32xf32>
    %cst_86 = arith.constant 1.000000e+00 : f32
    %456 = vector.broadcast %cst_86 : f32 to vector<2x32xf32>
    %457 = arith.addf %456, %455 : vector<2x32xf32>
    %458 = arith.divf %456, %457 : vector<2x32xf32>
    %459 = vector.extract_strided_slice %452 {offsets = [0, 32], sizes = [2, 32], strides = [1, 1]} : vector<2x128xf32> to vector<2x32xf32>
    %460 = arith.negf %459 : vector<2x32xf32>
    %461 = math.exp %460 : vector<2x32xf32>
    %cst_87 = arith.constant 1.000000e+00 : f32
    %462 = vector.broadcast %cst_87 : f32 to vector<2x32xf32>
    %463 = arith.addf %462, %461 : vector<2x32xf32>
    %464 = arith.divf %462, %463 : vector<2x32xf32>
    %465 = vector.extract_strided_slice %452 {offsets = [0, 64], sizes = [2, 32], strides = [1, 1]} : vector<2x128xf32> to vector<2x32xf32>
    %466 = math.tanh %465 : vector<2x32xf32>
    %467 = vector.extract_strided_slice %452 {offsets = [0, 96], sizes = [2, 32], strides = [1, 1]} : vector<2x128xf32> to vector<2x32xf32>
    %468 = arith.negf %467 : vector<2x32xf32>
    %469 = math.exp %468 : vector<2x32xf32>
    %cst_88 = arith.constant 1.000000e+00 : f32
    %470 = vector.broadcast %cst_88 : f32 to vector<2x32xf32>
    %471 = arith.addf %470, %469 : vector<2x32xf32>
    %472 = arith.divf %470, %471 : vector<2x32xf32>
    %473 = arith.mulf %464, %417 : vector<2x32xf32>
    %474 = arith.mulf %458, %466 : vector<2x32xf32>
    %475 = arith.addf %473, %474 : vector<2x32xf32>
    %476 = math.tanh %475 : vector<2x32xf32>
    %477 = arith.mulf %472, %476 : vector<2x32xf32>
    %c0_89 = arith.constant 0 : index
    %c0_90 = arith.constant 0 : index
    %478 = vector.load %arg7[%c0_89, %c0_90] : memref<32x128xf32, #tpu.memory_space<vmem>>, vector<32x128xf32>
    %cst_91 = arith.constant dense<0.000000e+00> : vector<2x128xf32>
    %479 = tpu.matmul %477, %478, %cst_91 {dimension_numbers = #tpu.dot_dimension_numbers<[1], [0], [0], [1], [0, 0, 1, 1], [], []>} : vector<2x32xf32>, vector<32x128xf32>, vector<2x128xf32> -> vector<2x128xf32>
    %c0_92 = arith.constant 0 : index
    %c0_93 = arith.constant 0 : index
    %480 = vector.load %arg8[%c0_92, %c0_93] : memref<1x128xf32, #tpu.memory_space<vmem>>, vector<1x128xf32>
    %481 = vector.broadcast %480 : vector<1x128xf32> to vector<2x128xf32>
    %482 = arith.addf %479, %481 : vector<2x128xf32>
    %c0_94 = arith.constant 0 : index
    %c0_95 = arith.constant 0 : index
    %483 = vector.load %arg9[%c0_94, %c0_95] : memref<2x128xf32, #tpu.memory_space<vmem>>, vector<2x128xf32>
    tpu.vector_store %arg9[%c0_94, %c0_95], %482 {strides = array<i32>} : memref<2x128xf32, #tpu.memory_space<vmem>>, vector<2x128xf32>,
    return
  }
}

</mosaic_0001>

<llo_original>
// kernel: tpu_custom_call.1
$region0: #{tpu_custom_call.1}
  #allocation0 [shape = 'u32[]', space=smem, size = 0x4, offset = 0x4, fixed_abs, tag = 'smem constant byte address 0x4 - core index']
  #allocation1 [shape = 'u32[144,128]{1,0:T(1,128)}', space=vmem, size = 0x12000, scoped, tag = 'internal scratch']
  %s0 = inlined_call_operand.hbm [shape: f32[16,32], index: 0, kind: input, shape index: {}]
  %s1 = inlined_call_operand.hbm [shape: f32[32,128], index: 1, kind: input, shape index: {}]
  %s2 = inlined_call_operand.hbm [shape: f32[32,128], index: 2, kind: input, shape index: {}]
  %s3 = inlined_call_operand.vmem [shape: f32[1,128], index: 3, kind: input, shape index: {}]
  %s4 = inlined_call_operand.hbm [shape: f32[32,128], index: 4, kind: input, shape index: {}]
  %s5 = inlined_call_operand.hbm [shape: f32[32,128], index: 5, kind: input, shape index: {}]
  %s6 = inlined_call_operand.vmem [shape: f32[1,128], index: 6, kind: input, shape index: {}]
  %s7 = inlined_call_operand.hbm [shape: f32[32,128], index: 7, kind: input, shape index: {}]
  %s8 = inlined_call_operand.vmem [shape: f32[1,128], index: 8, kind: input, shape index: {}]
  %s9 = inlined_call_operand.hbm [shape: f32[2,128], index: 9, kind: output, shape index: {}]
  %s10 = sld [smem:[#allocation0]]
  $region70: #{tpu_custom_call.1} parent=0
    _
  %s12 = ssub.s32 1, %s10
  %s13 = scalar_select 0, %s12, %s10
  $region1: #{tpu_custom_call.1} parent=0
    #allocation2 [shape = 'u8[8192]{0}', space=vmem, size = 0x2000, scoped, tag = 'input window, operand 0, single buffered']
    #allocation3 [shape = 's32[1]{0}', space=sflag, size = 0x4, scoped, tag = 'scoped memory for tpu_custom_call.1']
    #allocation4 [shape = 's32[1]{0}', space=sflag, size = 0x4, scoped, tag = 'scoped memory for tpu_custom_call.1']
    #allocation5 [shape = 'u8[16384]{0}', space=vmem, size = 0x4000, scoped, tag = 'input window, operand 1, single buffered']
    #allocation6 [shape = 's32[1]{0}', space=sflag, size = 0x4, scoped, tag = 'scoped memory for tpu_custom_call.1']
    #allocation7 [shape = 'u8[16384]{0}', space=vmem, size = 0x4000, scoped, tag = 'input window, operand 2, single buffered']
    #allocation8 [shape = 'u8[16384]{0}', space=vmem, size = 0x4000, scoped, tag = 'input window, operand 4, single buffered']
    #allocation9 [shape = 's32[1]{0}', space=sflag, size = 0x4, scoped, tag = 'scoped memory for tpu_custom_call.1']
    #allocation10 [shape = 'u8[16384]{0}', space=vmem, size = 0x4000, scoped, tag = 'input window, operand 5, single buffered']
    #allocation11 [shape = 'u8[16384]{0}', space=vmem, size = 0x4000, scoped, tag = 'input window, operand 7, single buffered']
    #allocation12 [shape = 's32[1]{0}', space=sflag, size = 0x4, scoped, tag = 'scoped memory for tpu_custom_call.1']
    #allocation13 [shape = 'u8[1024]{0}', space=vmem, size = 0x400, scoped, tag = 'output window, operand 0, single buffered']
    %14 = vsyncpa [#allocation3], 0
    %15 = vsyncpa [#allocation6], 0
    %16 = vsyncpa [#allocation9], 0
    %17 = vsyncpa [#allocation12], 0
    %18 = vsyncpa [#allocation4], 0
    // Predicated region
    $region2: #{tpu_custom_call.1} parent=1 // pred_check
      _
    $region3: #{tpu_custom_call.1} parent=1 // pred_check_branch
      %20 = sbr.rel (0) target = $region5
    $region4: #{tpu_custom_call.1} parent=1 // pred_region
      %s22 = ssub.s32 256, 256
      %23 = vsyncadd [#allocation3], %s22
      %s24 = sshll.u32 [#allocation2], 4
      %s25 = int_to_ptr.vmem [resolvable:$true] %s24
      %30 = dma.hbm_to_vmem [thread:$0]  %s0, 256, %s25, [#allocation3], 128, 128, 8
    $region5: #{tpu_custom_call.1} parent=1 // pred_fallthru
      _
    // Predicated region
    $region6: #{tpu_custom_call.1} parent=1 // pred_check
      _
    $region7: #{tpu_custom_call.1} parent=1 // pred_check_branch
      %32 = sbr.rel (0) target = $region9
    $region8: #{tpu_custom_call.1} parent=1 // pred_region
      %s34 = ssub.s32 512, 512
      %35 = vsyncadd [#allocation6], %s34
      %s36 = sshll.u32 [#allocation5], 4
      %s37 = int_to_ptr.vmem [resolvable:$true] %s36
      %42 = dma.hbm_to_vmem [thread:$0]  %s1, 512, %s37, [#allocation6], 128, 128, 8
    $region9: #{tpu_custom_call.1} parent=1 // pred_fallthru
      _
    // Predicated region
    $region10: #{tpu_custom_call.1} parent=1 // pred_check
      _
    $region11: #{tpu_custom_call.1} parent=1 // pred_check_branch
      %44 = sbr.rel (0) target = $region13
    $region12: #{tpu_custom_call.1} parent=1 // pred_region
      %s46 = ssub.s32 512, 512
      %47 = vsyncadd [#allocation6], %s46
      %s48 = sshll.u32 [#allocation7], 4
      %s49 = int_to_ptr.vmem [resolvable:$true] %s48
      %54 = dma.hbm_to_vmem [thread:$0]  %s2, 512, %s49, [#allocation6], 128, 128, 8
    $region13: #{tpu_custom_call.1} parent=1 // pred_fallthru
      _
    // Predicated region
    $region14: #{tpu_custom_call.1} parent=1 // pred_check
      _
    $region15: #{tpu_custom_call.1} parent=1 // pred_check_branch
      %56 = sbr.rel (0) target = $region17
    $region16: #{tpu_custom_call.1} parent=1 // pred_region
      _
    $region17: #{tpu_custom_call.1} parent=1 // pred_fallthru
      _
    // Predicated region
    $region18: #{tpu_custom_call.1} parent=1 // pred_check
      _
    $region19: #{tpu_custom_call.1} parent=1 // pred_check_branch
      %58 = sbr.rel (0) target = $region21
    $region20: #{tpu_custom_call.1} parent=1 // pred_region
      %s60 = ssub.s32 512, 512
      %61 = vsyncadd [#allocation9], %s60
      %s62 = sshll.u32 [#allocation8], 4
      %s63 = int_to_ptr.vmem [resolvable:$true] %s62
      %68 = dma.hbm_to_vmem [thread:$0]  %s4, 512, %s63, [#allocation9], 128, 128, 8
    $region21: #{tpu_custom_call.1} parent=1 // pred_fallthru
      _
    // Predicated region
    $region22: #{tpu_custom_call.1} parent=1 // pred_check
      _
    $region23: #{tpu_custom_call.1} parent=1 // pred_check_branch
      %70 = sbr.rel (0) target = $region25
    $region24: #{tpu_custom_call.1} parent=1 // pred_region
      %s72 = ssub.s32 512, 512
      %73 = vsyncadd [#allocation9], %s72
      %s74 = sshll.u32 [#allocation10], 4
      %s75 = int_to_ptr.vmem [resolvable:$true] %s74
      %80 = dma.hbm_to_vmem [thread:$0]  %s5, 512, %s75, [#allocation9], 128, 128, 8
    $region25: #{tpu_custom_call.1} parent=1 // pred_fallthru
      _
    // Predicated region
    $region26: #{tpu_custom_call.1} parent=1 // pred_check
      _
    $region27: #{tpu_custom_call.1} parent=1 // pred_check_branch
      %82 = sbr.rel (0) target = $region29
    $region28: #{tpu_custom_call.1} parent=1 // pred_region
      _
    $region29: #{tpu_custom_call.1} parent=1 // pred_fallthru
      _
    // Predicated region
    $region30: #{tpu_custom_call.1} parent=1 // pred_check
      _
    $region31: #{tpu_custom_call.1} parent=1 // pred_check_branch
      %84 = sbr.rel (0) target = $region33
    $region32: #{tpu_custom_call.1} parent=1 // pred_region
      %s86 = ssub.s32 512, 512
      %87 = vsyncadd [#allocation12], %s86
      %s88 = sshll.u32 [#allocation11], 4
      %s89 = int_to_ptr.vmem [resolvable:$true] %s88
      %94 = dma.hbm_to_vmem [thread:$0]  %s7, 512, %s89, [#allocation12], 128, 128, 8
    $region33: #{tpu_custom_call.1} parent=1 // pred_fallthru
      _
    // Predicated region
    $region34: #{tpu_custom_call.1} parent=1 // pred_check
      _
    $region35: #{tpu_custom_call.1} parent=1 // pred_check_branch
      %96 = sbr.rel (0) target = $region37
    $region36: #{tpu_custom_call.1} parent=1 // pred_region
      _
    $region37: #{tpu_custom_call.1} parent=1 // pred_fallthru
      _
    // Predicated region
    $region38: #{tpu_custom_call.1} parent=1 // pred_check
      _
    $region39: #{tpu_custom_call.1} parent=1 // pred_check_branch
      %98 = sbr.rel (0) target = $region41
    $region40: #{tpu_custom_call.1} parent=1 // pred_region
      %99 = dma.done [#allocation3], 256
    $region41: #{tpu_custom_call.1} parent=1 // pred_fallthru
      _
    // Predicated region
    $region42: #{tpu_custom_call.1} parent=1 // pred_check
      _
    $region43: #{tpu_custom_call.1} parent=1 // pred_check_branch
      %101 = sbr.rel (0) target = $region45
    $region44: #{tpu_custom_call.1} parent=1 // pred_region
      %102 = dma.done [#allocation6], 512
    $region45: #{tpu_custom_call.1} parent=1 // pred_fallthru
      _
    // Predicated region
    $region46: #{tpu_custom_call.1} parent=1 // pred_check
      _
    $region47: #{tpu_custom_call.1} parent=1 // pred_check_branch
      %104 = sbr.rel (0) target = $region49
    $region48: #{tpu_custom_call.1} parent=1 // pred_region
      %105 = dma.done [#allocation6], 512
    $region49: #{tpu_custom_call.1} parent=1 // pred_fallthru
      _
    // Predicated region
    $region50: #{tpu_custom_call.1} parent=1 // pred_check
      _
    $region51: #{tpu_custom_call.1} parent=1 // pred_check_branch
      %107 = sbr.rel (0) target = $region53
    $region52: #{tpu_custom_call.1} parent=1 // pred_region
      %108 = dma.done [#allocation9], 512
    $region53: #{tpu_custom_call.1} parent=1 // pred_fallthru
      _
    // Predicated region
    $region54: #{tpu_custom_call.1} parent=1 // pred_check
      _
    $region55: #{tpu_custom_call.1} parent=1 // pred_check_branch
      %110 = sbr.rel (0) target = $region57
    $region56: #{tpu_custom_call.1} parent=1 // pred_region
      %111 = dma.done [#allocation9], 512
    $region57: #{tpu_custom_call.1} parent=1 // pred_fallthru
      _
    // Predicated region
    $region58: #{tpu_custom_call.1} parent=1 // pred_check
      _
    $region59: #{tpu_custom_call.1} parent=1 // pred_check_branch
      %113 = sbr.rel (0) target = $region61
    $region60: #{tpu_custom_call.1} parent=1 // pred_region
      %114 = dma.done [#allocation12], 512
    $region61: #{tpu_custom_call.1} parent=1 // pred_fallthru
      _
    %v115 = vld [vmem:[#allocation5] sm:$0xff]
    %v116 = vld [vmem:[#allocation5 + $0x8] sm:$0xff]
    %v117 = vld [vmem:[#allocation5 + $0x10] sm:$0xff]
    %v118 = vld [vmem:[#allocation5 + $0x18] sm:$0xff]
    %v119 = vld [vmem:[%s3] sm:$0x1]
    %v120 = vld [vmem:[#allocation2] sm:$0xff]
    %v121 = vld [vmem:[#allocation2 + $0x8] sm:$0xff]
    %v123 = vlaneseq
    %v124 = vshrl.u32 %v123, 7
    %v125 = vsub.s32 0, %v124
    %v126 = vrot.slane %v119, %v125
    %vm128 = vcmask 261120
    %v130 = vsel %vm128, %v120, 0
    %v133 = vsel %vm128, %v121, 0
    %135 = vmatprep.subr.mxu0 0.0
    %136 = vmatpush1.msra.mxu0 %v115
    %137 = vmatprep.subr.mxu0 0.0
    %138 = vmatpush1.msra.mxu0 %v116
    %139 = vmatprep.subr.mxu0 0.0
    %140 = vmatpush1.msra.mxu0 %v117
    %141 = vmatprep.subr.mxu0 0.0
    %142 = vmatpush1.msra.mxu0 %v118
    %143 = vmatprep.subr.mxu0 0.0
    %144 = vmatpush1.msra.mxu0 0.0
    %145 = vmatprep.subr.mxu0 0.0
    %146 = vmatpush1.msra.mxu0 0.0
    %147 = vmatprep.subr.mxu0 0.0
    %148 = vmatpush1.msra.mxu0 0.0
    %149 = vmatprep.subr.mxu0 0.0
    %150 = vmatpush1.msra.mxu0 0.0
    %151 = vmatprep.subr.mxu0 0.0
    %152 = vmatpush1.msra.mxu0 0.0
    %153 = vmatprep.subr.mxu0 0.0
    %154 = vmatpush1.msra.mxu0 0.0
    %155 = vmatprep.subr.mxu0 0.0
    %156 = vmatpush1.msra.mxu0 0.0
    %157 = vmatprep.subr.mxu0 0.0
    %158 = vmatpush1.msra.mxu0 0.0
    %159 = vmatprep.subr.mxu0 0.0
    %160 = vmatpush1.msra.mxu0 0.0
    %161 = vmatprep.subr.mxu0 0.0
    %162 = vmatpush1.msra.mxu0 0.0
    %163 = vmatprep.subr.mxu0 0.0
    %164 = vmatpush1.msra.mxu0 0.0
    %165 = vmatprep.subr.mxu0 0.0
    %166 = vmatpush1.msra.mxu0 0.0
    %167 = vmatprep.subr.mxu0 0.0
    %168 = vmatpush1.msra.mxu0 0.0
    %169 = vmatprep.subr.mxu0 0.0
    %170 = vmatpush1.msra.mxu0 0.0
    %171 = vmatprep.subr.mxu0 0.0
    %172 = vmatpush1.msra.mxu0 0.0
    %173 = vmatprep.subr.mxu0 0.0
    %174 = vmatpush1.msra.mxu0 0.0
    %175 = vmatprep.subr.mxu0 0.0
    %176 = vmatpush1.msra.mxu0 0.0
    %177 = vmatprep.subr.mxu0 0.0
    %178 = vmatpush1.msra.mxu0 0.0
    %179 = vmatprep.subr.mxu0 0.0
    %180 = vmatpush1.msra.mxu0 0.0
    %181 = vmatprep.subr.mxu0 0.0
    %182 = vmatpush1.msra.mxu0 0.0
    %183 = vmatprep.subr.mxu0 0.0
    %184 = vmatpush1.msra.mxu0 0.0
    %185 = vmatprep.subr.mxu0 0.0
    %186 = vmatpush1.msra.mxu0 0.0
    %187 = vmatprep.subr.mxu0 0.0
    %188 = vmatpush1.msra.mxu0 0.0
    %189 = vmatprep.subr.mxu0 0.0
    %190 = vmatpush1.msra.mxu0 0.0
    %191 = vmatprep.subr.mxu0 0.0
    %192 = vmatpush1.msra.mxu0 0.0
    %193 = vmatprep.subr.mxu0 0.0
    %194 = vmatpush1.msra.mxu0 0.0
    %195 = vmatprep.subr.mxu0 0.0
    %196 = vmatpush1.msra.mxu0 0.0
    %197 = vmatprep.subr.mxu0 0.0
    %198 = vmatpush1.msra.mxu0 0.0
    %199 = vmatprep.mubr.f32.mxu0 0.0
    %200 = vmatmul.mubr.f32.gmra.mrb[0].mxu0 %v130
    %v201 = vpop.f32.mrb[0].mxu0
    %v202 = vadd.f32 %v126, %v201
    %v203 = vpop.f32.mrb[0].mxu0
    %204 = vmatprep.mubr.f32.mxu0 0.0
    %205 = vmatmul.mubr.f32.gmra.mrb[0].mxu0 %v133
    %v206 = vpop.f32.mrb[0].mxu0
    %v207 = vadd.f32 %v126, %v206
    %v208 = vpop.f32.mrb[0].mxu0
    %209 = vdwg.mxu0
    %v210 = vld [vmem:[#allocation7] sm:$0xff]
    %v211 = vld [vmem:[#allocation7 + $0x8] sm:$0xff]
    %v212 = vld [vmem:[#allocation7 + $0x10] sm:$0xff]
    %v213 = vld [vmem:[#allocation7 + $0x18] sm:$0xff]
    %v214 = vld [vmem:[#allocation10] sm:$0xff]
    %v215 = vld [vmem:[#allocation10 + $0x8] sm:$0xff]
    %v216 = vld [vmem:[#allocation10 + $0x10] sm:$0xff]
    %v217 = vld [vmem:[#allocation10 + $0x18] sm:$0xff]
    %v218 = vld [vmem:[#allocation8] sm:$0xff]
    %v219 = vld [vmem:[#allocation8 + $0x8] sm:$0xff]
    %v220 = vld [vmem:[#allocation8 + $0x10] sm:$0xff]
    %v221 = vld [vmem:[#allocation8 + $0x18] sm:$0xff]
    %v222 = vld [vmem:[%s6] sm:$0x1]
    %v224 = vsel %vm128, 0.0, 0
    %226 = vmatprep.subr.mxu0 0.0
    %227 = vmatpush1.msra.mxu0 %v210
    %228 = vmatprep.subr.mxu0 0.0
    %229 = vmatpush1.msra.mxu0 %v211
    %230 = vmatprep.subr.mxu0 0.0
    %231 = vmatpush1.msra.mxu0 %v212
    %232 = vmatprep.subr.mxu0 0.0
    %233 = vmatpush1.msra.mxu0 %v213
    %234 = vmatprep.subr.mxu0 0.0
    %235 = vmatpush1.msra.mxu0 0.0
    %236 = vmatprep.subr.mxu0 0.0
    %237 = vmatpush1.msra.mxu0 0.0
    %238 = vmatprep.subr.mxu0 0.0
    %239 = vmatpush1.msra.mxu0 0.0
    %240 = vmatprep.subr.mxu0 0.0
    %241 = vmatpush1.msra.mxu0 0.0
    %242 = vmatprep.subr.mxu0 0.0
    %243 = vmatpush1.msra.mxu0 0.0
    %244 = vmatprep.subr.mxu0 0.0
    %245 = vmatpush1.msra.mxu0 0.0
    %246 = vmatprep.subr.mxu0 0.0
    %247 = vmatpush1.msra.mxu0 0.0
    %248 = vmatprep.subr.mxu0 0.0
    %249 = vmatpush1.msra.mxu0 0.0
    %250 = vmatprep.subr.mxu0 0.0
    %251 = vmatpush1.msra.mxu0 0.0
    %252 = vmatprep.subr.mxu0 0.0
    %253 = vmatpush1.msra.mxu0 0.0
    %254 = vmatprep.subr.mxu0 0.0
    %255 = vmatpush1.msra.mxu0 0.0
    %256 = vmatprep.subr.mxu0 0.0
    %257 = vmatpush1.msra.mxu0 0.0
    %258 = vmatprep.subr.mxu0 0.0
    %259 = vmatpush1.msra.mxu0 0.0
    %260 = vmatprep.subr.mxu0 0.0
    %261 = vmatpush1.msra.mxu0 0.0
    %262 = vmatprep.subr.mxu0 0.0
    %263 = vmatpush1.msra.mxu0 0.0
    %264 = vmatprep.subr.mxu0 0.0
    %265 = vmatpush1.msra.mxu0 0.0
    %266 = vmatprep.subr.mxu0 0.0
    %267 = vmatpush1.msra.mxu0 0.0
    %268 = vmatprep.subr.mxu0 0.0
    %269 = vmatpush1.msra.mxu0 0.0
    %270 = vmatprep.subr.mxu0 0.0
    %271 = vmatpush1.msra.mxu0 0.0
    %272 = vmatprep.subr.mxu0 0.0
    %273 = vmatpush1.msra.mxu0 0.0
    %274 = vmatprep.subr.mxu0 0.0
    %275 = vmatpush1.msra.mxu0 0.0
    %276 = vmatprep.subr.mxu0 0.0
    %277 = vmatpush1.msra.mxu0 0.0
    %278 = vmatprep.subr.mxu0 0.0
    %279 = vmatpush1.msra.mxu0 0.0
    %280 = vmatprep.subr.mxu0 0.0
    %281 = vmatpush1.msra.mxu0 0.0
    %282 = vmatprep.subr.mxu0 0.0
    %283 = vmatpush1.msra.mxu0 0.0
    %284 = vmatprep.subr.mxu0 0.0
    %285 = vmatpush1.msra.mxu0 0.0
    %286 = vmatprep.subr.mxu0 0.0
    %287 = vmatpush1.msra.mxu0 0.0
    %288 = vmatprep.subr.mxu0 0.0
    %289 = vmatpush1.msra.mxu0 0.0
    %290 = vmatprep.mubr.f32.mxu0 0.0
    %291 = vmatmul.mubr.f32.gmra.mrb[0].mxu0 %v224
    %v292 = vpop.f32.mrb[0].mxu0
    %v293 = vadd.f32 0.0, %v292
    %v294 = vpop.f32.mrb[0].mxu0
    %295 = vdwg.mxu0
    %v296 = vadd.f32 %v202, %v293
    %v297 = vxor.u32 %v296, 2147483648
    %v298 = vmul.f32 %v297, 1.442695
    %v299 = vpow.pop %v298
    %v300 = vadd.f32 %v299, 1.0
    %v301 = vrcp.pop %v300
    %v302 = vmul.f32 1.0, %v301
    %v303 = vtanh.pop %v296
    %v304 = vmul.f32 %v302, 0.0
    %306 = vrot.lane.b32.xlu0 %v303, 64
    %v307 = vpop.permute.xlu0 %306
    %v309 = vmul.f32 %v302, %v307
    %311 = vrot.lane.b32.xlu0 %v309, 32
    %v312 = vpop.permute.xlu0 %311
    %v314 = vadd.f32 %v304, %v312
    %v315 = vtanh.pop %v314
    %317 = vrot.lane.b32.xlu0 %v315, 64
    %v318 = vpop.permute.xlu0 %317
    %v320 = vmul.f32 %v302, %v318
    %321 = vmatprep.subr.mxu0 0.0
    %322 = vmatpush1.msra.mxu0 %v214
    %323 = vmatprep.subr.mxu0 0.0
    %324 = vmatpush1.msra.mxu0 %v215
    %325 = vmatprep.subr.mxu0 0.0
    %326 = vmatpush1.msra.mxu0 %v216
    %327 = vmatprep.subr.mxu0 0.0
    %328 = vmatpush1.msra.mxu0 %v217
    %329 = vmatprep.subr.mxu0 0.0
    %330 = vmatpush1.msra.mxu0 0.0
    %331 = vmatprep.subr.mxu0 0.0
    %332 = vmatpush1.msra.mxu0 0.0
    %333 = vmatprep.subr.mxu0 0.0
    %334 = vmatpush1.msra.mxu0 0.0
    %335 = vmatprep.subr.mxu0 0.0
    %336 = vmatpush1.msra.mxu0 0.0
    %337 = vmatprep.subr.mxu0 0.0
    %338 = vmatpush1.msra.mxu0 0.0
    %339 = vmatprep.subr.mxu0 0.0
    %340 = vmatpush1.msra.mxu0 0.0
    %341 = vmatprep.subr.mxu0 0.0
    %342 = vmatpush1.msra.mxu0 0.0
    %343 = vmatprep.subr.mxu0 0.0
    %344 = vmatpush1.msra.mxu0 0.0
    %345 = vmatprep.subr.mxu0 0.0
    %346 = vmatpush1.msra.mxu0 0.0
    %347 = vmatprep.subr.mxu0 0.0
    %348 = vmatpush1.msra.mxu0 0.0
    %349 = vmatprep.subr.mxu0 0.0
    %350 = vmatpush1.msra.mxu0 0.0
    %351 = vmatprep.subr.mxu0 0.0
    %352 = vmatpush1.msra.mxu0 0.0
    %353 = vmatprep.subr.mxu0 0.0
    %354 = vmatpush1.msra.mxu0 0.0
    %355 = vmatprep.subr.mxu0 0.0
    %356 = vmatpush1.msra.mxu0 0.0
    %357 = vmatprep.subr.mxu0 0.0
    %358 = vmatpush1.msra.mxu0 0.0
    %359 = vmatprep.subr.mxu0 0.0
    %360 = vmatpush1.msra.mxu0 0.0
    %361 = vmatprep.subr.mxu0 0.0
    %362 = vmatpush1.msra.mxu0 0.0
    %363 = vmatprep.subr.mxu0 0.0
    %364 = vmatpush1.msra.mxu0 0.0
    %365 = vmatprep.subr.mxu0 0.0
    %366 = vmatpush1.msra.mxu0 0.0
    %367 = vmatprep.subr.mxu0 0.0
    %368 = vmatpush1.msra.mxu0 0.0
    %369 = vmatprep.subr.mxu0 0.0
    %370 = vmatpush1.msra.mxu0 0.0
    %371 = vmatprep.subr.mxu0 0.0
    %372 = vmatpush1.msra.mxu0 0.0
    %373 = vmatprep.subr.mxu0 0.0
    %374 = vmatpush1.msra.mxu0 0.0
    %375 = vmatprep.subr.mxu0 0.0
    %376 = vmatpush1.msra.mxu0 0.0
    %377 = vmatprep.subr.mxu0 0.0
    %378 = vmatpush1.msra.mxu0 0.0
    %379 = vmatprep.subr.mxu0 0.0
    %380 = vmatpush1.msra.mxu0 0.0
    %381 = vmatprep.subr.mxu0 0.0
    %382 = vmatpush1.msra.mxu0 0.0
    %383 = vmatprep.subr.mxu0 0.0
    %384 = vmatpush1.msra.mxu0 0.0
    %385 = vmatprep.mubr.f32.mxu0 0.0
    %386 = vmatmul.mubr.f32.gmra.mrb[0].mxu0 %v224
    %v387 = vpop.f32.mrb[0].mxu0
    %v388 = vadd.f32 0.0, %v387
    %v389 = vpop.f32.mrb[0].mxu0
    %390 = vdwg.mxu0
    %392 = vrot.lane.b32.xlu0 %v320, 32
    %v393 = vpop.permute.xlu0 %392
    %v394 = vsel %vm128, %v393, 0
    %396 = vmatprep.subr.mxu0 0.0
    %397 = vmatpush1.msra.mxu0 %v218
    %398 = vmatprep.subr.mxu0 0.0
    %399 = vmatpush1.msra.mxu0 %v219
    %400 = vmatprep.subr.mxu0 0.0
    %401 = vmatpush1.msra.mxu0 %v220
    %402 = vmatprep.subr.mxu0 0.0
    %403 = vmatpush1.msra.mxu0 %v221
    %404 = vmatprep.subr.mxu0 0.0
    %405 = vmatpush1.msra.mxu0 0.0
    %406 = vmatprep.subr.mxu0 0.0
    %407 = vmatpush1.msra.mxu0 0.0
    %408 = vmatprep.subr.mxu0 0.0
    %409 = vmatpush1.msra.mxu0 0.0
    %410 = vmatprep.subr.mxu0 0.0
    %411 = vmatpush1.msra.mxu0 0.0
    %412 = vmatprep.subr.mxu0 0.0
    %413 = vmatpush1.msra.mxu0 0.0
    %414 = vmatprep.subr.mxu0 0.0
    %415 = vmatpush1.msra.mxu0 0.0
    %416 = vmatprep.subr.mxu0 0.0
    %417 = vmatpush1.msra.mxu0 0.0
    %418 = vmatprep.subr.mxu0 0.0
    %419 = vmatpush1.msra.mxu0 0.0
    %420 = vmatprep.subr.mxu0 0.0
    %421 = vmatpush1.msra.mxu0 0.0
    %422 = vmatprep.subr.mxu0 0.0
    %423 = vmatpush1.msra.mxu0 0.0
    %424 = vmatprep.subr.mxu0 0.0
    %425 = vmatpush1.msra.mxu0 0.0
    %426 = vmatprep.subr.mxu0 0.0
    %427 = vmatpush1.msra.mxu0 0.0
    %428 = vmatprep.subr.mxu0 0.0
    %429 = vmatpush1.msra.mxu0 0.0
    %430 = vmatprep.subr.mxu0 0.0
    %431 = vmatpush1.msra.mxu0 0.0
    %432 = vmatprep.subr.mxu0 0.0
    %433 = vmatpush1.msra.mxu0 0.0
    %434 = vmatprep.subr.mxu0 0.0
    %435 = vmatpush1.msra.mxu0 0.0
    %436 = vmatprep.subr.mxu0 0.0
    %437 = vmatpush1.msra.mxu0 0.0
    %438 = vmatprep.subr.mxu0 0.0
    %439 = vmatpush1.msra.mxu0 0.0
    %440 = vmatprep.subr.mxu0 0.0
    %441 = vmatpush1.msra.mxu0 0.0
    %442 = vmatprep.subr.mxu0 0.0
    %443 = vmatpush1.msra.mxu0 0.0
    %444 = vmatprep.subr.mxu0 0.0
    %445 = vmatpush1.msra.mxu0 0.0
    %446 = vmatprep.subr.mxu0 0.0
    %447 = vmatpush1.msra.mxu0 0.0
    %448 = vmatprep.subr.mxu0 0.0
    %449 = vmatpush1.msra.mxu0 0.0
    %450 = vmatprep.subr.mxu0 0.0
    %451 = vmatpush1.msra.mxu0 0.0
    %452 = vmatprep.subr.mxu0 0.0
    %453 = vmatpush1.msra.mxu0 0.0
    %454 = vmatprep.subr.mxu0 0.0
    %455 = vmatpush1.msra.mxu0 0.0
    %456 = vmatprep.subr.mxu0 0.0
    %457 = vmatpush1.msra.mxu0 0.0
    %458 = vmatprep.subr.mxu0 0.0
    %459 = vmatpush1.msra.mxu0 0.0
    %460 = vmatprep.mubr.f32.mxu0 0.0
    %461 = vmatmul.mubr.f32.gmra.mrb[0].mxu0 %v394
    %v462 = vpop.f32.mrb[0].mxu0
    %v463 = vadd.f32 %v388, %v462
    %v464 = vpop.f32.mrb[0].mxu0
    %465 = vdwg.mxu0
    %v467 = vlaneseq
    %v468 = vshrl.u32 %v467, 7
    %v469 = vsub.s32 0, %v468
    %v470 = vrot.slane %v222, %v469
    %v472 = vadd.f32 %v463, %v470
    %v473 = vxor.u32 %v472, 2147483648
    %v474 = vmul.f32 %v473, 1.442695
    %v475 = vpow.pop %v474
    %v476 = vadd.f32 %v475, 1.0
    %v477 = vrcp.pop %v476
    %v478 = vmul.f32 1.0, %v477
    %v479 = vtanh.pop %v472
    %v480 = vmul.f32 %v478, 0.0
    %482 = vrot.lane.b32.xlu0 %v479, 64
    %v483 = vpop.permute.xlu0 %482
    %v485 = vmul.f32 %v478, %v483
    %487 = vrot.lane.b32.xlu0 %v485, 32
    %v488 = vpop.permute.xlu0 %487
    %v490 = vadd.f32 %v480, %v488
    %v491 = vtanh.pop %v490
    %493 = vrot.lane.b32.xlu0 %v491, 64
    %v494 = vpop.permute.xlu0 %493
    %v496 = vmul.f32 %v478, %v494
    %497 = vmatprep.subr.mxu0 0.0
    %498 = vmatpush1.msra.mxu0 %v210
    %499 = vmatprep.subr.mxu0 0.0
    %500 = vmatpush1.msra.mxu0 %v211
    %501 = vmatprep.subr.mxu0 0.0
    %502 = vmatpush1.msra.mxu0 %v212
    %503 = vmatprep.subr.mxu0 0.0
    %504 = vmatpush1.msra.mxu0 %v213
    %505 = vmatprep.subr.mxu0 0.0
    %506 = vmatpush1.msra.mxu0 0.0
    %507 = vmatprep.subr.mxu0 0.0
    %508 = vmatpush1.msra.mxu0 0.0
    %509 = vmatprep.subr.mxu0 0.0
    %510 = vmatpush1.msra.mxu0 0.0
    %511 = vmatprep.subr.mxu0 0.0
    %512 = vmatpush1.msra.mxu0 0.0
    %513 = vmatprep.subr.mxu0 0.0
    %514 = vmatpush1.msra.mxu0 0.0
    %515 = vmatprep.subr.mxu0 0.0
    %516 = vmatpush1.msra.mxu0 0.0
    %517 = vmatprep.subr.mxu0 0.0
    %518 = vmatpush1.msra.mxu0 0.0
    %519 = vmatprep.subr.mxu0 0.0
    %520 = vmatpush1.msra.mxu0 0.0
    %521 = vmatprep.subr.mxu0 0.0
    %522 = vmatpush1.msra.mxu0 0.0
    %523 = vmatprep.subr.mxu0 0.0
    %524 = vmatpush1.msra.mxu0 0.0
    %525 = vmatprep.subr.mxu0 0.0
    %526 = vmatpush1.msra.mxu0 0.0
    %527 = vmatprep.subr.mxu0 0.0
    %528 = vmatpush1.msra.mxu0 0.0
    %529 = vmatprep.subr.mxu0 0.0
    %530 = vmatpush1.msra.mxu0 0.0
    %531 = vmatprep.subr.mxu0 0.0
    %532 = vmatpush1.msra.mxu0 0.0
    %533 = vmatprep.subr.mxu0 0.0
    %534 = vmatpush1.msra.mxu0 0.0
    %535 = vmatprep.subr.mxu0 0.0
    %536 = vmatpush1.msra.mxu0 0.0
    %537 = vmatprep.subr.mxu0 0.0
    %538 = vmatpush1.msra.mxu0 0.0
    %539 = vmatprep.subr.mxu0 0.0
    %540 = vmatpush1.msra.mxu0 0.0
    %541 = vmatprep.subr.mxu0 0.0
    %542 = vmatpush1.msra.mxu0 0.0
    %543 = vmatprep.subr.mxu0 0.0
    %544 = vmatpush1.msra.mxu0 0.0
    %545 = vmatprep.subr.mxu0 0.0
    %546 = vmatpush1.msra.mxu0 0.0
    %547 = vmatprep.subr.mxu0 0.0
    %548 = vmatpush1.msra.mxu0 0.0
    %549 = vmatprep.subr.mxu0 0.0
    %550 = vmatpush1.msra.mxu0 0.0
    %551 = vmatprep.subr.mxu0 0.0
    %552 = vmatpush1.msra.mxu0 0.0
    %553 = vmatprep.subr.mxu0 0.0
    %554 = vmatpush1.msra.mxu0 0.0
    %555 = vmatprep.subr.mxu0 0.0
    %556 = vmatpush1.msra.mxu0 0.0
    %557 = vmatprep.subr.mxu0 0.0
    %558 = vmatpush1.msra.mxu0 0.0
    %559 = vmatprep.subr.mxu0 0.0
    %560 = vmatpush1.msra.mxu0 0.0
    %561 = vmatprep.mubr.f32.mxu0 0.0
    %562 = vmatmul.mubr.f32.gmra.mrb[0].mxu0 %v394
    %v563 = vpop.f32.mrb[0].mxu0
    %v564 = vadd.f32 0.0, %v563
    %v565 = vpop.f32.mrb[0].mxu0
    %566 = vdwg.mxu0
    %v568 = vrot.slane %v564, 6
    %v570 = vadd.f32 %v202, %v568
    %v571 = vxor.u32 %v570, 2147483648
    %v572 = vmul.f32 %v571, 1.442695
    %v573 = vpow.pop %v572
    %v574 = vadd.f32 %v573, 1.0
    %v575 = vrcp.pop %v574
    %v576 = vmul.f32 1.0, %v575
    %v577 = vtanh.pop %v570
    %v579 = vrot.slane %v314, 6
    %v581 = vmul.f32 %v576, %v579
    %583 = vrot.lane.b32.xlu0 %v577, 64
    %v584 = vpop.permute.xlu0 %583
    %v586 = vmul.f32 %v576, %v584
    %588 = vrot.lane.b32.xlu0 %v586, 32
    %v589 = vpop.permute.xlu0 %588
    %v591 = vadd.f32 %v581, %v589
    %v592 = vtanh.pop %v591
    %594 = vrot.lane.b32.xlu0 %v592, 64
    %v595 = vpop.permute.xlu0 %594
    %v597 = vmul.f32 %v576, %v595
    %599 = vrot.lane.b32.xlu0 %v496, 32
    %v600 = vpop.permute.xlu0 %599
    %v601 = vsel %vm128, %v600, 0
    %603 = vmatprep.subr.mxu0 0.0
    %604 = vmatpush1.msra.mxu0 %v214
    %605 = vmatprep.subr.mxu0 0.0
    %606 = vmatpush1.msra.mxu0 %v215
    %607 = vmatprep.subr.mxu0 0.0
    %608 = vmatpush1.msra.mxu0 %v216
    %609 = vmatprep.subr.mxu0 0.0
    %610 = vmatpush1.msra.mxu0 %v217
    %611 = vmatprep.subr.mxu0 0.0
    %612 = vmatpush1.msra.mxu0 0.0
    %613 = vmatprep.subr.mxu0 0.0
    %614 = vmatpush1.msra.mxu0 0.0
    %615 = vmatprep.subr.mxu0 0.0
    %616 = vmatpush1.msra.mxu0 0.0
    %617 = vmatprep.subr.mxu0 0.0
    %618 = vmatpush1.msra.mxu0 0.0
    %619 = vmatprep.subr.mxu0 0.0
    %620 = vmatpush1.msra.mxu0 0.0
    %621 = vmatprep.subr.mxu0 0.0
    %622 = vmatpush1.msra.mxu0 0.0
    %623 = vmatprep.subr.mxu0 0.0
    %624 = vmatpush1.msra.mxu0 0.0
    %625 = vmatprep.subr.mxu0 0.0
    %626 = vmatpush1.msra.mxu0 0.0
    %627 = vmatprep.subr.mxu0 0.0
    %628 = vmatpush1.msra.mxu0 0.0
    %629 = vmatprep.subr.mxu0 0.0
    %630 = vmatpush1.msra.mxu0 0.0
    %631 = vmatprep.subr.mxu0 0.0
    %632 = vmatpush1.msra.mxu0 0.0
    %633 = vmatprep.subr.mxu0 0.0
    %634 = vmatpush1.msra.mxu0 0.0
    %635 = vmatprep.subr.mxu0 0.0
    %636 = vmatpush1.msra.mxu0 0.0
    %637 = vmatprep.subr.mxu0 0.0
    %638 = vmatpush1.msra.mxu0 0.0
    %639 = vmatprep.subr.mxu0 0.0
    %640 = vmatpush1.msra.mxu0 0.0
    %641 = vmatprep.subr.mxu0 0.0
    %642 = vmatpush1.msra.mxu0 0.0
    %643 = vmatprep.subr.mxu0 0.0
    %644 = vmatpush1.msra.mxu0 0.0
    %645 = vmatprep.subr.mxu0 0.0
    %646 = vmatpush1.msra.mxu0 0.0
    %647 = vmatprep.subr.mxu0 0.0
    %648 = vmatpush1.msra.mxu0 0.0
    %649 = vmatprep.subr.mxu0 0.0
    %650 = vmatpush1.msra.mxu0 0.0
    %651 = vmatprep.subr.mxu0 0.0
    %652 = vmatpush1.msra.mxu0 0.0
    %653 = vmatprep.subr.mxu0 0.0
    %654 = vmatpush1.msra.mxu0 0.0
    %655 = vmatprep.subr.mxu0 0.0
    %656 = vmatpush1.msra.mxu0 0.0
    %657 = vmatprep.subr.mxu0 0.0
    %658 = vmatpush1.msra.mxu0 0.0
    %659 = vmatprep.subr.mxu0 0.0
    %660 = vmatpush1.msra.mxu0 0.0
    %661 = vmatprep.subr.mxu0 0.0
    %662 = vmatpush1.msra.mxu0 0.0
    %663 = vmatprep.subr.mxu0 0.0
    %664 = vmatpush1.msra.mxu0 0.0
    %665 = vmatprep.subr.mxu0 0.0
    %666 = vmatpush1.msra.mxu0 0.0
    %667 = vmatprep.mubr.f32.mxu0 0.0
    %668 = vmatmul.mubr.f32.gmra.mrb[0].mxu0 %v601
    %v669 = vpop.f32.mrb[0].mxu0
    %v670 = vadd.f32 0.0, %v669
    %v671 = vpop.f32.mrb[0].mxu0
    %672 = vdwg.mxu0
    %v674 = vrot.slane %v597, 2
    %675 = vrot.lane.b32.xlu0 %v674, 32
    %v676 = vpop.permute.xlu0 %675
    %v677 = vsel %vm128, %v676, 0
    %679 = vmatprep.subr.mxu0 0.0
    %680 = vmatpush1.msra.mxu0 %v218
    %681 = vmatprep.subr.mxu0 0.0
    %682 = vmatpush1.msra.mxu0 %v219
    %683 = vmatprep.subr.mxu0 0.0
    %684 = vmatpush1.msra.mxu0 %v220
    %685 = vmatprep.subr.mxu0 0.0
    %686 = vmatpush1.msra.mxu0 %v221
    %687 = vmatprep.subr.mxu0 0.0
    %688 = vmatpush1.msra.mxu0 0.0
    %689 = vmatprep.subr.mxu0 0.0
    %690 = vmatpush1.msra.mxu0 0.0
    %691 = vmatprep.subr.mxu0 0.0
    %692 = vmatpush1.msra.mxu0 0.0
    %693 = vmatprep.subr.mxu0 0.0
    %694 = vmatpush1.msra.mxu0 0.0
    %695 = vmatprep.subr.mxu0 0.0
    %696 = vmatpush1.msra.mxu0 0.0
    %697 = vmatprep.subr.mxu0 0.0
    %698 = vmatpush1.msra.mxu0 0.0
    %699 = vmatprep.subr.mxu0 0.0
    %700 = vmatpush1.msra.mxu0 0.0
    %701 = vmatprep.subr.mxu0 0.0
    %702 = vmatpush1.msra.mxu0 0.0
    %703 = vmatprep.subr.mxu0 0.0
    %704 = vmatpush1.msra.mxu0 0.0
    %705 = vmatprep.subr.mxu0 0.0
    %706 = vmatpush1.msra.mxu0 0.0
    %707 = vmatprep.subr.mxu0 0.0
    %708 = vmatpush1.msra.mxu0 0.0
    %709 = vmatprep.subr.mxu0 0.0
    %710 = vmatpush1.msra.mxu0 0.0
    %711 = vmatprep.subr.mxu0 0.0
    %712 = vmatpush1.msra.mxu0 0.0
    %713 = vmatprep.subr.mxu0 0.0
    %714 = vmatpush1.msra.mxu0 0.0
    %715 = vmatprep.subr.mxu0 0.0
    %716 = vmatpush1.msra.mxu0 0.0
    %717 = vmatprep.subr.mxu0 0.0
    %718 = vmatpush1.msra.mxu0 0.0
    %719 = vmatprep.subr.mxu0 0.0
    %720 = vmatpush1.msra.mxu0 0.0
    %721 = vmatprep.subr.mxu0 0.0
    %722 = vmatpush1.msra.mxu0 0.0
    %723 = vmatprep.subr.mxu0 0.0
    %724 = vmatpush1.msra.mxu0 0.0
    %725 = vmatprep.subr.mxu0 0.0
    %726 = vmatpush1.msra.mxu0 0.0
    %727 = vmatprep.subr.mxu0 0.0
    %728 = vmatpush1.msra.mxu0 0.0
    %729 = vmatprep.subr.mxu0 0.0
    %730 = vmatpush1.msra.mxu0 0.0
    %731 = vmatprep.subr.mxu0 0.0
    %732 = vmatpush1.msra.mxu0 0.0
    %733 = vmatprep.subr.mxu0 0.0
    %734 = vmatpush1.msra.mxu0 0.0
    %735 = vmatprep.subr.mxu0 0.0
    %736 = vmatpush1.msra.mxu0 0.0
    %737 = vmatprep.subr.mxu0 0.0
    %738 = vmatpush1.msra.mxu0 0.0
    %739 = vmatprep.subr.mxu0 0.0
    %740 = vmatpush1.msra.mxu0 0.0
    %741 = vmatprep.subr.mxu0 0.0
    %742 = vmatpush1.msra.mxu0 0.0
    %743 = vmatprep.mubr.f32.mxu0 0.0
    %744 = vmatmul.mubr.f32.gmra.mrb[0].mxu0 %v677
    %v745 = vpop.f32.mrb[0].mxu0
    %v746 = vadd.f32 %v670, %v745
    %v747 = vpop.f32.mrb[0].mxu0
    %748 = vdwg.mxu0
    %v749 = vadd.f32 %v746, %v470
    %v750 = vxor.u32 %v749, 2147483648
    %v751 = vmul.f32 %v750, 1.442695
    %v752 = vpow.pop %v751
    %v753 = vadd.f32 %v752, 1.0
    %v754 = vrcp.pop %v753
    %v755 = vmul.f32 1.0, %v754
    %v756 = vtanh.pop %v749
    %v757 = vmul.f32 %v755, %v490
    %759 = vrot.lane.b32.xlu0 %v756, 64
    %v760 = vpop.permute.xlu0 %759
    %v762 = vmul.f32 %v755, %v760
    %764 = vrot.lane.b32.xlu0 %v762, 32
    %v765 = vpop.permute.xlu0 %764
    %v767 = vadd.f32 %v757, %v765
    %v768 = vtanh.pop %v767
    %770 = vrot.lane.b32.xlu0 %v768, 64
    %v771 = vpop.permute.xlu0 %770
    %v773 = vmul.f32 %v755, %v771
    %774 = vmatprep.subr.mxu0 0.0
    %775 = vmatpush1.msra.mxu0 %v210
    %776 = vmatprep.subr.mxu0 0.0
    %777 = vmatpush1.msra.mxu0 %v211
    %778 = vmatprep.subr.mxu0 0.0
    %779 = vmatpush1.msra.mxu0 %v212
    %780 = vmatprep.subr.mxu0 0.0
    %781 = vmatpush1.msra.mxu0 %v213
    %782 = vmatprep.subr.mxu0 0.0
    %783 = vmatpush1.msra.mxu0 0.0
    %784 = vmatprep.subr.mxu0 0.0
    %785 = vmatpush1.msra.mxu0 0.0
    %786 = vmatprep.subr.mxu0 0.0
    %787 = vmatpush1.msra.mxu0 0.0
    %788 = vmatprep.subr.mxu0 0.0
    %789 = vmatpush1.msra.mxu0 0.0
    %790 = vmatprep.subr.mxu0 0.0
    %791 = vmatpush1.msra.mxu0 0.0
    %792 = vmatprep.subr.mxu0 0.0
    %793 = vmatpush1.msra.mxu0 0.0
    %794 = vmatprep.subr.mxu0 0.0
    %795 = vmatpush1.msra.mxu0 0.0
    %796 = vmatprep.subr.mxu0 0.0
    %797 = vmatpush1.msra.mxu0 0.0
    %798 = vmatprep.subr.mxu0 0.0
    %799 = vmatpush1.msra.mxu0 0.0
    %800 = vmatprep.subr.mxu0 0.0
    %801 = vmatpush1.msra.mxu0 0.0
    %802 = vmatprep.subr.mxu0 0.0
    %803 = vmatpush1.msra.mxu0 0.0
    %804 = vmatprep.subr.mxu0 0.0
    %805 = vmatpush1.msra.mxu0 0.0
    %806 = vmatprep.subr.mxu0 0.0
    %807 = vmatpush1.msra.mxu0 0.0
    %808 = vmatprep.subr.mxu0 0.0
    %809 = vmatpush1.msra.mxu0 0.0
    %810 = vmatprep.subr.mxu0 0.0
    %811 = vmatpush1.msra.mxu0 0.0
    %812 = vmatprep.subr.mxu0 0.0
    %813 = vmatpush1.msra.mxu0 0.0
    %814 = vmatprep.subr.mxu0 0.0
    %815 = vmatpush1.msra.mxu0 0.0
    %816 = vmatprep.subr.mxu0 0.0
    %817 = vmatpush1.msra.mxu0 0.0
    %818 = vmatprep.subr.mxu0 0.0
    %819 = vmatpush1.msra.mxu0 0.0
    %820 = vmatprep.subr.mxu0 0.0
    %821 = vmatpush1.msra.mxu0 0.0
    %822 = vmatprep.subr.mxu0 0.0
    %823 = vmatpush1.msra.mxu0 0.0
    %824 = vmatprep.subr.mxu0 0.0
    %825 = vmatpush1.msra.mxu0 0.0
    %826 = vmatprep.subr.mxu0 0.0
    %827 = vmatpush1.msra.mxu0 0.0
    %828 = vmatprep.subr.mxu0 0.0
    %829 = vmatpush1.msra.mxu0 0.0
    %830 = vmatprep.subr.mxu0 0.0
    %831 = vmatpush1.msra.mxu0 0.0
    %832 = vmatprep.subr.mxu0 0.0
    %833 = vmatpush1.msra.mxu0 0.0
    %834 = vmatprep.subr.mxu0 0.0
    %835 = vmatpush1.msra.mxu0 0.0
    %836 = vmatprep.subr.mxu0 0.0
    %837 = vmatpush1.msra.mxu0 0.0
    %838 = vmatprep.mubr.f32.mxu0 0.0
    %839 = vmatmul.mubr.f32.gmra.mrb[0].mxu0 %v677
    %v840 = vpop.f32.mrb[0].mxu0
    %v841 = vadd.f32 0.0, %v840
    %v842 = vpop.f32.mrb[0].mxu0
    %843 = vdwg.mxu0
    %v845 = vrot.slane %v841, 4
    %v847 = vadd.f32 %v202, %v845
    %v848 = vxor.u32 %v847, 2147483648
    %v849 = vmul.f32 %v848, 1.442695
    %v850 = vpow.pop %v849
    %v851 = vadd.f32 %v850, 1.0
    %v852 = vrcp.pop %v851
    %v853 = vmul.f32 1.0, %v852
    %v854 = vtanh.pop %v847
    %v856 = vrot.slane %v591, 6
    %v858 = vmul.f32 %v853, %v856
    %860 = vrot.lane.b32.xlu0 %v854, 64
    %v861 = vpop.permute.xlu0 %860
    %v863 = vmul.f32 %v853, %v861
    %865 = vrot.lane.b32.xlu0 %v863, 32
    %v866 = vpop.permute.xlu0 %865
    %v868 = vadd.f32 %v858, %v866
    %v869 = vtanh.pop %v868
    %871 = vrot.lane.b32.xlu0 %v869, 64
    %v872 = vpop.permute.xlu0 %871
    %v874 = vmul.f32 %v853, %v872
    %876 = vrot.lane.b32.xlu0 %v773, 32
    %v877 = vpop.permute.xlu0 %876
    %v878 = vsel %vm128, %v877, 0
    %880 = vmatprep.subr.mxu0 0.0
    %881 = vmatpush1.msra.mxu0 %v214
    %882 = vmatprep.subr.mxu0 0.0
    %883 = vmatpush1.msra.mxu0 %v215
    %884 = vmatprep.subr.mxu0 0.0
    %885 = vmatpush1.msra.mxu0 %v216
    %886 = vmatprep.subr.mxu0 0.0
    %887 = vmatpush1.msra.mxu0 %v217
    %888 = vmatprep.subr.mxu0 0.0
    %889 = vmatpush1.msra.mxu0 0.0
    %890 = vmatprep.subr.mxu0 0.0
    %891 = vmatpush1.msra.mxu0 0.0
    %892 = vmatprep.subr.mxu0 0.0
    %893 = vmatpush1.msra.mxu0 0.0
    %894 = vmatprep.subr.mxu0 0.0
    %895 = vmatpush1.msra.mxu0 0.0
    %896 = vmatprep.subr.mxu0 0.0
    %897 = vmatpush1.msra.mxu0 0.0
    %898 = vmatprep.subr.mxu0 0.0
    %899 = vmatpush1.msra.mxu0 0.0
    %900 = vmatprep.subr.mxu0 0.0
    %901 = vmatpush1.msra.mxu0 0.0
    %902 = vmatprep.subr.mxu0 0.0
    %903 = vmatpush1.msra.mxu0 0.0
    %904 = vmatprep.subr.mxu0 0.0
    %905 = vmatpush1.msra.mxu0 0.0
    %906 = vmatprep.subr.mxu0 0.0
    %907 = vmatpush1.msra.mxu0 0.0
    %908 = vmatprep.subr.mxu0 0.0
    %909 = vmatpush1.msra.mxu0 0.0
    %910 = vmatprep.subr.mxu0 0.0
    %911 = vmatpush1.msra.mxu0 0.0
    %912 = vmatprep.subr.mxu0 0.0
    %913 = vmatpush1.msra.mxu0 0.0
    %914 = vmatprep.subr.mxu0 0.0
    %915 = vmatpush1.msra.mxu0 0.0
    %916 = vmatprep.subr.mxu0 0.0
    %917 = vmatpush1.msra.mxu0 0.0
    %918 = vmatprep.subr.mxu0 0.0
    %919 = vmatpush1.msra.mxu0 0.0
    %920 = vmatprep.subr.mxu0 0.0
    %921 = vmatpush1.msra.mxu0 0.0
    %922 = vmatprep.subr.mxu0 0.0
    %923 = vmatpush1.msra.mxu0 0.0
    %924 = vmatprep.subr.mxu0 0.0
    %925 = vmatpush1.msra.mxu0 0.0
    %926 = vmatprep.subr.mxu0 0.0
    %927 = vmatpush1.msra.mxu0 0.0
    %928 = vmatprep.subr.mxu0 0.0
    %929 = vmatpush1.msra.mxu0 0.0
    %930 = vmatprep.subr.mxu0 0.0
    %931 = vmatpush1.msra.mxu0 0.0
    %932 = vmatprep.subr.mxu0 0.0
    %933 = vmatpush1.msra.mxu0 0.0
    %934 = vmatprep.subr.mxu0 0.0
    %935 = vmatpush1.msra.mxu0 0.0
    %936 = vmatprep.subr.mxu0 0.0
    %937 = vmatpush1.msra.mxu0 0.0
    %938 = vmatprep.subr.mxu0 0.0
    %939 = vmatpush1.msra.mxu0 0.0
    %940 = vmatprep.subr.mxu0 0.0
    %941 = vmatpush1.msra.mxu0 0.0
    %942 = vmatprep.subr.mxu0 0.0
    %943 = vmatpush1.msra.mxu0 0.0
    %944 = vmatprep.mubr.f32.mxu0 0.0
    %945 = vmatmul.mubr.f32.gmra.mrb[0].mxu0 %v878
    %v946 = vpop.f32.mrb[0].mxu0
    %v947 = vadd.f32 0.0, %v946
    %v948 = vpop.f32.mrb[0].mxu0
    %949 = vdwg.mxu0
    %v951 = vrot.slane %v874, 4
    %952 = vrot.lane.b32.xlu0 %v951, 32
    %v953 = vpop.permute.xlu0 %952
    %v954 = vsel %vm128, %v953, 0
    %956 = vmatprep.subr.mxu0 0.0
    %957 = vmatpush1.msra.mxu0 %v218
    %958 = vmatprep.subr.mxu0 0.0
    %959 = vmatpush1.msra.mxu0 %v219
    %960 = vmatprep.subr.mxu0 0.0
    %961 = vmatpush1.msra.mxu0 %v220
    %962 = vmatprep.subr.mxu0 0.0
    %963 = vmatpush1.msra.mxu0 %v221
    %964 = vmatprep.subr.mxu0 0.0
    %965 = vmatpush1.msra.mxu0 0.0
    %966 = vmatprep.subr.mxu0 0.0
    %967 = vmatpush1.msra.mxu0 0.0
    %968 = vmatprep.subr.mxu0 0.0
    %969 = vmatpush1.msra.mxu0 0.0
    %970 = vmatprep.subr.mxu0 0.0
    %971 = vmatpush1.msra.mxu0 0.0
    %972 = vmatprep.subr.mxu0 0.0
    %973 = vmatpush1.msra.mxu0 0.0
    %974 = vmatprep.subr.mxu0 0.0
    %975 = vmatpush1.msra.mxu0 0.0
    %976 = vmatprep.subr.mxu0 0.0
    %977 = vmatpush1.msra.mxu0 0.0
    %978 = vmatprep.subr.mxu0 0.0
    %979 = vmatpush1.msra.mxu0 0.0
    %980 = vmatprep.subr.mxu0 0.0
    %981 = vmatpush1.msra.mxu0 0.0
    %982 = vmatprep.subr.mxu0 0.0
    %983 = vmatpush1.msra.mxu0 0.0
    %984 = vmatprep.subr.mxu0 0.0
    %985 = vmatpush1.msra.mxu0 0.0
    %986 = vmatprep.subr.mxu0 0.0
    %987 = vmatpush1.msra.mxu0 0.0
    %988 = vmatprep.subr.mxu0 0.0
    %989 = vmatpush1.msra.mxu0 0.0
    %990 = vmatprep.subr.mxu0 0.0
    %991 = vmatpush1.msra.mxu0 0.0
    %992 = vmatprep.subr.mxu0 0.0
    %993 = vmatpush1.msra.mxu0 0.0
    %994 = vmatprep.subr.mxu0 0.0
    %995 = vmatpush1.msra.mxu0 0.0
    %996 = vmatprep.subr.mxu0 0.0
    %997 = vmatpush1.msra.mxu0 0.0
    %998 = vmatprep.subr.mxu0 0.0
    %999 = vmatpush1.msra.mxu0 0.0
    %1000 = vmatprep.subr.mxu0 0.0
    %1001 = vmatpush1.msra.mxu0 0.0
    %1002 = vmatprep.subr.mxu0 0.0
    %1003 = vmatpush1.msra.mxu0 0.0
    %1004 = vmatprep.subr.mxu0 0.0
    %1005 = vmatpush1.msra.mxu0 0.0
    %1006 = vmatprep.subr.mxu0 0.0
    %1007 = vmatpush1.msra.mxu0 0.0
    %1008 = vmatprep.subr.mxu0 0.0
    %1009 = vmatpush1.msra.mxu0 0.0
    %1010 = vmatprep.subr.mxu0 0.0
    %1011 = vmatpush1.msra.mxu0 0.0
    %1012 = vmatprep.subr.mxu0 0.0
    %1013 = vmatpush1.msra.mxu0 0.0
    %1014 = vmatprep.subr.mxu0 0.0
    %1015 = vmatpush1.msra.mxu0 0.0
    %1016 = vmatprep.subr.mxu0 0.0
    %1017 = vmatpush1.msra.mxu0 0.0
    %1018 = vmatprep.subr.mxu0 0.0
    %1019 = vmatpush1.msra.mxu0 0.0
    %1020 = vmatprep.mubr.f32.mxu0 0.0
    %1021 = vmatmul.mubr.f32.gmra.mrb[0].mxu0 %v954
    %v1022 = vpop.f32.mrb[0].mxu0
    %v1023 = vadd.f32 %v947, %v1022
    %v1024 = vpop.f32.mrb[0].mxu0
    %1025 = vdwg.mxu0
    %v1026 = vadd.f32 %v1023, %v470
    %v1027 = vxor.u32 %v1026, 2147483648
    %v1028 = vmul.f32 %v1027, 1.442695
    %v1029 = vpow.pop %v1028
    %v1030 = vadd.f32 %v1029, 1.0
    %v1031 = vrcp.pop %v1030
    %v1032 = vmul.f32 1.0, %v1031
    %v1033 = vtanh.pop %v1026
    %v1034 = vmul.f32 %v1032, %v767
    %1036 = vrot.lane.b32.xlu0 %v1033, 64
    %v1037 = vpop.permute.xlu0 %1036
    %v1039 = vmul.f32 %v1032, %v1037
    %1041 = vrot.lane.b32.xlu0 %v1039, 32
    %v1042 = vpop.permute.xlu0 %1041
    %v1044 = vadd.f32 %v1034, %v1042
    %v1045 = vtanh.pop %v1044
    %1047 = vrot.lane.b32.xlu0 %v1045, 64
    %v1048 = vpop.permute.xlu0 %1047
    %v1050 = vmul.f32 %v1032, %v1048
    %1051 = vmatprep.subr.mxu0 0.0
    %1052 = vmatpush1.msra.mxu0 %v210
    %1053 = vmatprep.subr.mxu0 0.0
    %1054 = vmatpush1.msra.mxu0 %v211
    %1055 = vmatprep.subr.mxu0 0.0
    %1056 = vmatpush1.msra.mxu0 %v212
    %1057 = vmatprep.subr.mxu0 0.0
    %1058 = vmatpush1.msra.mxu0 %v213
    %1059 = vmatprep.subr.mxu0 0.0
    %1060 = vmatpush1.msra.mxu0 0.0
    %1061 = vmatprep.subr.mxu0 0.0
    %1062 = vmatpush1.msra.mxu0 0.0
    %1063 = vmatprep.subr.mxu0 0.0
    %1064 = vmatpush1.msra.mxu0 0.0
    %1065 = vmatprep.subr.mxu0 0.0
    %1066 = vmatpush1.msra.mxu0 0.0
    %1067 = vmatprep.subr.mxu0 0.0
    %1068 = vmatpush1.msra.mxu0 0.0
    %1069 = vmatprep.subr.mxu0 0.0
    %1070 = vmatpush1.msra.mxu0 0.0
    %1071 = vmatprep.subr.mxu0 0.0
    %1072 = vmatpush1.msra.mxu0 0.0
    %1073 = vmatprep.subr.mxu0 0.0
    %1074 = vmatpush1.msra.mxu0 0.0
    %1075 = vmatprep.subr.mxu0 0.0
    %1076 = vmatpush1.msra.mxu0 0.0
    %1077 = vmatprep.subr.mxu0 0.0
    %1078 = vmatpush1.msra.mxu0 0.0
    %1079 = vmatprep.subr.mxu0 0.0
    %1080 = vmatpush1.msra.mxu0 0.0
    %1081 = vmatprep.subr.mxu0 0.0
    %1082 = vmatpush1.msra.mxu0 0.0
    %1083 = vmatprep.subr.mxu0 0.0
    %1084 = vmatpush1.msra.mxu0 0.0
    %1085 = vmatprep.subr.mxu0 0.0
    %1086 = vmatpush1.msra.mxu0 0.0
    %1087 = vmatprep.subr.mxu0 0.0
    %1088 = vmatpush1.msra.mxu0 0.0
    %1089 = vmatprep.subr.mxu0 0.0
    %1090 = vmatpush1.msra.mxu0 0.0
    %1091 = vmatprep.subr.mxu0 0.0
    %1092 = vmatpush1.msra.mxu0 0.0
    %1093 = vmatprep.subr.mxu0 0.0
    %1094 = vmatpush1.msra.mxu0 0.0
    %1095 = vmatprep.subr.mxu0 0.0
    %1096 = vmatpush1.msra.mxu0 0.0
    %1097 = vmatprep.subr.mxu0 0.0
    %1098 = vmatpush1.msra.mxu0 0.0
    %1099 = vmatprep.subr.mxu0 0.0
    %1100 = vmatpush1.msra.mxu0 0.0
    %1101 = vmatprep.subr.mxu0 0.0
    %1102 = vmatpush1.msra.mxu0 0.0
    %1103 = vmatprep.subr.mxu0 0.0
    %1104 = vmatpush1.msra.mxu0 0.0
    %1105 = vmatprep.subr.mxu0 0.0
    %1106 = vmatpush1.msra.mxu0 0.0
    %1107 = vmatprep.subr.mxu0 0.0
    %1108 = vmatpush1.msra.mxu0 0.0
    %1109 = vmatprep.subr.mxu0 0.0
    %1110 = vmatpush1.msra.mxu0 0.0
    %1111 = vmatprep.subr.mxu0 0.0
    %1112 = vmatpush1.msra.mxu0 0.0
    %1113 = vmatprep.subr.mxu0 0.0
    %1114 = vmatpush1.msra.mxu0 0.0
    %1115 = vmatprep.mubr.f32.mxu0 0.0
    %1116 = vmatmul.mubr.f32.gmra.mrb[0].mxu0 %v954
    %v1117 = vpop.f32.mrb[0].mxu0
    %v1118 = vadd.f32 0.0, %v1117
    %v1119 = vpop.f32.mrb[0].mxu0
    %1120 = vdwg.mxu0
    %v1122 = vrot.slane %v1118, 2
    %v1124 = vadd.f32 %v202, %v1122
    %v1125 = vxor.u32 %v1124, 2147483648
    %v1126 = vmul.f32 %v1125, 1.442695
    %v1127 = vpow.pop %v1126
    %v1128 = vadd.f32 %v1127, 1.0
    %v1129 = vrcp.pop %v1128
    %v1130 = vmul.f32 1.0, %v1129
    %v1131 = vtanh.pop %v1124
    %v1133 = vrot.slane %v868, 6
    %v1135 = vmul.f32 %v1130, %v1133
    %1137 = vrot.lane.b32.xlu0 %v1131, 64
    %v1138 = vpop.permute.xlu0 %1137
    %v1140 = vmul.f32 %v1130, %v1138
    %1142 = vrot.lane.b32.xlu0 %v1140, 32
    %v1143 = vpop.permute.xlu0 %1142
    %v1145 = vadd.f32 %v1135, %v1143
    %v1146 = vtanh.pop %v1145
    %1148 = vrot.lane.b32.xlu0 %v1146, 64
    %v1149 = vpop.permute.xlu0 %1148
    %v1151 = vmul.f32 %v1130, %v1149
    %1153 = vrot.lane.b32.xlu0 %v1050, 32
    %v1154 = vpop.permute.xlu0 %1153
    %v1155 = vsel %vm128, %v1154, 0
    %1157 = vmatprep.subr.mxu0 0.0
    %1158 = vmatpush1.msra.mxu0 %v214
    %1159 = vmatprep.subr.mxu0 0.0
    %1160 = vmatpush1.msra.mxu0 %v215
    %1161 = vmatprep.subr.mxu0 0.0
    %1162 = vmatpush1.msra.mxu0 %v216
    %1163 = vmatprep.subr.mxu0 0.0
    %1164 = vmatpush1.msra.mxu0 %v217
    %1165 = vmatprep.subr.mxu0 0.0
    %1166 = vmatpush1.msra.mxu0 0.0
    %1167 = vmatprep.subr.mxu0 0.0
    %1168 = vmatpush1.msra.mxu0 0.0
    %1169 = vmatprep.subr.mxu0 0.0
    %1170 = vmatpush1.msra.mxu0 0.0
    %1171 = vmatprep.subr.mxu0 0.0
    %1172 = vmatpush1.msra.mxu0 0.0
    %1173 = vmatprep.subr.mxu0 0.0
    %1174 = vmatpush1.msra.mxu0 0.0
    %1175 = vmatprep.subr.mxu0 0.0
    %1176 = vmatpush1.msra.mxu0 0.0
    %1177 = vmatprep.subr.mxu0 0.0
    %1178 = vmatpush1.msra.mxu0 0.0
    %1179 = vmatprep.subr.mxu0 0.0
    %1180 = vmatpush1.msra.mxu0 0.0
    %1181 = vmatprep.subr.mxu0 0.0
    %1182 = vmatpush1.msra.mxu0 0.0
    %1183 = vmatprep.subr.mxu0 0.0
    %1184 = vmatpush1.msra.mxu0 0.0
    %1185 = vmatprep.subr.mxu0 0.0
    %1186 = vmatpush1.msra.mxu0 0.0
    %1187 = vmatprep.subr.mxu0 0.0
    %1188 = vmatpush1.msra.mxu0 0.0
    %1189 = vmatprep.subr.mxu0 0.0
    %1190 = vmatpush1.msra.mxu0 0.0
    %1191 = vmatprep.subr.mxu0 0.0
    %1192 = vmatpush1.msra.mxu0 0.0
    %1193 = vmatprep.subr.mxu0 0.0
    %1194 = vmatpush1.msra.mxu0 0.0
    %1195 = vmatprep.subr.mxu0 0.0
    %1196 = vmatpush1.msra.mxu0 0.0
    %1197 = vmatprep.subr.mxu0 0.0
    %1198 = vmatpush1.msra.mxu0 0.0
    %1199 = vmatprep.subr.mxu0 0.0
    %1200 = vmatpush1.msra.mxu0 0.0
    %1201 = vmatprep.subr.mxu0 0.0
    %1202 = vmatpush1.msra.mxu0 0.0
    %1203 = vmatprep.subr.mxu0 0.0
    %1204 = vmatpush1.msra.mxu0 0.0
    %1205 = vmatprep.subr.mxu0 0.0
    %1206 = vmatpush1.msra.mxu0 0.0
    %1207 = vmatprep.subr.mxu0 0.0
    %1208 = vmatpush1.msra.mxu0 0.0
    %1209 = vmatprep.subr.mxu0 0.0
    %1210 = vmatpush1.msra.mxu0 0.0
    %1211 = vmatprep.subr.mxu0 0.0
    %1212 = vmatpush1.msra.mxu0 0.0
    %1213 = vmatprep.subr.mxu0 0.0
    %1214 = vmatpush1.msra.mxu0 0.0
    %1215 = vmatprep.subr.mxu0 0.0
    %1216 = vmatpush1.msra.mxu0 0.0
    %1217 = vmatprep.subr.mxu0 0.0
    %1218 = vmatpush1.msra.mxu0 0.0
    %1219 = vmatprep.subr.mxu0 0.0
    %1220 = vmatpush1.msra.mxu0 0.0
    %1221 = vmatprep.mubr.f32.mxu0 0.0
    %1222 = vmatmul.mubr.f32.gmra.mrb[0].mxu0 %v1155
    %v1223 = vpop.f32.mrb[0].mxu0
    %v1224 = vadd.f32 0.0, %v1223
    %v1225 = vpop.f32.mrb[0].mxu0
    %1226 = vdwg.mxu0
    %v1228 = vrot.slane %v1151, 6
    %1229 = vrot.lane.b32.xlu0 %v1228, 32
    %v1230 = vpop.permute.xlu0 %1229
    %v1231 = vsel %vm128, %v1230, 0
    %1233 = vmatprep.subr.mxu0 0.0
    %1234 = vmatpush1.msra.mxu0 %v218
    %1235 = vmatprep.subr.mxu0 0.0
    %1236 = vmatpush1.msra.mxu0 %v219
    %1237 = vmatprep.subr.mxu0 0.0
    %1238 = vmatpush1.msra.mxu0 %v220
    %1239 = vmatprep.subr.mxu0 0.0
    %1240 = vmatpush1.msra.mxu0 %v221
    %1241 = vmatprep.subr.mxu0 0.0
    %1242 = vmatpush1.msra.mxu0 0.0
    %1243 = vmatprep.subr.mxu0 0.0
    %1244 = vmatpush1.msra.mxu0 0.0
    %1245 = vmatprep.subr.mxu0 0.0
    %1246 = vmatpush1.msra.mxu0 0.0
    %1247 = vmatprep.subr.mxu0 0.0
    %1248 = vmatpush1.msra.mxu0 0.0
    %1249 = vmatprep.subr.mxu0 0.0
    %1250 = vmatpush1.msra.mxu0 0.0
    %1251 = vmatprep.subr.mxu0 0.0
    %1252 = vmatpush1.msra.mxu0 0.0
    %1253 = vmatprep.subr.mxu0 0.0
    %1254 = vmatpush1.msra.mxu0 0.0
    %1255 = vmatprep.subr.mxu0 0.0
    %1256 = vmatpush1.msra.mxu0 0.0
    %1257 = vmatprep.subr.mxu0 0.0
    %1258 = vmatpush1.msra.mxu0 0.0
    %1259 = vmatprep.subr.mxu0 0.0
    %1260 = vmatpush1.msra.mxu0 0.0
    %1261 = vmatprep.subr.mxu0 0.0
    %1262 = vmatpush1.msra.mxu0 0.0
    %1263 = vmatprep.subr.mxu0 0.0
    %1264 = vmatpush1.msra.mxu0 0.0
    %1265 = vmatprep.subr.mxu0 0.0
    %1266 = vmatpush1.msra.mxu0 0.0
    %1267 = vmatprep.subr.mxu0 0.0
    %1268 = vmatpush1.msra.mxu0 0.0
    %1269 = vmatprep.subr.mxu0 0.0
    %1270 = vmatpush1.msra.mxu0 0.0
    %1271 = vmatprep.subr.mxu0 0.0
    %1272 = vmatpush1.msra.mxu0 0.0
    %1273 = vmatprep.subr.mxu0 0.0
    %1274 = vmatpush1.msra.mxu0 0.0
    %1275 = vmatprep.subr.mxu0 0.0
    %1276 = vmatpush1.msra.mxu0 0.0
    %1277 = vmatprep.subr.mxu0 0.0
    %1278 = vmatpush1.msra.mxu0 0.0
    %1279 = vmatprep.subr.mxu0 0.0
    %1280 = vmatpush1.msra.mxu0 0.0
    %1281 = vmatprep.subr.mxu0 0.0
    %1282 = vmatpush1.msra.mxu0 0.0
    %1283 = vmatprep.subr.mxu0 0.0
    %1284 = vmatpush1.msra.mxu0 0.0
    %1285 = vmatprep.subr.mxu0 0.0
    %1286 = vmatpush1.msra.mxu0 0.0
    %1287 = vmatprep.subr.mxu0 0.0
    %1288 = vmatpush1.msra.mxu0 0.0
    %1289 = vmatprep.subr.mxu0 0.0
    %1290 = vmatpush1.msra.mxu0 0.0
    %1291 = vmatprep.subr.mxu0 0.0
    %1292 = vmatpush1.msra.mxu0 0.0
    %1293 = vmatprep.subr.mxu0 0.0
    %1294 = vmatpush1.msra.mxu0 0.0
    %1295 = vmatprep.subr.mxu0 0.0
    %1296 = vmatpush1.msra.mxu0 0.0
    %1297 = vmatprep.mubr.f32.mxu0 0.0
    %1298 = vmatmul.mubr.f32.gmra.mrb[0].mxu0 %v1231
    %v1299 = vpop.f32.mrb[0].mxu0
    %v1300 = vadd.f32 %v1224, %v1299
    %v1301 = vpop.f32.mrb[0].mxu0
    %1302 = vdwg.mxu0
    %v1303 = vadd.f32 %v1300, %v470
    %v1304 = vxor.u32 %v1303, 2147483648
    %v1305 = vmul.f32 %v1304, 1.442695
    %v1306 = vpow.pop %v1305
    %v1307 = vadd.f32 %v1306, 1.0
    %v1308 = vrcp.pop %v1307
    %v1309 = vmul.f32 1.0, %v1308
    %v1310 = vtanh.pop %v1303
    %v1311 = vmul.f32 %v1309, %v1044
    %1313 = vrot.lane.b32.xlu0 %v1310, 64
    %v1314 = vpop.permute.xlu0 %1313
    %v1316 = vmul.f32 %v1309, %v1314
    %1318 = vrot.lane.b32.xlu0 %v1316, 32
    %v1319 = vpop.permute.xlu0 %1318
    %v1321 = vadd.f32 %v1311, %v1319
    %v1322 = vtanh.pop %v1321
    %1324 = vrot.lane.b32.xlu0 %v1322, 64
    %v1325 = vpop.permute.xlu0 %1324
    %v1327 = vmul.f32 %v1309, %v1325
    %1328 = vmatprep.subr.mxu0 0.0
    %1329 = vmatpush1.msra.mxu0 %v210
    %1330 = vmatprep.subr.mxu0 0.0
    %1331 = vmatpush1.msra.mxu0 %v211
    %1332 = vmatprep.subr.mxu0 0.0
    %1333 = vmatpush1.msra.mxu0 %v212
    %1334 = vmatprep.subr.mxu0 0.0
    %1335 = vmatpush1.msra.mxu0 %v213
    %1336 = vmatprep.subr.mxu0 0.0
    %1337 = vmatpush1.msra.mxu0 0.0
    %1338 = vmatprep.subr.mxu0 0.0
    %1339 = vmatpush1.msra.mxu0 0.0
    %1340 = vmatprep.subr.mxu0 0.0
    %1341 = vmatpush1.msra.mxu0 0.0
    %1342 = vmatprep.subr.mxu0 0.0
    %1343 = vmatpush1.msra.mxu0 0.0
    %1344 = vmatprep.subr.mxu0 0.0
    %1345 = vmatpush1.msra.mxu0 0.0
    %1346 = vmatprep.subr.mxu0 0.0
    %1347 = vmatpush1.msra.mxu0 0.0
    %1348 = vmatprep.subr.mxu0 0.0
    %1349 = vmatpush1.msra.mxu0 0.0
    %1350 = vmatprep.subr.mxu0 0.0
    %1351 = vmatpush1.msra.mxu0 0.0
    %1352 = vmatprep.subr.mxu0 0.0
    %1353 = vmatpush1.msra.mxu0 0.0
    %1354 = vmatprep.subr.mxu0 0.0
    %1355 = vmatpush1.msra.mxu0 0.0
    %1356 = vmatprep.subr.mxu0 0.0
    %1357 = vmatpush1.msra.mxu0 0.0
    %1358 = vmatprep.subr.mxu0 0.0
    %1359 = vmatpush1.msra.mxu0 0.0
    %1360 = vmatprep.subr.mxu0 0.0
    %1361 = vmatpush1.msra.mxu0 0.0
    %1362 = vmatprep.subr.mxu0 0.0
    %1363 = vmatpush1.msra.mxu0 0.0
    %1364 = vmatprep.subr.mxu0 0.0
    %1365 = vmatpush1.msra.mxu0 0.0
    %1366 = vmatprep.subr.mxu0 0.0
    %1367 = vmatpush1.msra.mxu0 0.0
    %1368 = vmatprep.subr.mxu0 0.0
    %1369 = vmatpush1.msra.mxu0 0.0
    %1370 = vmatprep.subr.mxu0 0.0
    %1371 = vmatpush1.msra.mxu0 0.0
    %1372 = vmatprep.subr.mxu0 0.0
    %1373 = vmatpush1.msra.mxu0 0.0
    %1374 = vmatprep.subr.mxu0 0.0
    %1375 = vmatpush1.msra.mxu0 0.0
    %1376 = vmatprep.subr.mxu0 0.0
    %1377 = vmatpush1.msra.mxu0 0.0
    %1378 = vmatprep.subr.mxu0 0.0
    %1379 = vmatpush1.msra.mxu0 0.0
    %1380 = vmatprep.subr.mxu0 0.0
    %1381 = vmatpush1.msra.mxu0 0.0
    %1382 = vmatprep.subr.mxu0 0.0
    %1383 = vmatpush1.msra.mxu0 0.0
    %1384 = vmatprep.subr.mxu0 0.0
    %1385 = vmatpush1.msra.mxu0 0.0
    %1386 = vmatprep.subr.mxu0 0.0
    %1387 = vmatpush1.msra.mxu0 0.0
    %1388 = vmatprep.subr.mxu0 0.0
    %1389 = vmatpush1.msra.mxu0 0.0
    %1390 = vmatprep.subr.mxu0 0.0
    %1391 = vmatpush1.msra.mxu0 0.0
    %1392 = vmatprep.mubr.f32.mxu0 0.0
    %1393 = vmatmul.mubr.f32.gmra.mrb[0].mxu0 %v1231
    %v1394 = vpop.f32.mrb[0].mxu0
    %v1395 = vadd.f32 0.0, %v1394
    %v1396 = vpop.f32.mrb[0].mxu0
    %1397 = vdwg.mxu0
    %v1398 = vadd.f32 %v207, %v1395
    %v1399 = vxor.u32 %v1398, 2147483648
    %v1400 = vmul.f32 %v1399, 1.442695
    %v1401 = vpow.pop %v1400
    %v1402 = vadd.f32 %v1401, 1.0
    %v1403 = vrcp.pop %v1402
    %v1404 = vmul.f32 1.0, %v1403
    %v1405 = vtanh.pop %v1398
    %v1407 = vrot.slane %v1145, 6
    %v1409 = vmul.f32 %v1404, %v1407
    %1411 = vrot.lane.b32.xlu0 %v1405, 64
    %v1412 = vpop.permute.xlu0 %1411
    %v1414 = vmul.f32 %v1404, %v1412
    %1416 = vrot.lane.b32.xlu0 %v1414, 32
    %v1417 = vpop.permute.xlu0 %1416
    %v1419 = vadd.f32 %v1409, %v1417
    %v1420 = vtanh.pop %v1419
    %1422 = vrot.lane.b32.xlu0 %v1420, 64
    %v1423 = vpop.permute.xlu0 %1422
    %v1425 = vmul.f32 %v1404, %v1423
    %1427 = vrot.lane.b32.xlu0 %v1327, 32
    %v1428 = vpop.permute.xlu0 %1427
    %v1429 = vsel %vm128, %v1428, 0
    %1431 = vmatprep.subr.mxu0 0.0
    %1432 = vmatpush1.msra.mxu0 %v214
    %1433 = vmatprep.subr.mxu0 0.0
    %1434 = vmatpush1.msra.mxu0 %v215
    %1435 = vmatprep.subr.mxu0 0.0
    %1436 = vmatpush1.msra.mxu0 %v216
    %1437 = vmatprep.subr.mxu0 0.0
    %1438 = vmatpush1.msra.mxu0 %v217
    %1439 = vmatprep.subr.mxu0 0.0
    %1440 = vmatpush1.msra.mxu0 0.0
    %1441 = vmatprep.subr.mxu0 0.0
    %1442 = vmatpush1.msra.mxu0 0.0
    %1443 = vmatprep.subr.mxu0 0.0
    %1444 = vmatpush1.msra.mxu0 0.0
    %1445 = vmatprep.subr.mxu0 0.0
    %1446 = vmatpush1.msra.mxu0 0.0
    %1447 = vmatprep.subr.mxu0 0.0
    %1448 = vmatpush1.msra.mxu0 0.0
    %1449 = vmatprep.subr.mxu0 0.0
    %1450 = vmatpush1.msra.mxu0 0.0
    %1451 = vmatprep.subr.mxu0 0.0
    %1452 = vmatpush1.msra.mxu0 0.0
    %1453 = vmatprep.subr.mxu0 0.0
    %1454 = vmatpush1.msra.mxu0 0.0
    %1455 = vmatprep.subr.mxu0 0.0
    %1456 = vmatpush1.msra.mxu0 0.0
    %1457 = vmatprep.subr.mxu0 0.0
    %1458 = vmatpush1.msra.mxu0 0.0
    %1459 = vmatprep.subr.mxu0 0.0
    %1460 = vmatpush1.msra.mxu0 0.0
    %1461 = vmatprep.subr.mxu0 0.0
    %1462 = vmatpush1.msra.mxu0 0.0
    %1463 = vmatprep.subr.mxu0 0.0
    %1464 = vmatpush1.msra.mxu0 0.0
    %1465 = vmatprep.subr.mxu0 0.0
    %1466 = vmatpush1.msra.mxu0 0.0
    %1467 = vmatprep.subr.mxu0 0.0
    %1468 = vmatpush1.msra.mxu0 0.0
    %1469 = vmatprep.subr.mxu0 0.0
    %1470 = vmatpush1.msra.mxu0 0.0
    %1471 = vmatprep.subr.mxu0 0.0
    %1472 = vmatpush1.msra.mxu0 0.0
    %1473 = vmatprep.subr.mxu0 0.0
    %1474 = vmatpush1.msra.mxu0 0.0
    %1475 = vmatprep.subr.mxu0 0.0
    %1476 = vmatpush1.msra.mxu0 0.0
    %1477 = vmatprep.subr.mxu0 0.0
    %1478 = vmatpush1.msra.mxu0 0.0
    %1479 = vmatprep.subr.mxu0 0.0
    %1480 = vmatpush1.msra.mxu0 0.0
    %1481 = vmatprep.subr.mxu0 0.0
    %1482 = vmatpush1.msra.mxu0 0.0
    %1483 = vmatprep.subr.mxu0 0.0
    %1484 = vmatpush1.msra.mxu0 0.0
    %1485 = vmatprep.subr.mxu0 0.0
    %1486 = vmatpush1.msra.mxu0 0.0
    %1487 = vmatprep.subr.mxu0 0.0
    %1488 = vmatpush1.msra.mxu0 0.0
    %1489 = vmatprep.subr.mxu0 0.0
    %1490 = vmatpush1.msra.mxu0 0.0
    %1491 = vmatprep.subr.mxu0 0.0
    %1492 = vmatpush1.msra.mxu0 0.0
    %1493 = vmatprep.subr.mxu0 0.0
    %1494 = vmatpush1.msra.mxu0 0.0
    %1495 = vmatprep.mubr.f32.mxu0 0.0
    %1496 = vmatmul.mubr.f32.gmra.mrb[0].mxu0 %v1429
    %v1497 = vpop.f32.mrb[0].mxu0
    %v1498 = vadd.f32 0.0, %v1497
    %v1499 = vpop.f32.mrb[0].mxu0
    %1500 = vdwg.mxu0
    %1502 = vrot.lane.b32.xlu0 %v1425, 32
    %v1503 = vpop.permute.xlu0 %1502
    %v1504 = vsel %vm128, %v1503, 0
    %1506 = vmatprep.subr.mxu0 0.0
    %1507 = vmatpush1.msra.mxu0 %v218
    %1508 = vmatprep.subr.mxu0 0.0
    %1509 = vmatpush1.msra.mxu0 %v219
    %1510 = vmatprep.subr.mxu0 0.0
    %1511 = vmatpush1.msra.mxu0 %v220
    %1512 = vmatprep.subr.mxu0 0.0
    %1513 = vmatpush1.msra.mxu0 %v221
    %1514 = vmatprep.subr.mxu0 0.0
    %1515 = vmatpush1.msra.mxu0 0.0
    %1516 = vmatprep.subr.mxu0 0.0
    %1517 = vmatpush1.msra.mxu0 0.0
    %1518 = vmatprep.subr.mxu0 0.0
    %1519 = vmatpush1.msra.mxu0 0.0
    %1520 = vmatprep.subr.mxu0 0.0
    %1521 = vmatpush1.msra.mxu0 0.0
    %1522 = vmatprep.subr.mxu0 0.0
    %1523 = vmatpush1.msra.mxu0 0.0
    %1524 = vmatprep.subr.mxu0 0.0
    %1525 = vmatpush1.msra.mxu0 0.0
    %1526 = vmatprep.subr.mxu0 0.0
    %1527 = vmatpush1.msra.mxu0 0.0
    %1528 = vmatprep.subr.mxu0 0.0
    %1529 = vmatpush1.msra.mxu0 0.0
    %1530 = vmatprep.subr.mxu0 0.0
    %1531 = vmatpush1.msra.mxu0 0.0
    %1532 = vmatprep.subr.mxu0 0.0
    %1533 = vmatpush1.msra.mxu0 0.0
    %1534 = vmatprep.subr.mxu0 0.0
    %1535 = vmatpush1.msra.mxu0 0.0
    %1536 = vmatprep.subr.mxu0 0.0
    %1537 = vmatpush1.msra.mxu0 0.0
    %1538 = vmatprep.subr.mxu0 0.0
    %1539 = vmatpush1.msra.mxu0 0.0
    %1540 = vmatprep.subr.mxu0 0.0
    %1541 = vmatpush1.msra.mxu0 0.0
    %1542 = vmatprep.subr.mxu0 0.0
    %1543 = vmatpush1.msra.mxu0 0.0
    %1544 = vmatprep.subr.mxu0 0.0
    %1545 = vmatpush1.msra.mxu0 0.0
    %1546 = vmatprep.subr.mxu0 0.0
    %1547 = vmatpush1.msra.mxu0 0.0
    %1548 = vmatprep.subr.mxu0 0.0
    %1549 = vmatpush1.msra.mxu0 0.0
    %1550 = vmatprep.subr.mxu0 0.0
    %1551 = vmatpush1.msra.mxu0 0.0
    %1552 = vmatprep.subr.mxu0 0.0
    %1553 = vmatpush1.msra.mxu0 0.0
    %1554 = vmatprep.subr.mxu0 0.0
    %1555 = vmatpush1.msra.mxu0 0.0
    %1556 = vmatprep.subr.mxu0 0.0
    %1557 = vmatpush1.msra.mxu0 0.0
    %1558 = vmatprep.subr.mxu0 0.0
    %1559 = vmatpush1.msra.mxu0 0.0
    %1560 = vmatprep.subr.mxu0 0.0
    %1561 = vmatpush1.msra.mxu0 0.0
    %1562 = vmatprep.subr.mxu0 0.0
    %1563 = vmatpush1.msra.mxu0 0.0
    %1564 = vmatprep.subr.mxu0 0.0
    %1565 = vmatpush1.msra.mxu0 0.0
    %1566 = vmatprep.subr.mxu0 0.0
    %1567 = vmatpush1.msra.mxu0 0.0
    %1568 = vmatprep.subr.mxu0 0.0
    %1569 = vmatpush1.msra.mxu0 0.0
    %1570 = vmatprep.mubr.f32.mxu0 0.0
    %1571 = vmatmul.mubr.f32.gmra.mrb[0].mxu0 %v1504
    %v1572 = vpop.f32.mrb[0].mxu0
    %v1573 = vadd.f32 %v1498, %v1572
    %v1574 = vpop.f32.mrb[0].mxu0
    %1575 = vdwg.mxu0
    %v1576 = vadd.f32 %v1573, %v470
    %v1577 = vxor.u32 %v1576, 2147483648
    %v1578 = vmul.f32 %v1577, 1.442695
    %v1579 = vpow.pop %v1578
    %v1580 = vadd.f32 %v1579, 1.0
    %v1581 = vrcp.pop %v1580
    %v1582 = vmul.f32 1.0, %v1581
    %v1583 = vtanh.pop %v1576
    %v1584 = vmul.f32 %v1582, %v1321
    %1586 = vrot.lane.b32.xlu0 %v1583, 64
    %v1587 = vpop.permute.xlu0 %1586
    %v1589 = vmul.f32 %v1582, %v1587
    %1591 = vrot.lane.b32.xlu0 %v1589, 32
    %v1592 = vpop.permute.xlu0 %1591
    %v1594 = vadd.f32 %v1584, %v1592
    %v1595 = vtanh.pop %v1594
    %1597 = vrot.lane.b32.xlu0 %v1595, 64
    %v1598 = vpop.permute.xlu0 %1597
    %v1600 = vmul.f32 %v1582, %v1598
    %1601 = vmatprep.subr.mxu0 0.0
    %1602 = vmatpush1.msra.mxu0 %v210
    %1603 = vmatprep.subr.mxu0 0.0
    %1604 = vmatpush1.msra.mxu0 %v211
    %1605 = vmatprep.subr.mxu0 0.0
    %1606 = vmatpush1.msra.mxu0 %v212
    %1607 = vmatprep.subr.mxu0 0.0
    %1608 = vmatpush1.msra.mxu0 %v213
    %1609 = vmatprep.subr.mxu0 0.0
    %1610 = vmatpush1.msra.mxu0 0.0
    %1611 = vmatprep.subr.mxu0 0.0
    %1612 = vmatpush1.msra.mxu0 0.0
    %1613 = vmatprep.subr.mxu0 0.0
    %1614 = vmatpush1.msra.mxu0 0.0
    %1615 = vmatprep.subr.mxu0 0.0
    %1616 = vmatpush1.msra.mxu0 0.0
    %1617 = vmatprep.subr.mxu0 0.0
    %1618 = vmatpush1.msra.mxu0 0.0
    %1619 = vmatprep.subr.mxu0 0.0
    %1620 = vmatpush1.msra.mxu0 0.0
    %1621 = vmatprep.subr.mxu0 0.0
    %1622 = vmatpush1.msra.mxu0 0.0
    %1623 = vmatprep.subr.mxu0 0.0
    %1624 = vmatpush1.msra.mxu0 0.0
    %1625 = vmatprep.subr.mxu0 0.0
    %1626 = vmatpush1.msra.mxu0 0.0
    %1627 = vmatprep.subr.mxu0 0.0
    %1628 = vmatpush1.msra.mxu0 0.0
    %1629 = vmatprep.subr.mxu0 0.0
    %1630 = vmatpush1.msra.mxu0 0.0
    %1631 = vmatprep.subr.mxu0 0.0
    %1632 = vmatpush1.msra.mxu0 0.0
    %1633 = vmatprep.subr.mxu0 0.0
    %1634 = vmatpush1.msra.mxu0 0.0
    %1635 = vmatprep.subr.mxu0 0.0
    %1636 = vmatpush1.msra.mxu0 0.0
    %1637 = vmatprep.subr.mxu0 0.0
    %1638 = vmatpush1.msra.mxu0 0.0
    %1639 = vmatprep.subr.mxu0 0.0
    %1640 = vmatpush1.msra.mxu0 0.0
    %1641 = vmatprep.subr.mxu0 0.0
    %1642 = vmatpush1.msra.mxu0 0.0
    %1643 = vmatprep.subr.mxu0 0.0
    %1644 = vmatpush1.msra.mxu0 0.0
    %1645 = vmatprep.subr.mxu0 0.0
    %1646 = vmatpush1.msra.mxu0 0.0
    %1647 = vmatprep.subr.mxu0 0.0
    %1648 = vmatpush1.msra.mxu0 0.0
    %1649 = vmatprep.subr.mxu0 0.0
    %1650 = vmatpush1.msra.mxu0 0.0
    %1651 = vmatprep.subr.mxu0 0.0
    %1652 = vmatpush1.msra.mxu0 0.0
    %1653 = vmatprep.subr.mxu0 0.0
    %1654 = vmatpush1.msra.mxu0 0.0
    %1655 = vmatprep.subr.mxu0 0.0
    %1656 = vmatpush1.msra.mxu0 0.0
    %1657 = vmatprep.subr.mxu0 0.0
    %1658 = vmatpush1.msra.mxu0 0.0
    %1659 = vmatprep.subr.mxu0 0.0
    %1660 = vmatpush1.msra.mxu0 0.0
    %1661 = vmatprep.subr.mxu0 0.0
    %1662 = vmatpush1.msra.mxu0 0.0
    %1663 = vmatprep.subr.mxu0 0.0
    %1664 = vmatpush1.msra.mxu0 0.0
    %1665 = vmatprep.mubr.f32.mxu0 0.0
    %1666 = vmatmul.mubr.f32.gmra.mrb[0].mxu0 %v1504
    %v1667 = vpop.f32.mrb[0].mxu0
    %v1668 = vadd.f32 0.0, %v1667
    %v1669 = vpop.f32.mrb[0].mxu0
    %1670 = vdwg.mxu0
    %v1672 = vrot.slane %v1668, 6
    %v1674 = vadd.f32 %v207, %v1672
    %v1675 = vxor.u32 %v1674, 2147483648
    %v1676 = vmul.f32 %v1675, 1.442695
    %v1677 = vpow.pop %v1676
    %v1678 = vadd.f32 %v1677, 1.0
    %v1679 = vrcp.pop %v1678
    %v1680 = vmul.f32 1.0, %v1679
    %v1681 = vtanh.pop %v1674
    %v1683 = vrot.slane %v1419, 6
    %v1685 = vmul.f32 %v1680, %v1683
    %1687 = vrot.lane.b32.xlu0 %v1681, 64
    %v1688 = vpop.permute.xlu0 %1687
    %v1690 = vmul.f32 %v1680, %v1688
    %1692 = vrot.lane.b32.xlu0 %v1690, 32
    %v1693 = vpop.permute.xlu0 %1692
    %v1695 = vadd.f32 %v1685, %v1693
    %v1696 = vtanh.pop %v1695
    %1698 = vrot.lane.b32.xlu0 %v1696, 64
    %v1699 = vpop.permute.xlu0 %1698
    %v1701 = vmul.f32 %v1680, %v1699
    %1703 = vrot.lane.b32.xlu0 %v1600, 32
    %v1704 = vpop.permute.xlu0 %1703
    %v1705 = vsel %vm128, %v1704, 0
    %1707 = vmatprep.subr.mxu0 0.0
    %1708 = vmatpush1.msra.mxu0 %v214
    %1709 = vmatprep.subr.mxu0 0.0
    %1710 = vmatpush1.msra.mxu0 %v215
    %1711 = vmatprep.subr.mxu0 0.0
    %1712 = vmatpush1.msra.mxu0 %v216
    %1713 = vmatprep.subr.mxu0 0.0
    %1714 = vmatpush1.msra.mxu0 %v217
    %1715 = vmatprep.subr.mxu0 0.0
    %1716 = vmatpush1.msra.mxu0 0.0
    %1717 = vmatprep.subr.mxu0 0.0
    %1718 = vmatpush1.msra.mxu0 0.0
    %1719 = vmatprep.subr.mxu0 0.0
    %1720 = vmatpush1.msra.mxu0 0.0
    %1721 = vmatprep.subr.mxu0 0.0
    %1722 = vmatpush1.msra.mxu0 0.0
    %1723 = vmatprep.subr.mxu0 0.0
    %1724 = vmatpush1.msra.mxu0 0.0
    %1725 = vmatprep.subr.mxu0 0.0
    %1726 = vmatpush1.msra.mxu0 0.0
    %1727 = vmatprep.subr.mxu0 0.0
    %1728 = vmatpush1.msra.mxu0 0.0
    %1729 = vmatprep.subr.mxu0 0.0
    %1730 = vmatpush1.msra.mxu0 0.0
    %1731 = vmatprep.subr.mxu0 0.0
    %1732 = vmatpush1.msra.mxu0 0.0
    %1733 = vmatprep.subr.mxu0 0.0
    %1734 = vmatpush1.msra.mxu0 0.0
    %1735 = vmatprep.subr.mxu0 0.0
    %1736 = vmatpush1.msra.mxu0 0.0
    %1737 = vmatprep.subr.mxu0 0.0
    %1738 = vmatpush1.msra.mxu0 0.0
    %1739 = vmatprep.subr.mxu0 0.0
    %1740 = vmatpush1.msra.mxu0 0.0
    %1741 = vmatprep.subr.mxu0 0.0
    %1742 = vmatpush1.msra.mxu0 0.0
    %1743 = vmatprep.subr.mxu0 0.0
    %1744 = vmatpush1.msra.mxu0 0.0
    %1745 = vmatprep.subr.mxu0 0.0
    %1746 = vmatpush1.msra.mxu0 0.0
    %1747 = vmatprep.subr.mxu0 0.0
    %1748 = vmatpush1.msra.mxu0 0.0
    %1749 = vmatprep.subr.mxu0 0.0
    %1750 = vmatpush1.msra.mxu0 0.0
    %1751 = vmatprep.subr.mxu0 0.0
    %1752 = vmatpush1.msra.mxu0 0.0
    %1753 = vmatprep.subr.mxu0 0.0
    %1754 = vmatpush1.msra.mxu0 0.0
    %1755 = vmatprep.subr.mxu0 0.0
    %1756 = vmatpush1.msra.mxu0 0.0
    %1757 = vmatprep.subr.mxu0 0.0
    %1758 = vmatpush1.msra.mxu0 0.0
    %1759 = vmatprep.subr.mxu0 0.0
    %1760 = vmatpush1.msra.mxu0 0.0
    %1761 = vmatprep.subr.mxu0 0.0
    %1762 = vmatpush1.msra.mxu0 0.0
    %1763 = vmatprep.subr.mxu0 0.0
    %1764 = vmatpush1.msra.mxu0 0.0
    %1765 = vmatprep.subr.mxu0 0.0
    %1766 = vmatpush1.msra.mxu0 0.0
    %1767 = vmatprep.subr.mxu0 0.0
    %1768 = vmatpush1.msra.mxu0 0.0
    %1769 = vmatprep.subr.mxu0 0.0
    %1770 = vmatpush1.msra.mxu0 0.0
    %1771 = vmatprep.mubr.f32.mxu0 0.0
    %1772 = vmatmul.mubr.f32.gmra.mrb[0].mxu0 %v1705
    %v1773 = vpop.f32.mrb[0].mxu0
    %v1774 = vadd.f32 0.0, %v1773
    %v1775 = vpop.f32.mrb[0].mxu0
    %1776 = vdwg.mxu0
    %v1778 = vrot.slane %v1701, 2
    %1779 = vrot.lane.b32.xlu0 %v1778, 32
    %v1780 = vpop.permute.xlu0 %1779
    %v1781 = vsel %vm128, %v1780, 0
    %1783 = vmatprep.subr.mxu0 0.0
    %1784 = vmatpush1.msra.mxu0 %v218
    %1785 = vmatprep.subr.mxu0 0.0
    %1786 = vmatpush1.msra.mxu0 %v219
    %1787 = vmatprep.subr.mxu0 0.0
    %1788 = vmatpush1.msra.mxu0 %v220
    %1789 = vmatprep.subr.mxu0 0.0
    %1790 = vmatpush1.msra.mxu0 %v221
    %1791 = vmatprep.subr.mxu0 0.0
    %1792 = vmatpush1.msra.mxu0 0.0
    %1793 = vmatprep.subr.mxu0 0.0
    %1794 = vmatpush1.msra.mxu0 0.0
    %1795 = vmatprep.subr.mxu0 0.0
    %1796 = vmatpush1.msra.mxu0 0.0
    %1797 = vmatprep.subr.mxu0 0.0
    %1798 = vmatpush1.msra.mxu0 0.0
    %1799 = vmatprep.subr.mxu0 0.0
    %1800 = vmatpush1.msra.mxu0 0.0
    %1801 = vmatprep.subr.mxu0 0.0
    %1802 = vmatpush1.msra.mxu0 0.0
    %1803 = vmatprep.subr.mxu0 0.0
    %1804 = vmatpush1.msra.mxu0 0.0
    %1805 = vmatprep.subr.mxu0 0.0
    %1806 = vmatpush1.msra.mxu0 0.0
    %1807 = vmatprep.subr.mxu0 0.0
    %1808 = vmatpush1.msra.mxu0 0.0
    %1809 = vmatprep.subr.mxu0 0.0
    %1810 = vmatpush1.msra.mxu0 0.0
    %1811 = vmatprep.subr.mxu0 0.0
    %1812 = vmatpush1.msra.mxu0 0.0
    %1813 = vmatprep.subr.mxu0 0.0
    %1814 = vmatpush1.msra.mxu0 0.0
    %1815 = vmatprep.subr.mxu0 0.0
    %1816 = vmatpush1.msra.mxu0 0.0
    %1817 = vmatprep.subr.mxu0 0.0
    %1818 = vmatpush1.msra.mxu0 0.0
    %1819 = vmatprep.subr.mxu0 0.0
    %1820 = vmatpush1.msra.mxu0 0.0
    %1821 = vmatprep.subr.mxu0 0.0
    %1822 = vmatpush1.msra.mxu0 0.0
    %1823 = vmatprep.subr.mxu0 0.0
    %1824 = vmatpush1.msra.mxu0 0.0
    %1825 = vmatprep.subr.mxu0 0.0
    %1826 = vmatpush1.msra.mxu0 0.0
    %1827 = vmatprep.subr.mxu0 0.0
    %1828 = vmatpush1.msra.mxu0 0.0
    %1829 = vmatprep.subr.mxu0 0.0
    %1830 = vmatpush1.msra.mxu0 0.0
    %1831 = vmatprep.subr.mxu0 0.0
    %1832 = vmatpush1.msra.mxu0 0.0
    %1833 = vmatprep.subr.mxu0 0.0
    %1834 = vmatpush1.msra.mxu0 0.0
    %1835 = vmatprep.subr.mxu0 0.0
    %1836 = vmatpush1.msra.mxu0 0.0
    %1837 = vmatprep.subr.mxu0 0.0
    %1838 = vmatpush1.msra.mxu0 0.0
    %1839 = vmatprep.subr.mxu0 0.0
    %1840 = vmatpush1.msra.mxu0 0.0
    %1841 = vmatprep.subr.mxu0 0.0
    %1842 = vmatpush1.msra.mxu0 0.0
    %1843 = vmatprep.subr.mxu0 0.0
    %1844 = vmatpush1.msra.mxu0 0.0
    %1845 = vmatprep.subr.mxu0 0.0
    %1846 = vmatpush1.msra.mxu0 0.0
    %1847 = vmatprep.mubr.f32.mxu0 0.0
    %1848 = vmatmul.mubr.f32.gmra.mrb[0].mxu0 %v1781
    %v1849 = vpop.f32.mrb[0].mxu0
    %v1850 = vadd.f32 %v1774, %v1849
    %v1851 = vpop.f32.mrb[0].mxu0
    %1852 = vdwg.mxu0
    %v1853 = vadd.f32 %v1850, %v470
    %v1854 = vxor.u32 %v1853, 2147483648
    %v1855 = vmul.f32 %v1854, 1.442695
    %v1856 = vpow.pop %v1855
    %v1857 = vadd.f32 %v1856, 1.0
    %v1858 = vrcp.pop %v1857
    %v1859 = vmul.f32 1.0, %v1858
    %v1860 = vtanh.pop %v1853
    %v1861 = vmul.f32 %v1859, %v1594
    %1863 = vrot.lane.b32.xlu0 %v1860, 64
    %v1864 = vpop.permute.xlu0 %1863
    %v1866 = vmul.f32 %v1859, %v1864
    %1868 = vrot.lane.b32.xlu0 %v1866, 32
    %v1869 = vpop.permute.xlu0 %1868
    %v1871 = vadd.f32 %v1861, %v1869
    %v1872 = vtanh.pop %v1871
    %1874 = vrot.lane.b32.xlu0 %v1872, 64
    %v1875 = vpop.permute.xlu0 %1874
    %v1877 = vmul.f32 %v1859, %v1875
    %1878 = vmatprep.subr.mxu0 0.0
    %1879 = vmatpush1.msra.mxu0 %v210
    %1880 = vmatprep.subr.mxu0 0.0
    %1881 = vmatpush1.msra.mxu0 %v211
    %1882 = vmatprep.subr.mxu0 0.0
    %1883 = vmatpush1.msra.mxu0 %v212
    %1884 = vmatprep.subr.mxu0 0.0
    %1885 = vmatpush1.msra.mxu0 %v213
    %1886 = vmatprep.subr.mxu0 0.0
    %1887 = vmatpush1.msra.mxu0 0.0
    %1888 = vmatprep.subr.mxu0 0.0
    %1889 = vmatpush1.msra.mxu0 0.0
    %1890 = vmatprep.subr.mxu0 0.0
    %1891 = vmatpush1.msra.mxu0 0.0
    %1892 = vmatprep.subr.mxu0 0.0
    %1893 = vmatpush1.msra.mxu0 0.0
    %1894 = vmatprep.subr.mxu0 0.0
    %1895 = vmatpush1.msra.mxu0 0.0
    %1896 = vmatprep.subr.mxu0 0.0
    %1897 = vmatpush1.msra.mxu0 0.0
    %1898 = vmatprep.subr.mxu0 0.0
    %1899 = vmatpush1.msra.mxu0 0.0
    %1900 = vmatprep.subr.mxu0 0.0
    %1901 = vmatpush1.msra.mxu0 0.0
    %1902 = vmatprep.subr.mxu0 0.0
    %1903 = vmatpush1.msra.mxu0 0.0
    %1904 = vmatprep.subr.mxu0 0.0
    %1905 = vmatpush1.msra.mxu0 0.0
    %1906 = vmatprep.subr.mxu0 0.0
    %1907 = vmatpush1.msra.mxu0 0.0
    %1908 = vmatprep.subr.mxu0 0.0
    %1909 = vmatpush1.msra.mxu0 0.0
    %1910 = vmatprep.subr.mxu0 0.0
    %1911 = vmatpush1.msra.mxu0 0.0
    %1912 = vmatprep.subr.mxu0 0.0
    %1913 = vmatpush1.msra.mxu0 0.0
    %1914 = vmatprep.subr.mxu0 0.0
    %1915 = vmatpush1.msra.mxu0 0.0
    %1916 = vmatprep.subr.mxu0 0.0
    %1917 = vmatpush1.msra.mxu0 0.0
    %1918 = vmatprep.subr.mxu0 0.0
    %1919 = vmatpush1.msra.mxu0 0.0
    %1920 = vmatprep.subr.mxu0 0.0
    %1921 = vmatpush1.msra.mxu0 0.0
    %1922 = vmatprep.subr.mxu0 0.0
    %1923 = vmatpush1.msra.mxu0 0.0
    %1924 = vmatprep.subr.mxu0 0.0
    %1925 = vmatpush1.msra.mxu0 0.0
    %1926 = vmatprep.subr.mxu0 0.0
    %1927 = vmatpush1.msra.mxu0 0.0
    %1928 = vmatprep.subr.mxu0 0.0
    %1929 = vmatpush1.msra.mxu0 0.0
    %1930 = vmatprep.subr.mxu0 0.0
    %1931 = vmatpush1.msra.mxu0 0.0
    %1932 = vmatprep.subr.mxu0 0.0
    %1933 = vmatpush1.msra.mxu0 0.0
    %1934 = vmatprep.subr.mxu0 0.0
    %1935 = vmatpush1.msra.mxu0 0.0
    %1936 = vmatprep.subr.mxu0 0.0
    %1937 = vmatpush1.msra.mxu0 0.0
    %1938 = vmatprep.subr.mxu0 0.0
    %1939 = vmatpush1.msra.mxu0 0.0
    %1940 = vmatprep.subr.mxu0 0.0
    %1941 = vmatpush1.msra.mxu0 0.0
    %1942 = vmatprep.mubr.f32.mxu0 0.0
    %1943 = vmatmul.mubr.f32.gmra.mrb[0].mxu0 %v1781
    %v1944 = vpop.f32.mrb[0].mxu0
    %v1945 = vadd.f32 0.0, %v1944
    %v1946 = vpop.f32.mrb[0].mxu0
    %1947 = vdwg.mxu0
    %v1949 = vrot.slane %v1945, 4
    %v1951 = vadd.f32 %v207, %v1949
    %v1952 = vxor.u32 %v1951, 2147483648
    %v1953 = vmul.f32 %v1952, 1.442695
    %v1954 = vpow.pop %v1953
    %v1955 = vadd.f32 %v1954, 1.0
    %v1956 = vrcp.pop %v1955
    %v1957 = vmul.f32 1.0, %v1956
    %v1958 = vtanh.pop %v1951
    %v1960 = vrot.slane %v1695, 6
    %v1962 = vmul.f32 %v1957, %v1960
    %1964 = vrot.lane.b32.xlu0 %v1958, 64
    %v1965 = vpop.permute.xlu0 %1964
    %v1967 = vmul.f32 %v1957, %v1965
    %1969 = vrot.lane.b32.xlu0 %v1967, 32
    %v1970 = vpop.permute.xlu0 %1969
    %v1972 = vadd.f32 %v1962, %v1970
    %v1973 = vtanh.pop %v1972
    %1975 = vrot.lane.b32.xlu0 %v1973, 64
    %v1976 = vpop.permute.xlu0 %1975
    %v1978 = vmul.f32 %v1957, %v1976
    %1980 = vrot.lane.b32.xlu0 %v1877, 32
    %v1981 = vpop.permute.xlu0 %1980
    %v1982 = vsel %vm128, %v1981, 0
    %1984 = vmatprep.subr.mxu0 0.0
    %1985 = vmatpush1.msra.mxu0 %v214
    %1986 = vmatprep.subr.mxu0 0.0
    %1987 = vmatpush1.msra.mxu0 %v215
    %1988 = vmatprep.subr.mxu0 0.0
    %1989 = vmatpush1.msra.mxu0 %v216
    %1990 = vmatprep.subr.mxu0 0.0
    %1991 = vmatpush1.msra.mxu0 %v217
    %1992 = vmatprep.subr.mxu0 0.0
    %1993 = vmatpush1.msra.mxu0 0.0
    %1994 = vmatprep.subr.mxu0 0.0
    %1995 = vmatpush1.msra.mxu0 0.0
    %1996 = vmatprep.subr.mxu0 0.0
    %1997 = vmatpush1.msra.mxu0 0.0
    %1998 = vmatprep.subr.mxu0 0.0
    %1999 = vmatpush1.msra.mxu0 0.0
    %2000 = vmatprep.subr.mxu0 0.0
    %2001 = vmatpush1.msra.mxu0 0.0
    %2002 = vmatprep.subr.mxu0 0.0
    %2003 = vmatpush1.msra.mxu0 0.0
    %2004 = vmatprep.subr.mxu0 0.0
    %2005 = vmatpush1.msra.mxu0 0.0
    %2006 = vmatprep.subr.mxu0 0.0
    %2007 = vmatpush1.msra.mxu0 0.0
    %2008 = vmatprep.subr.mxu0 0.0
    %2009 = vmatpush1.msra.mxu0 0.0
    %2010 = vmatprep.subr.mxu0 0.0
    %2011 = vmatpush1.msra.mxu0 0.0
    %2012 = vmatprep.subr.mxu0 0.0
    %2013 = vmatpush1.msra.mxu0 0.0
    %2014 = vmatprep.subr.mxu0 0.0
    %2015 = vmatpush1.msra.mxu0 0.0
    %2016 = vmatprep.subr.mxu0 0.0
    %2017 = vmatpush1.msra.mxu0 0.0
    %2018 = vmatprep.subr.mxu0 0.0
    %2019 = vmatpush1.msra.mxu0 0.0
    %2020 = vmatprep.subr.mxu0 0.0
    %2021 = vmatpush1.msra.mxu0 0.0
    %2022 = vmatprep.subr.mxu0 0.0
    %2023 = vmatpush1.msra.mxu0 0.0
    %2024 = vmatprep.subr.mxu0 0.0
    %2025 = vmatpush1.msra.mxu0 0.0
    %2026 = vmatprep.subr.mxu0 0.0
    %2027 = vmatpush1.msra.mxu0 0.0
    %2028 = vmatprep.subr.mxu0 0.0
    %2029 = vmatpush1.msra.mxu0 0.0
    %2030 = vmatprep.subr.mxu0 0.0
    %2031 = vmatpush1.msra.mxu0 0.0
    %2032 = vmatprep.subr.mxu0 0.0
    %2033 = vmatpush1.msra.mxu0 0.0
    %2034 = vmatprep.subr.mxu0 0.0
    %2035 = vmatpush1.msra.mxu0 0.0
    %2036 = vmatprep.subr.mxu0 0.0
    %2037 = vmatpush1.msra.mxu0 0.0
    %2038 = vmatprep.subr.mxu0 0.0
    %2039 = vmatpush1.msra.mxu0 0.0
    %2040 = vmatprep.subr.mxu0 0.0
    %2041 = vmatpush1.msra.mxu0 0.0
    %2042 = vmatprep.subr.mxu0 0.0
    %2043 = vmatpush1.msra.mxu0 0.0
    %2044 = vmatprep.subr.mxu0 0.0
    %2045 = vmatpush1.msra.mxu0 0.0
    %2046 = vmatprep.subr.mxu0 0.0
    %2047 = vmatpush1.msra.mxu0 0.0
    %2048 = vmatprep.mubr.f32.mxu0 0.0
    %2049 = vmatmul.mubr.f32.gmra.mrb[0].mxu0 %v1982
    %v2050 = vpop.f32.mrb[0].mxu0
    %v2051 = vadd.f32 0.0, %v2050
    %v2052 = vpop.f32.mrb[0].mxu0
    %2053 = vdwg.mxu0
    %v2055 = vrot.slane %v1978, 4
    %2056 = vrot.lane.b32.xlu0 %v2055, 32
    %v2057 = vpop.permute.xlu0 %2056
    %v2058 = vsel %vm128, %v2057, 0
    %2060 = vmatprep.subr.mxu0 0.0
    %2061 = vmatpush1.msra.mxu0 %v218
    %2062 = vmatprep.subr.mxu0 0.0
    %2063 = vmatpush1.msra.mxu0 %v219
    %2064 = vmatprep.subr.mxu0 0.0
    %2065 = vmatpush1.msra.mxu0 %v220
    %2066 = vmatprep.subr.mxu0 0.0
    %2067 = vmatpush1.msra.mxu0 %v221
    %2068 = vmatprep.subr.mxu0 0.0
    %2069 = vmatpush1.msra.mxu0 0.0
    %2070 = vmatprep.subr.mxu0 0.0
    %2071 = vmatpush1.msra.mxu0 0.0
    %2072 = vmatprep.subr.mxu0 0.0
    %2073 = vmatpush1.msra.mxu0 0.0
    %2074 = vmatprep.subr.mxu0 0.0
    %2075 = vmatpush1.msra.mxu0 0.0
    %2076 = vmatprep.subr.mxu0 0.0
    %2077 = vmatpush1.msra.mxu0 0.0
    %2078 = vmatprep.subr.mxu0 0.0
    %2079 = vmatpush1.msra.mxu0 0.0
    %2080 = vmatprep.subr.mxu0 0.0
    %2081 = vmatpush1.msra.mxu0 0.0
    %2082 = vmatprep.subr.mxu0 0.0
    %2083 = vmatpush1.msra.mxu0 0.0
    %2084 = vmatprep.subr.mxu0 0.0
    %2085 = vmatpush1.msra.mxu0 0.0
    %2086 = vmatprep.subr.mxu0 0.0
    %2087 = vmatpush1.msra.mxu0 0.0
    %2088 = vmatprep.subr.mxu0 0.0
    %2089 = vmatpush1.msra.mxu0 0.0
    %2090 = vmatprep.subr.mxu0 0.0
    %2091 = vmatpush1.msra.mxu0 0.0
    %2092 = vmatprep.subr.mxu0 0.0
    %2093 = vmatpush1.msra.mxu0 0.0
    %2094 = vmatprep.subr.mxu0 0.0
    %2095 = vmatpush1.msra.mxu0 0.0
    %2096 = vmatprep.subr.mxu0 0.0
    %2097 = vmatpush1.msra.mxu0 0.0
    %2098 = vmatprep.subr.mxu0 0.0
    %2099 = vmatpush1.msra.mxu0 0.0
    %2100 = vmatprep.subr.mxu0 0.0
    %2101 = vmatpush1.msra.mxu0 0.0
    %2102 = vmatprep.subr.mxu0 0.0
    %2103 = vmatpush1.msra.mxu0 0.0
    %2104 = vmatprep.subr.mxu0 0.0
    %2105 = vmatpush1.msra.mxu0 0.0
    %2106 = vmatprep.subr.mxu0 0.0
    %2107 = vmatpush1.msra.mxu0 0.0
    %2108 = vmatprep.subr.mxu0 0.0
    %2109 = vmatpush1.msra.mxu0 0.0
    %2110 = vmatprep.subr.mxu0 0.0
    %2111 = vmatpush1.msra.mxu0 0.0
    %2112 = vmatprep.subr.mxu0 0.0
    %2113 = vmatpush1.msra.mxu0 0.0
    %2114 = vmatprep.subr.mxu0 0.0
    %2115 = vmatpush1.msra.mxu0 0.0
    %2116 = vmatprep.subr.mxu0 0.0
    %2117 = vmatpush1.msra.mxu0 0.0
    %2118 = vmatprep.subr.mxu0 0.0
    %2119 = vmatpush1.msra.mxu0 0.0
    %2120 = vmatprep.subr.mxu0 0.0
    %2121 = vmatpush1.msra.mxu0 0.0
    %2122 = vmatprep.subr.mxu0 0.0
    %2123 = vmatpush1.msra.mxu0 0.0
    %2124 = vmatprep.mubr.f32.mxu0 0.0
    %2125 = vmatmul.mubr.f32.gmra.mrb[0].mxu0 %v2058
    %v2126 = vpop.f32.mrb[0].mxu0
    %v2127 = vadd.f32 %v2051, %v2126
    %v2128 = vpop.f32.mrb[0].mxu0
    %2129 = vdwg.mxu0
    %v2130 = vadd.f32 %v2127, %v470
    %v2131 = vxor.u32 %v2130, 2147483648
    %v2132 = vmul.f32 %v2131, 1.442695
    %v2133 = vpow.pop %v2132
    %v2134 = vadd.f32 %v2133, 1.0
    %v2135 = vrcp.pop %v2134
    %v2136 = vmul.f32 1.0, %v2135
    %v2137 = vtanh.pop %v2130
    %v2138 = vmul.f32 %v2136, %v1871
    %2140 = vrot.lane.b32.xlu0 %v2137, 64
    %v2141 = vpop.permute.xlu0 %2140
    %v2143 = vmul.f32 %v2136, %v2141
    %2145 = vrot.lane.b32.xlu0 %v2143, 32
    %v2146 = vpop.permute.xlu0 %2145
    %v2148 = vadd.f32 %v2138, %v2146
    %v2149 = vtanh.pop %v2148
    %2151 = vrot.lane.b32.xlu0 %v2149, 64
    %v2152 = vpop.permute.xlu0 %2151
    %v2154 = vmul.f32 %v2136, %v2152
    %2155 = vmatprep.subr.mxu0 0.0
    %2156 = vmatpush1.msra.mxu0 %v210
    %2157 = vmatprep.subr.mxu0 0.0
    %2158 = vmatpush1.msra.mxu0 %v211
    %2159 = vmatprep.subr.mxu0 0.0
    %2160 = vmatpush1.msra.mxu0 %v212
    %2161 = vmatprep.subr.mxu0 0.0
    %2162 = vmatpush1.msra.mxu0 %v213
    %2163 = vmatprep.subr.mxu0 0.0
    %2164 = vmatpush1.msra.mxu0 0.0
    %2165 = vmatprep.subr.mxu0 0.0
    %2166 = vmatpush1.msra.mxu0 0.0
    %2167 = vmatprep.subr.mxu0 0.0
    %2168 = vmatpush1.msra.mxu0 0.0
    %2169 = vmatprep.subr.mxu0 0.0
    %2170 = vmatpush1.msra.mxu0 0.0
    %2171 = vmatprep.subr.mxu0 0.0
    %2172 = vmatpush1.msra.mxu0 0.0
    %2173 = vmatprep.subr.mxu0 0.0
    %2174 = vmatpush1.msra.mxu0 0.0
    %2175 = vmatprep.subr.mxu0 0.0
    %2176 = vmatpush1.msra.mxu0 0.0
    %2177 = vmatprep.subr.mxu0 0.0
    %2178 = vmatpush1.msra.mxu0 0.0
    %2179 = vmatprep.subr.mxu0 0.0
    %2180 = vmatpush1.msra.mxu0 0.0
    %2181 = vmatprep.subr.mxu0 0.0
    %2182 = vmatpush1.msra.mxu0 0.0
    %2183 = vmatprep.subr.mxu0 0.0
    %2184 = vmatpush1.msra.mxu0 0.0
    %2185 = vmatprep.subr.mxu0 0.0
    %2186 = vmatpush1.msra.mxu0 0.0
    %2187 = vmatprep.subr.mxu0 0.0
    %2188 = vmatpush1.msra.mxu0 0.0
    %2189 = vmatprep.subr.mxu0 0.0
    %2190 = vmatpush1.msra.mxu0 0.0
    %2191 = vmatprep.subr.mxu0 0.0
    %2192 = vmatpush1.msra.mxu0 0.0
    %2193 = vmatprep.subr.mxu0 0.0
    %2194 = vmatpush1.msra.mxu0 0.0
    %2195 = vmatprep.subr.mxu0 0.0
    %2196 = vmatpush1.msra.mxu0 0.0
    %2197 = vmatprep.subr.mxu0 0.0
    %2198 = vmatpush1.msra.mxu0 0.0
    %2199 = vmatprep.subr.mxu0 0.0
    %2200 = vmatpush1.msra.mxu0 0.0
    %2201 = vmatprep.subr.mxu0 0.0
    %2202 = vmatpush1.msra.mxu0 0.0
    %2203 = vmatprep.subr.mxu0 0.0
    %2204 = vmatpush1.msra.mxu0 0.0
    %2205 = vmatprep.subr.mxu0 0.0
    %2206 = vmatpush1.msra.mxu0 0.0
    %2207 = vmatprep.subr.mxu0 0.0
    %2208 = vmatpush1.msra.mxu0 0.0
    %2209 = vmatprep.subr.mxu0 0.0
    %2210 = vmatpush1.msra.mxu0 0.0
    %2211 = vmatprep.subr.mxu0 0.0
    %2212 = vmatpush1.msra.mxu0 0.0
    %2213 = vmatprep.subr.mxu0 0.0
    %2214 = vmatpush1.msra.mxu0 0.0
    %2215 = vmatprep.subr.mxu0 0.0
    %2216 = vmatpush1.msra.mxu0 0.0
    %2217 = vmatprep.subr.mxu0 0.0
    %2218 = vmatpush1.msra.mxu0 0.0
    %2219 = vmatprep.mubr.f32.mxu0 0.0
    %2220 = vmatmul.mubr.f32.gmra.mrb[0].mxu0 %v2058
    %v2221 = vpop.f32.mrb[0].mxu0
    %v2222 = vadd.f32 0.0, %v2221
    %v2223 = vpop.f32.mrb[0].mxu0
    %2224 = vdwg.mxu0
    %v2226 = vrot.slane %v2222, 2
    %v2228 = vadd.f32 %v207, %v2226
    %v2229 = vxor.u32 %v2228, 2147483648
    %v2230 = vmul.f32 %v2229, 1.442695
    %v2231 = vpow.pop %v2230
    %v2232 = vadd.f32 %v2231, 1.0
    %v2233 = vrcp.pop %v2232
    %v2234 = vmul.f32 1.0, %v2233
    %v2235 = vtanh.pop %v2228
    %v2237 = vrot.slane %v1972, 6
    %v2239 = vmul.f32 %v2234, %v2237
    %2241 = vrot.lane.b32.xlu0 %v2235, 64
    %v2242 = vpop.permute.xlu0 %2241
    %v2244 = vmul.f32 %v2234, %v2242
    %2246 = vrot.lane.b32.xlu0 %v2244, 32
    %v2247 = vpop.permute.xlu0 %2246
    %v2249 = vadd.f32 %v2239, %v2247
    %v2250 = vtanh.pop %v2249
    %2252 = vrot.lane.b32.xlu0 %v2250, 64
    %v2253 = vpop.permute.xlu0 %2252
    %v2255 = vmul.f32 %v2234, %v2253
    %2257 = vrot.lane.b32.xlu0 %v2154, 32
    %v2258 = vpop.permute.xlu0 %2257
    %v2259 = vsel %vm128, %v2258, 0
    %2261 = vmatprep.subr.mxu0 0.0
    %2262 = vmatpush1.msra.mxu0 %v214
    %2263 = vmatprep.subr.mxu0 0.0
    %2264 = vmatpush1.msra.mxu0 %v215
    %2265 = vmatprep.subr.mxu0 0.0
    %2266 = vmatpush1.msra.mxu0 %v216
    %2267 = vmatprep.subr.mxu0 0.0
    %2268 = vmatpush1.msra.mxu0 %v217
    %2269 = vmatprep.subr.mxu0 0.0
    %2270 = vmatpush1.msra.mxu0 0.0
    %2271 = vmatprep.subr.mxu0 0.0
    %2272 = vmatpush1.msra.mxu0 0.0
    %2273 = vmatprep.subr.mxu0 0.0
    %2274 = vmatpush1.msra.mxu0 0.0
    %2275 = vmatprep.subr.mxu0 0.0
    %2276 = vmatpush1.msra.mxu0 0.0
    %2277 = vmatprep.subr.mxu0 0.0
    %2278 = vmatpush1.msra.mxu0 0.0
    %2279 = vmatprep.subr.mxu0 0.0
    %2280 = vmatpush1.msra.mxu0 0.0
    %2281 = vmatprep.subr.mxu0 0.0
    %2282 = vmatpush1.msra.mxu0 0.0
    %2283 = vmatprep.subr.mxu0 0.0
    %2284 = vmatpush1.msra.mxu0 0.0
    %2285 = vmatprep.subr.mxu0 0.0
    %2286 = vmatpush1.msra.mxu0 0.0
    %2287 = vmatprep.subr.mxu0 0.0
    %2288 = vmatpush1.msra.mxu0 0.0
    %2289 = vmatprep.subr.mxu0 0.0
    %2290 = vmatpush1.msra.mxu0 0.0
    %2291 = vmatprep.subr.mxu0 0.0
    %2292 = vmatpush1.msra.mxu0 0.0
    %2293 = vmatprep.subr.mxu0 0.0
    %2294 = vmatpush1.msra.mxu0 0.0
    %2295 = vmatprep.subr.mxu0 0.0
    %2296 = vmatpush1.msra.mxu0 0.0
    %2297 = vmatprep.subr.mxu0 0.0
    %2298 = vmatpush1.msra.mxu0 0.0
    %2299 = vmatprep.subr.mxu0 0.0
    %2300 = vmatpush1.msra.mxu0 0.0
    %2301 = vmatprep.subr.mxu0 0.0
    %2302 = vmatpush1.msra.mxu0 0.0
    %2303 = vmatprep.subr.mxu0 0.0
    %2304 = vmatpush1.msra.mxu0 0.0
    %2305 = vmatprep.subr.mxu0 0.0
    %2306 = vmatpush1.msra.mxu0 0.0
    %2307 = vmatprep.subr.mxu0 0.0
    %2308 = vmatpush1.msra.mxu0 0.0
    %2309 = vmatprep.subr.mxu0 0.0
    %2310 = vmatpush1.msra.mxu0 0.0
    %2311 = vmatprep.subr.mxu0 0.0
    %2312 = vmatpush1.msra.mxu0 0.0
    %2313 = vmatprep.subr.mxu0 0.0
    %2314 = vmatpush1.msra.mxu0 0.0
    %2315 = vmatprep.subr.mxu0 0.0
    %2316 = vmatpush1.msra.mxu0 0.0
    %2317 = vmatprep.subr.mxu0 0.0
    %2318 = vmatpush1.msra.mxu0 0.0
    %2319 = vmatprep.subr.mxu0 0.0
    %2320 = vmatpush1.msra.mxu0 0.0
    %2321 = vmatprep.subr.mxu0 0.0
    %2322 = vmatpush1.msra.mxu0 0.0
    %2323 = vmatprep.subr.mxu0 0.0
    %2324 = vmatpush1.msra.mxu0 0.0
    %2325 = vmatprep.mubr.f32.mxu0 0.0
    %2326 = vmatmul.mubr.f32.gmra.mrb[0].mxu0 %v2259
    %v2327 = vpop.f32.mrb[0].mxu0
    %v2328 = vadd.f32 0.0, %v2327
    %v2329 = vpop.f32.mrb[0].mxu0
    %2330 = vdwg.mxu0
    %v2332 = vrot.slane %v2255, 6
    %2333 = vrot.lane.b32.xlu0 %v2332, 32
    %v2334 = vpop.permute.xlu0 %2333
    %v2335 = vsel %vm128, %v2334, 0
    %2337 = vmatprep.subr.mxu0 0.0
    %2338 = vmatpush1.msra.mxu0 %v218
    %2339 = vmatprep.subr.mxu0 0.0
    %2340 = vmatpush1.msra.mxu0 %v219
    %2341 = vmatprep.subr.mxu0 0.0
    %2342 = vmatpush1.msra.mxu0 %v220
    %2343 = vmatprep.subr.mxu0 0.0
    %2344 = vmatpush1.msra.mxu0 %v221
    %2345 = vmatprep.subr.mxu0 0.0
    %2346 = vmatpush1.msra.mxu0 0.0
    %2347 = vmatprep.subr.mxu0 0.0
    %2348 = vmatpush1.msra.mxu0 0.0
    %2349 = vmatprep.subr.mxu0 0.0
    %2350 = vmatpush1.msra.mxu0 0.0
    %2351 = vmatprep.subr.mxu0 0.0
    %2352 = vmatpush1.msra.mxu0 0.0
    %2353 = vmatprep.subr.mxu0 0.0
    %2354 = vmatpush1.msra.mxu0 0.0
    %2355 = vmatprep.subr.mxu0 0.0
    %2356 = vmatpush1.msra.mxu0 0.0
    %2357 = vmatprep.subr.mxu0 0.0
    %2358 = vmatpush1.msra.mxu0 0.0
    %2359 = vmatprep.subr.mxu0 0.0
    %2360 = vmatpush1.msra.mxu0 0.0
    %2361 = vmatprep.subr.mxu0 0.0
    %2362 = vmatpush1.msra.mxu0 0.0
    %2363 = vmatprep.subr.mxu0 0.0
    %2364 = vmatpush1.msra.mxu0 0.0
    %2365 = vmatprep.subr.mxu0 0.0
    %2366 = vmatpush1.msra.mxu0 0.0
    %2367 = vmatprep.subr.mxu0 0.0
    %2368 = vmatpush1.msra.mxu0 0.0
    %2369 = vmatprep.subr.mxu0 0.0
    %2370 = vmatpush1.msra.mxu0 0.0
    %2371 = vmatprep.subr.mxu0 0.0
    %2372 = vmatpush1.msra.mxu0 0.0
    %2373 = vmatprep.subr.mxu0 0.0
    %2374 = vmatpush1.msra.mxu0 0.0
    %2375 = vmatprep.subr.mxu0 0.0
    %2376 = vmatpush1.msra.mxu0 0.0
    %2377 = vmatprep.subr.mxu0 0.0
    %2378 = vmatpush1.msra.mxu0 0.0
    %2379 = vmatprep.subr.mxu0 0.0
    %2380 = vmatpush1.msra.mxu0 0.0
    %2381 = vmatprep.subr.mxu0 0.0
    %2382 = vmatpush1.msra.mxu0 0.0
    %2383 = vmatprep.subr.mxu0 0.0
    %2384 = vmatpush1.msra.mxu0 0.0
    %2385 = vmatprep.subr.mxu0 0.0
    %2386 = vmatpush1.msra.mxu0 0.0
    %2387 = vmatprep.subr.mxu0 0.0
    %2388 = vmatpush1.msra.mxu0 0.0
    %2389 = vmatprep.subr.mxu0 0.0
    %2390 = vmatpush1.msra.mxu0 0.0
    %2391 = vmatprep.subr.mxu0 0.0
    %2392 = vmatpush1.msra.mxu0 0.0
    %2393 = vmatprep.subr.mxu0 0.0
    %2394 = vmatpush1.msra.mxu0 0.0
    %2395 = vmatprep.subr.mxu0 0.0
    %2396 = vmatpush1.msra.mxu0 0.0
    %2397 = vmatprep.subr.mxu0 0.0
    %2398 = vmatpush1.msra.mxu0 0.0
    %2399 = vmatprep.subr.mxu0 0.0
    %2400 = vmatpush1.msra.mxu0 0.0
    %2401 = vmatprep.mubr.f32.mxu0 0.0
    %2402 = vmatmul.mubr.f32.gmra.mrb[0].mxu0 %v2335
    %v2403 = vpop.f32.mrb[0].mxu0
    %v2404 = vadd.f32 %v2328, %v2403
    %v2405 = vpop.f32.mrb[0].mxu0
    %2406 = vdwg.mxu0
    %v2407 = vadd.f32 %v2404, %v470
    %v2408 = vxor.u32 %v2407, 2147483648
    %v2409 = vmul.f32 %v2408, 1.442695
    %v2410 = vpow.pop %v2409
    %v2411 = vadd.f32 %v2410, 1.0
    %v2412 = vrcp.pop %v2411
    %v2413 = vmul.f32 1.0, %v2412
    %v2414 = vtanh.pop %v2407
    %v2415 = vmul.f32 %v2413, %v2148
    %2417 = vrot.lane.b32.xlu0 %v2414, 64
    %v2418 = vpop.permute.xlu0 %2417
    %v2420 = vmul.f32 %v2413, %v2418
    %2422 = vrot.lane.b32.xlu0 %v2420, 32
    %v2423 = vpop.permute.xlu0 %2422
    %v2425 = vadd.f32 %v2415, %v2423
    %v2426 = vtanh.pop %v2425
    %2428 = vrot.lane.b32.xlu0 %v2426, 64
    %v2429 = vpop.permute.xlu0 %2428
    %v2431 = vmul.f32 %v2413, %v2429
    %v2432 = vld [vmem:[#allocation11] sm:$0xff]
    %v2433 = vld [vmem:[#allocation11 + $0x8] sm:$0xff]
    %v2434 = vld [vmem:[#allocation11 + $0x10] sm:$0xff]
    %v2435 = vld [vmem:[#allocation11 + $0x18] sm:$0xff]
    %v2436 = vld [vmem:[%s8] sm:$0x1]
    %v2438 = vlaneseq
    %v2439 = vshrl.u32 %v2438, 7
    %v2440 = vsub.s32 0, %v2439
    %v2441 = vrot.slane %v2436, %v2440
    %2444 = vrot.lane.b32.xlu0 %v2431, 32
    %v2445 = vpop.permute.xlu0 %2444
    %v2446 = vsel %vm128, %v2445, 0
    %2448 = vmatprep.subr.mxu0 0.0
    %2449 = vmatpush1.msra.mxu0 %v2432
    %2450 = vmatprep.subr.mxu0 0.0
    %2451 = vmatpush1.msra.mxu0 %v2433
    %2452 = vmatprep.subr.mxu0 0.0
    %2453 = vmatpush1.msra.mxu0 %v2434
    %2454 = vmatprep.subr.mxu0 0.0
    %2455 = vmatpush1.msra.mxu0 %v2435
    %2456 = vmatprep.subr.mxu0 0.0
    %2457 = vmatpush1.msra.mxu0 0.0
    %2458 = vmatprep.subr.mxu0 0.0
    %2459 = vmatpush1.msra.mxu0 0.0
    %2460 = vmatprep.subr.mxu0 0.0
    %2461 = vmatpush1.msra.mxu0 0.0
    %2462 = vmatprep.subr.mxu0 0.0
    %2463 = vmatpush1.msra.mxu0 0.0
    %2464 = vmatprep.subr.mxu0 0.0
    %2465 = vmatpush1.msra.mxu0 0.0
    %2466 = vmatprep.subr.mxu0 0.0
    %2467 = vmatpush1.msra.mxu0 0.0
    %2468 = vmatprep.subr.mxu0 0.0
    %2469 = vmatpush1.msra.mxu0 0.0
    %2470 = vmatprep.subr.mxu0 0.0
    %2471 = vmatpush1.msra.mxu0 0.0
    %2472 = vmatprep.subr.mxu0 0.0
    %2473 = vmatpush1.msra.mxu0 0.0
    %2474 = vmatprep.subr.mxu0 0.0
    %2475 = vmatpush1.msra.mxu0 0.0
    %2476 = vmatprep.subr.mxu0 0.0
    %2477 = vmatpush1.msra.mxu0 0.0
    %2478 = vmatprep.subr.mxu0 0.0
    %2479 = vmatpush1.msra.mxu0 0.0
    %2480 = vmatprep.subr.mxu0 0.0
    %2481 = vmatpush1.msra.mxu0 0.0
    %2482 = vmatprep.subr.mxu0 0.0
    %2483 = vmatpush1.msra.mxu0 0.0
    %2484 = vmatprep.subr.mxu0 0.0
    %2485 = vmatpush1.msra.mxu0 0.0
    %2486 = vmatprep.subr.mxu0 0.0
    %2487 = vmatpush1.msra.mxu0 0.0
    %2488 = vmatprep.subr.mxu0 0.0
    %2489 = vmatpush1.msra.mxu0 0.0
    %2490 = vmatprep.subr.mxu0 0.0
    %2491 = vmatpush1.msra.mxu0 0.0
    %2492 = vmatprep.subr.mxu0 0.0
    %2493 = vmatpush1.msra.mxu0 0.0
    %2494 = vmatprep.subr.mxu0 0.0
    %2495 = vmatpush1.msra.mxu0 0.0
    %2496 = vmatprep.subr.mxu0 0.0
    %2497 = vmatpush1.msra.mxu0 0.0
    %2498 = vmatprep.subr.mxu0 0.0
    %2499 = vmatpush1.msra.mxu0 0.0
    %2500 = vmatprep.subr.mxu0 0.0
    %2501 = vmatpush1.msra.mxu0 0.0
    %2502 = vmatprep.subr.mxu0 0.0
    %2503 = vmatpush1.msra.mxu0 0.0
    %2504 = vmatprep.subr.mxu0 0.0
    %2505 = vmatpush1.msra.mxu0 0.0
    %2506 = vmatprep.subr.mxu0 0.0
    %2507 = vmatpush1.msra.mxu0 0.0
    %2508 = vmatprep.subr.mxu0 0.0
    %2509 = vmatpush1.msra.mxu0 0.0
    %2510 = vmatprep.subr.mxu0 0.0
    %2511 = vmatpush1.msra.mxu0 0.0
    %2512 = vmatprep.mubr.f32.mxu0 0.0
    %2513 = vmatmul.mubr.f32.gmra.mrb[0].mxu0 %v2446
    %v2514 = vpop.f32.mrb[0].mxu0
    %v2515 = vadd.f32 %v2441, %v2514
    %v2516 = vpop.f32.mrb[0].mxu0
    %2517 = vdwg.mxu0
    %2518 = vst [vmem:[#allocation13] sm:$0x3] %v2515
    // Predicated region
    $region62: #{tpu_custom_call.1} parent=1 // pred_check
      _
    $region63: #{tpu_custom_call.1} parent=1 // pred_check_branch
      %2520 = sbr.rel (0) target = $region65
    $region64: #{tpu_custom_call.1} parent=1 // pred_region
      %s2522 = ssub.s32 32, 32
      %2523 = vsyncadd [#allocation4], %s2522
      %s2525 = sshll.u32 [#allocation13], 4
      %s2526 = int_to_ptr.vmem [resolvable:$true] %s2525
      %2528 = dma.vmem_to_hbm [thread:$0]  %s2526, 32, %s9, [#allocation4]
    $region65: #{tpu_custom_call.1} parent=1 // pred_fallthru
      _
    // Predicated region
    $region66: #{tpu_custom_call.1} parent=1 // pred_check
      _
    $region67: #{tpu_custom_call.1} parent=1 // pred_check_branch
      %2530 = sbr.rel (0) target = $region69
    $region68: #{tpu_custom_call.1} parent=1 // pred_region
      %2531 = dma.done [#allocation4], 32
    $region69: #{tpu_custom_call.1} parent=1 // pred_fallthru
      _
    %2532 = vsyncpa [#allocation3], 1
    %2533 = vsyncpa [#allocation6], 1
    %2534 = vsyncpa [#allocation9], 1
    %2535 = vsyncpa [#allocation12], 1
    %2536 = vsyncpa [#allocation4], 1

</llo_original>
